<compile_context>
chip_gen: v7x
topology: tpu7x:2x2x1
jax: 0.10.0
libtpu: 0.0.40
codegen_flags: <defaults>
</compile_context>

<pallas_src>
import math
import numpy as np
import jax
import jax.numpy as jnp
from jax.experimental import pallas as pl
from jax.experimental.pallas import tpu as pltpu

EPS = 1e-5  # nn.LayerNorm default


def _gelu_exact(x):
    # nn.GELU() default = exact (erf-based) GELU.
    return 0.5 * x * (1.0 + jax.lax.erf(x * (1.0 / math.sqrt(2.0))))


def block_kernel(x_ref, rcat_ref, scat_ref, wpack_ref, wfc1_ref, wfc2_ref, vec_ref,
                 o_ref):
    Bt, N, C = x_ref.shape
    F2 = rcat_ref.shape[0]          # 2 * F
    F = F2 // 2

    x = x_ref[...].astype(jnp.float32).reshape(Bt * N, C)          # (Bt*N, C)

    # ---------------- LayerNorm 1 (core only; affine folded into constants) ----------------
    mu = jnp.mean(x, axis=-1, keepdims=True)
    var = jnp.mean((x - mu) ** 2, axis=-1, keepdims=True)
    xn = (x - mu) * jax.lax.rsqrt(var + EPS)

    # ---------------- Spectral gating: 2 stacked DFT matmuls + elementwise gate ----------------
    w1 = wpack_ref[0]                # (2F, C) = [ w_re*g1 ;  w_re*g1 ]
    w2 = wpack_ref[1]                # (2F, C) = [-w_im*g1 ;  w_im*g1 ]

    filt_parts = []
    for bi in range(Bt):             # static, compile-time unrolled; spectral op is per-batch
        xn_b = xn[bi * N:(bi + 1) * N]                               # (N, C) static slice
        f = jnp.dot(rcat_ref[...], xn_b,
                    preferred_element_type=jnp.float32)              # (2F, C) = [f_re; f_im]
        f_swap = pltpu.roll(f, shift=F, axis=0)                      # [f_im; f_re] (XLU)
        y = f * w1 + f_swap * w2                                     # [y_re; y_im]
        filt_parts.append(jnp.dot(scat_ref[...], y,
                                  preferred_element_type=jnp.float32))  # (N, C)
    filt = filt_parts[0] if Bt == 1 else jnp.concatenate(filt_parts, axis=0)  # (Bt*N, C)
    filt = filt + vec_ref[0:1, :C]   # + filter(ln1_beta * ones): token-invariant constant

    # ---------------- LayerNorm 2 (core; affine folded into wfc1'/bfc1') + MLP ----------------
    mu2 = jnp.mean(filt, axis=-1, keepdims=True)
    var2 = jnp.mean((filt - mu2) ** 2, axis=-1, keepdims=True)
    xn2 = (filt - mu2) * jax.lax.rsqrt(var2 + EPS)

    h = jnp.dot(xn2, wfc1_ref[...], preferred_element_type=jnp.float32) + vec_ref[1:2, :]
    h = _gelu_exact(h)
    h = jnp.dot(h, wfc2_ref[...], preferred_element_type=jnp.float32) + vec_ref[2:3, :C]

    # ---------------- single residual (as in the reference forward) ----------------
    o_ref[...] = (x + h).reshape(Bt, N, C).astype(o_ref.dtype)


def _spectral_operators(a, b):
    """Dense real operators (float64) for rfft2 / irfft2 over an (a, b) grid, norm='ortho'.

    Returns r_re, r_im (F, N) and s_re, s_im (N, F) with F = a*(b//2+1), N = a*b, such that
      X_re = r_re @ x,  X_im = r_im @ x,   y = s_re @ Y_re + s_im @ Y_im.
    """
    assert b % 2 == 0
    w = b // 2 + 1
    n1 = np.arange(a).reshape(a, 1, 1, 1)
    n2 = np.arange(b).reshape(1, b, 1, 1)
    k1 = np.arange(a).reshape(1, 1, a, 1)
    k2 = np.arange(w).reshape(1, 1, 1, w)
    phase = 2.0 * np.pi * (k1 * n1 / a + k2 * n2 / b)       # (n1, n2, k1, k2)
    scale = 1.0 / math.sqrt(a * b)
    cosp = np.cos(phase) * scale
    sinp = np.sin(phase) * scale
    N, F = a * b, a * w
    r_re = cosp.reshape(N, F).T                              # (F, N)
    r_im = (-sinp).reshape(N, F).T
    # Hermitian-half doubling along k2 (k2 = 0 and Nyquist counted once).
    alpha = np.where((np.arange(w) == 0) | (np.arange(w) == b // 2), 1.0, 2.0)
    alpha = alpha.reshape(1, 1, 1, w)
    s_re = (alpha * cosp).reshape(N, F)                      # (N, F)
    s_im = (-alpha * sinp).reshape(N, F)
    return r_re, r_im, s_re, s_im


def _choose_bt(B, max_bt=8):
    """Largest per-step batch that divides B while keeping >= 2 grid steps (v7x: 2 TCs)."""
    best = 1
    for bt in range(1, min(B, max_bt) + 1):
        if B % bt == 0 and (B // bt) >= 2:
            best = bt
    return best


def block_forward(x, params, block_batch=None):
    B, N, C = x.shape
    a = int(round(math.sqrt(N)))
    b = a
    assert a * b == N, "token count must be a square spatial grid"
    wdim = b // 2 + 1
    F = a * wdim
    H = params["wfc1"].shape[1]
    assert H >= C, "packed vecs buffer assumes hidden >= dim"

    # ---- host-side (float64) parameter folding / packing ----
    cw = np.asarray(params["filter_w"], np.float64)          # (a, w, C, 2)
    assert cw.shape == (a, wdim, C, 2)
    g1 = np.asarray(params["ln1_g"], np.float64)
    b1 = np.asarray(params["ln1_b"], np.float64)
    g2 = np.asarray(params["ln2_g"], np.float64)
    b2 = np.asarray(params["ln2_b"], np.float64)
    wfc1 = np.asarray(params["wfc1"], np.float64)
    bfc1 = np.asarray(params["bfc1"], np.float64)
    wfc2 = np.asarray(params["wfc2"], np.float64)
    bfc2 = np.asarray(params["bfc2"], np.float64)

    r_re, r_im, s_re, s_im = _spectral_operators(a, b)
    w_re = cw[..., 0].reshape(F, C)
    w_im = cw[..., 1].reshape(F, C)

    rcat = np.concatenate([r_re, r_im], axis=0)              # (2F, N)
    scat = np.concatenate([s_re, s_im], axis=1)              # (N, 2F)
    # ln1 gamma folded into the stacked frequency-weight slabs.
    w1 = np.concatenate([w_re, w_re], axis=0) * g1[None, :]
    w2 = np.concatenate([-w_im, w_im], axis=0) * g1[None, :]
    wpack = np.stack([w1, w2])                               # (2, 2F, C)

    # ln1 beta path: filter(beta1 * ones) -> token-invariant per-channel constant.
    cfield = np.ones((N, 1)) * b1[None, :]
    fr, fi = r_re @ cfield, r_im @ cfield
    bias_full = s_re @ (fr * w_re - fi * w_im) + s_im @ (fr * w_im + fi * w_re)  # (N, C)
    bias_row = bias_full.mean(axis=0)                        # rows identical (DC-only)

    # ln2 gamma/beta folded into fc1.
    wfc1_f = g2[:, None] * wfc1                              # (C, H)
    bfc1_f = b2 @ wfc1 + bfc1                                # (H,)

    vecs = np.zeros((3, H), np.float32)
    vecs[0, :C] = bias_row
    vecs[1, :] = bfc1_f
    vecs[2, :C] = bfc2

    rcat_j = jnp.asarray(rcat, jnp.float32)
    scat_j = jnp.asarray(scat, jnp.float32)
    wpack_j = jnp.asarray(wpack, jnp.float32)
    wfc1_j = jnp.asarray(wfc1_f, jnp.float32)
    wfc2_j = jnp.asarray(wfc2, jnp.float32)
    vecs_j = jnp.asarray(vecs)

    Bt = block_batch if block_batch is not None else _choose_bt(B)
    assert B % Bt == 0

    def const_spec(arr):
        nd = arr.ndim
        return pl.BlockSpec(arr.shape, lambda i, _n=nd: (0,) * _n)

    in_specs = [
        pl.BlockSpec((Bt, N, C), lambda i: (i, 0, 0)),
        const_spec(rcat_j), const_spec(scat_j), const_spec(wpack_j),
        const_spec(wfc1_j), const_spec(wfc2_j), const_spec(vecs_j),
    ]

    return pl.pallas_call(
        block_kernel,
        out_shape=jax.ShapeDtypeStruct((B, N, C), x.dtype),
        grid=(B // Bt,),
        in_specs=in_specs,
        out_specs=pl.BlockSpec((Bt, N, C), lambda i: (i, 0, 0)),
        compiler_params=pltpu.CompilerParams(dimension_semantics=("parallel",)),
    )(x, rcat_j, scat_j, wpack_j, wfc1_j, wfc2_j, vecs_j)


# ---------------- deterministic parameter init (PyTorch-style) ----------------
def init_params(key, dim=48, a=16, mlp_ratio=4.0):
    b = a
    w = b // 2 + 1
    hidden = int(dim * mlp_ratio)
    ks = jax.random.split(key, 9)

    def linear(kw, kb, fan_in, fan_out):
        bound = 1.0 / math.sqrt(fan_in)
        W = jax.random.uniform(kw, (fan_in, fan_out), jnp.float32, -bound, bound)
        bb = jax.random.uniform(kb, (fan_out,), jnp.float32, -bound, bound)
        return W, bb

    wfc1, bfc1 = linear(ks[0], ks[1], dim, hidden)
    wfc2, bfc2 = linear(ks[2], ks[3], hidden, dim)
    return {
        # lightly randomized LN affine params to exercise the gamma/beta folding
        "ln1_g": 1.0 + 0.1 * jax.random.normal(ks[4], (dim,), jnp.float32),
        "ln1_b": 0.1 * jax.random.normal(ks[5], (dim,), jnp.float32),
        "ln2_g": 1.0 + 0.1 * jax.random.normal(ks[6], (dim,), jnp.float32),
        "ln2_b": 0.1 * jax.random.normal(ks[7], (dim,), jnp.float32),
        # SpectralGatingNetwork: randn(h, w, dim, 2) * 0.02
        "filter_w": 0.02 * jax.random.normal(ks[8], (a, w, dim, 2), jnp.float32),
        "wfc1": wfc1, "bfc1": bfc1, "wfc2": wfc2, "bfc2": bfc2,
    }


# ---------------- float64 host reference (numpy FFT mirrors torch.fft, norm='ortho') ----------------
def ref_block(x, params, a, b):
    xp = np.asarray(x, np.float64)
    p = {k: np.asarray(v, np.float64) for k, v in params.items()}

    def ln(v, g, bb):
        mu = v.mean(-1, keepdims=True)
        var = ((v - mu) ** 2).mean(-1, keepdims=True)
        return (v - mu) / np.sqrt(var + EPS) * g + bb

    B, N, C = xp.shape
    xn = ln(xp, p["ln1_g"], p["ln1_b"])
    xs = xn.reshape(B, a, b, C)
    Xf = np.fft.rfft2(xs, axes=(1, 2), norm="ortho")
    wc = p["filter_w"][..., 0] + 1j * p["filter_w"][..., 1]
    Xf = Xf * wc[None]
    y = np.fft.irfft2(Xf, s=(a, b), axes=(1, 2), norm="ortho").reshape(B, N, C)
    xn2 = ln(y, p["ln2_g"], p["ln2_b"])
    erf_v = np.vectorize(math.erf)
    h = xn2 @ p["wfc1"] + p["bfc1"]
    h = 0.5 * h * (1.0 + erf_v(h / math.sqrt(2.0)))
    h = h @ p["wfc2"] + p["bfc2"]
    return xp + h


if __name__ == "__main__":
    DIM, A = 48, 16            # module defaults h=16, w=9  ->  N = 16*16 = 256 tokens
    B = 4                      # -> Bt=2 per grid step, 2 parallel steps (both TCs on v7x)
    N = A * A
    key = jax.random.PRNGKey(0)
    kx, kp = jax.random.split(key)
    x = jax.random.normal(kx, (B, N, DIM), jnp.float32)
    params = init_params(kp, dim=DIM, a=A)

    out = jax.block_until_ready(block_forward(x, params))

    ref = ref_block(x, params, A, A)
    np.testing.assert_allclose(np.asarray(out), ref, rtol=1e-3, atol=1e-3)

    print("KERNEL_OK")
</pallas_src>

<mosaic_0001>
module attributes {stable_mosaic.version = 11 : i64} {
  func.func @block_kernel(%arg0: i32, %arg1: memref<2x256x48xf32, #tpu.memory_space<vmem>>, %arg2: memref<288x256xf32, #tpu.memory_space<vmem>>, %arg3: memref<256x288xf32, #tpu.memory_space<vmem>>, %arg4: memref<2x288x48xf32, #tpu.memory_space<vmem>>, %arg5: memref<48x192xf32, #tpu.memory_space<vmem>>, %arg6: memref<192x48xf32, #tpu.memory_space<vmem>>, %arg7: memref<3x192xf32, #tpu.memory_space<vmem>>, %arg8: memref<2x256x48xf32, #tpu.memory_space<vmem>>) attributes {dimension_semantics = [#tpu.dimension_semantics<parallel>], iteration_bounds = array<i64: 2>, scalar_prefetch = 0 : i64, scratch_operands = 0 : i64, tpu.core_type = #tpu.core_type<tc>, window_params = [{transform_indices = @transform_0, window_bounds = array<i64: 2, 256, 48>}, {pipeline_mode = #tpu.pipeline_mode<synchronous>, transform_indices = @transform_1, window_bounds = array<i64: 288, 256>}, {pipeline_mode = #tpu.pipeline_mode<synchronous>, transform_indices = @transform_2, window_bounds = array<i64: 256, 288>}, {pipeline_mode = #tpu.pipeline_mode<synchronous>, transform_indices = @transform_3, window_bounds = array<i64: 2, 288, 48>}, {pipeline_mode = #tpu.pipeline_mode<synchronous>, transform_indices = @transform_4, window_bounds = array<i64: 48, 192>}, {pipeline_mode = #tpu.pipeline_mode<synchronous>, transform_indices = @transform_5, window_bounds = array<i64: 192, 48>}, {pipeline_mode = #tpu.pipeline_mode<synchronous>, transform_indices = @transform_6, window_bounds = array<i64: 3, 192>}, {transform_indices = @transform_7, window_bounds = array<i64: 2, 256, 48>}]} {
    %c0 = arith.constant 0 : index
    %c0_0 = arith.constant 0 : index
    %c0_1 = arith.constant 0 : index
    %0 = vector.load %arg1[%c0, %c0_0, %c0_1] : memref<2x256x48xf32, #tpu.memory_space<vmem>>, vector<2x256x48xf32>
    %1 = vector.shape_cast %0 : vector<2x256x48xf32> to vector<512x48xf32>
    %cst = arith.constant dense<0.000000e+00> : vector<512xf32>
    %2 = vector.multi_reduction <add>, %1, %cst [1] : vector<512x48xf32> to vector<512xf32>
    %3 = vector.shape_cast %2 : vector<512xf32> to vector<512x1xf32>
    %cst_2 = arith.constant 4.800000e+01 : f32
    %4 = vector.broadcast %cst_2 : f32 to vector<512x1xf32>
    %5 = arith.divf %3, %4 : vector<512x1xf32>
    %6 = vector.broadcast %5 : vector<512x1xf32> to vector<512x48xf32>
    %7 = arith.subf %1, %6 : vector<512x48xf32>
    %8 = arith.mulf %7, %7 : vector<512x48xf32>
    %cst_3 = arith.constant dense<0.000000e+00> : vector<512xf32>
    %9 = vector.multi_reduction <add>, %8, %cst_3 [1] : vector<512x48xf32> to vector<512xf32>
    %10 = vector.shape_cast %9 : vector<512xf32> to vector<512x1xf32>
    %cst_4 = arith.constant 4.800000e+01 : f32
    %11 = vector.broadcast %cst_4 : f32 to vector<512x1xf32>
    %12 = arith.divf %10, %11 : vector<512x1xf32>
    %13 = vector.broadcast %5 : vector<512x1xf32> to vector<512x48xf32>
    %14 = arith.subf %1, %13 : vector<512x48xf32>
    %cst_5 = arith.constant 9.99999974E-6 : f32
    %15 = vector.broadcast %cst_5 : f32 to vector<512x1xf32>
    %16 = arith.addf %12, %15 : vector<512x1xf32>
    %17 = math.rsqrt %16 : vector<512x1xf32>
    %18 = vector.broadcast %17 : vector<512x1xf32> to vector<512x48xf32>
    %19 = arith.mulf %14, %18 : vector<512x48xf32>
    %c0_6 = arith.constant 0 : index
    %c0_7 = arith.constant 0 : index
    %c0_8 = arith.constant 0 : index
    %20 = vector.load %arg4[%c0_6, %c0_7, %c0_8] : memref<2x288x48xf32, #tpu.memory_space<vmem>>, vector<1x288x48xf32>
    %21 = vector.shape_cast %20 : vector<1x288x48xf32> to vector<288x48xf32>
    %c1 = arith.constant 1 : index
    %c0_9 = arith.constant 0 : index
    %c0_10 = arith.constant 0 : index
    %22 = vector.load %arg4[%c1, %c0_9, %c0_10] : memref<2x288x48xf32, #tpu.memory_space<vmem>>, vector<1x288x48xf32>
    %23 = vector.shape_cast %22 : vector<1x288x48xf32> to vector<288x48xf32>
    %24 = vector.extract_strided_slice %19 {offsets = [0, 0], sizes = [256, 48], strides = [1, 1]} : vector<512x48xf32> to vector<256x48xf32>
    %c0_11 = arith.constant 0 : index
    %c0_12 = arith.constant 0 : index
    %25 = vector.load %arg2[%c0_11, %c0_12] : memref<288x256xf32, #tpu.memory_space<vmem>>, vector<288x256xf32>
    %cst_13 = arith.constant dense<0.000000e+00> : vector<288x48xf32>
    %26 = tpu.matmul %25, %24, %cst_13 {dimension_numbers = #tpu.dot_dimension_numbers<[1], [0], [0], [1], [0, 0, 1, 1], [], []>} : vector<288x256xf32>, vector<256x48xf32>, vector<288x48xf32> -> vector<288x48xf32>
    %c144_i32 = arith.constant 144 : i32
    %27 = tpu.dynamic_rotate %26 by %c144_i32 dim 0 : vector<288x48xf32>, i32 -> vector<288x48xf32>
    %28 = arith.mulf %26, %21 : vector<288x48xf32>
    %29 = arith.mulf %27, %23 : vector<288x48xf32>
    %30 = arith.addf %28, %29 : vector<288x48xf32>
    %c0_14 = arith.constant 0 : index
    %c0_15 = arith.constant 0 : index
    %31 = vector.load %arg3[%c0_14, %c0_15] : memref<256x288xf32, #tpu.memory_space<vmem>>, vector<256x288xf32>
    %cst_16 = arith.constant dense<0.000000e+00> : vector<256x48xf32>
    %32 = tpu.matmul %31, %30, %cst_16 {dimension_numbers = #tpu.dot_dimension_numbers<[1], [0], [0], [1], [0, 0, 1, 1], [], []>} : vector<256x288xf32>, vector<288x48xf32>, vector<256x48xf32> -> vector<256x48xf32>
    %33 = vector.extract_strided_slice %19 {offsets = [256, 0], sizes = [256, 48], strides = [1, 1]} : vector<512x48xf32> to vector<256x48xf32>
    %c0_17 = arith.constant 0 : index
    %c0_18 = arith.constant 0 : index
    %34 = vector.load %arg2[%c0_17, %c0_18] : memref<288x256xf32, #tpu.memory_space<vmem>>, vector<288x256xf32>
    %cst_19 = arith.constant dense<0.000000e+00> : vector<288x48xf32>
    %35 = tpu.matmul %34, %33, %cst_19 {dimension_numbers = #tpu.dot_dimension_numbers<[1], [0], [0], [1], [0, 0, 1, 1], [], []>} : vector<288x256xf32>, vector<256x48xf32>, vector<288x48xf32> -> vector<288x48xf32>
    %c144_i32_20 = arith.constant 144 : i32
    %36 = tpu.dynamic_rotate %35 by %c144_i32_20 dim 0 : vector<288x48xf32>, i32 -> vector<288x48xf32>
    %37 = arith.mulf %35, %21 : vector<288x48xf32>
    %38 = arith.mulf %36, %23 : vector<288x48xf32>
    %39 = arith.addf %37, %38 : vector<288x48xf32>
    %c0_21 = arith.constant 0 : index
    %c0_22 = arith.constant 0 : index
    %40 = vector.load %arg3[%c0_21, %c0_22] : memref<256x288xf32, #tpu.memory_space<vmem>>, vector<256x288xf32>
    %cst_23 = arith.constant dense<0.000000e+00> : vector<256x48xf32>
    %41 = tpu.matmul %40, %39, %cst_23 {dimension_numbers = #tpu.dot_dimension_numbers<[1], [0], [0], [1], [0, 0, 1, 1], [], []>} : vector<256x288xf32>, vector<288x48xf32>, vector<256x48xf32> -> vector<256x48xf32>
    %42 = tpu.concatenate %32, %41 in 0 : vector<256x48xf32>, vector<256x48xf32> -> vector<512x48xf32>
    %c0_24 = arith.constant 0 : index
    %c0_25 = arith.constant 0 : index
    %43 = vector.load %arg7[%c0_24, %c0_25] : memref<3x192xf32, #tpu.memory_space<vmem>>, vector<1x48xf32>
    %44 = vector.broadcast %43 : vector<1x48xf32> to vector<512x48xf32>
    %45 = arith.addf %42, %44 : vector<512x48xf32>
    %cst_26 = arith.constant dense<0.000000e+00> : vector<512xf32>
    %46 = vector.multi_reduction <add>, %45, %cst_26 [1] : vector<512x48xf32> to vector<512xf32>
    %47 = vector.shape_cast %46 : vector<512xf32> to vector<512x1xf32>
    %cst_27 = arith.constant 4.800000e+01 : f32
    %48 = vector.broadcast %cst_27 : f32 to vector<512x1xf32>
    %49 = arith.divf %47, %48 : vector<512x1xf32>
    %50 = vector.broadcast %49 : vector<512x1xf32> to vector<512x48xf32>
    %51 = arith.subf %45, %50 : vector<512x48xf32>
    %52 = arith.mulf %51, %51 : vector<512x48xf32>
    %cst_28 = arith.constant dense<0.000000e+00> : vector<512xf32>
    %53 = vector.multi_reduction <add>, %52, %cst_28 [1] : vector<512x48xf32> to vector<512xf32>
    %54 = vector.shape_cast %53 : vector<512xf32> to vector<512x1xf32>
    %cst_29 = arith.constant 4.800000e+01 : f32
    %55 = vector.broadcast %cst_29 : f32 to vector<512x1xf32>
    %56 = arith.divf %54, %55 : vector<512x1xf32>
    %57 = vector.broadcast %49 : vector<512x1xf32> to vector<512x48xf32>
    %58 = arith.subf %45, %57 : vector<512x48xf32>
    %cst_30 = arith.constant 9.99999974E-6 : f32
    %59 = vector.broadcast %cst_30 : f32 to vector<512x1xf32>
    %60 = arith.addf %56, %59 : vector<512x1xf32>
    %61 = math.rsqrt %60 : vector<512x1xf32>
    %62 = vector.broadcast %61 : vector<512x1xf32> to vector<512x48xf32>
    %63 = arith.mulf %58, %62 : vector<512x48xf32>
    %c0_31 = arith.constant 0 : index
    %c0_32 = arith.constant 0 : index
    %64 = vector.load %arg5[%c0_31, %c0_32] : memref<48x192xf32, #tpu.memory_space<vmem>>, vector<48x192xf32>
    %cst_33 = arith.constant dense<0.000000e+00> : vector<512x192xf32>
    %65 = tpu.matmul %63, %64, %cst_33 {dimension_numbers = #tpu.dot_dimension_numbers<[1], [0], [0], [1], [0, 0, 1, 1], [], []>} : vector<512x48xf32>, vector<48x192xf32>, vector<512x192xf32> -> vector<512x192xf32>
    %c1_34 = arith.constant 1 : index
    %c0_35 = arith.constant 0 : index
    %66 = vector.load %arg7[%c1_34, %c0_35] : memref<3x192xf32, #tpu.memory_space<vmem>>, vector<1x192xf32>
    %67 = vector.broadcast %66 : vector<1x192xf32> to vector<512x192xf32>
    %68 = arith.addf %65, %67 : vector<512x192xf32>
    %cst_36 = arith.constant 5.000000e-01 : f32
    %69 = vector.broadcast %cst_36 : f32 to vector<512x192xf32>
    %70 = arith.mulf %69, %68 : vector<512x192xf32>
    %cst_37 = arith.constant 0.707106769 : f32
    %71 = vector.broadcast %cst_37 : f32 to vector<512x192xf32>
    %72 = arith.mulf %68, %71 : vector<512x192xf32>
    %73 = math.erf %72 : vector<512x192xf32>
    %cst_38 = arith.constant 1.000000e+00 : f32
    %74 = vector.broadcast %cst_38 : f32 to vector<512x192xf32>
    %75 = arith.addf %74, %73 : vector<512x192xf32>
    %76 = arith.mulf %70, %75 : vector<512x192xf32>
    %c0_39 = arith.constant 0 : index
    %c0_40 = arith.constant 0 : index
    %77 = vector.load %arg6[%c0_39, %c0_40] : memref<192x48xf32, #tpu.memory_space<vmem>>, vector<192x48xf32>
    %cst_41 = arith.constant dense<0.000000e+00> : vector<512x48xf32>
    %78 = tpu.matmul %76, %77, %cst_41 {dimension_numbers = #tpu.dot_dimension_numbers<[1], [0], [0], [1], [0, 0, 1, 1], [], []>} : vector<512x192xf32>, vector<192x48xf32>, vector<512x48xf32> -> vector<512x48xf32>
    %c2 = arith.constant 2 : index
    %c0_42 = arith.constant 0 : index
    %79 = vector.load %arg7[%c2, %c0_42] : memref<3x192xf32, #tpu.memory_space<vmem>>, vector<1x48xf32>
    %80 = vector.broadcast %79 : vector<1x48xf32> to vector<512x48xf32>
    %81 = arith.addf %78, %80 : vector<512x48xf32>
    %82 = arith.addf %1, %81 : vector<512x48xf32>
    %83 = vector.shape_cast %82 : vector<512x48xf32> to vector<2x256x48xf32>
    %c0_43 = arith.constant 0 : index
    %c0_44 = arith.constant 0 : index
    %c0_45 = arith.constant 0 : index
    %84 = vector.load %arg8[%c0_43, %c0_44, %c0_45] : memref<2x256x48xf32, #tpu.memory_space<vmem>>, vector<2x256x48xf32>
    tpu.vector_store %arg8[%c0_43, %c0_44, %c0_45], %83 {strides = array<i32>} : memref<2x256x48xf32, #tpu.memory_space<vmem>>, vector<2x256x48xf32>,
    return
  }
  func.func @transform_0(%arg0: i32) -> (i32, i32, i32) {
    %c0_i32 = arith.constant 0 : i32
    %c0_i32_0 = arith.constant 0 : i32
    %c0_i32_1 = arith.constant 0 : i32
    return %arg0, %c0_i32, %c0_i32_0 : i32, i32, i32
  }
  func.func @transform_1(%arg0: i32) -> (i32, i32) {
    %c0_i32 = arith.constant 0 : i32
    %c0_i32_0 = arith.constant 0 : i32
    %c0_i32_1 = arith.constant 0 : i32
    return %c0_i32, %c0_i32_0 : i32, i32
  }
  func.func @transform_2(%arg0: i32) -> (i32, i32) {
    %c0_i32 = arith.constant 0 : i32
    %c0_i32_0 = arith.constant 0 : i32
    %c0_i32_1 = arith.constant 0 : i32
    return %c0_i32, %c0_i32_0 : i32, i32
  }
  func.func @transform_3(%arg0: i32) -> (i32, i32, i32) {
    %c0_i32 = arith.constant 0 : i32
    %c0_i32_0 = arith.constant 0 : i32
    %c0_i32_1 = arith.constant 0 : i32
    %c0_i32_2 = arith.constant 0 : i32
    return %c0_i32, %c0_i32_0, %c0_i32_1 : i32, i32, i32
  }
  func.func @transform_4(%arg0: i32) -> (i32, i32) {
    %c0_i32 = arith.constant 0 : i32
    %c0_i32_0 = arith.constant 0 : i32
    %c0_i32_1 = arith.constant 0 : i32
    return %c0_i32, %c0_i32_0 : i32, i32
  }
  func.func @transform_5(%arg0: i32) -> (i32, i32) {
    %c0_i32 = arith.constant 0 : i32
    %c0_i32_0 = arith.constant 0 : i32
    %c0_i32_1 = arith.constant 0 : i32
    return %c0_i32, %c0_i32_0 : i32, i32
  }
  func.func @transform_6(%arg0: i32) -> (i32, i32) {
    %c0_i32 = arith.constant 0 : i32
    %c0_i32_0 = arith.constant 0 : i32
    %c0_i32_1 = arith.constant 0 : i32
    return %c0_i32, %c0_i32_0 : i32, i32
  }
  func.func @transform_7(%arg0: i32) -> (i32, i32, i32) {
    %c0_i32 = arith.constant 0 : i32
    %c0_i32_0 = arith.constant 0 : i32
    %c0_i32_1 = arith.constant 0 : i32
    return %arg0, %c0_i32, %c0_i32_0 : i32, i32, i32
  }
}

</mosaic_0001>

<llo_original>
// kernel: tpu_custom_call.1
$region0: #{tpu_custom_call.1}
  #allocation0 [shape = 'u32[]', space=smem, size = 0x4, offset = 0x4, fixed_abs, tag = 'smem constant byte address 0x4 - core index']
  #allocation1 [shape = 'u32[144,128]{1,0:T(1,128)}', space=vmem, size = 0x12000, scoped, tag = 'internal scratch']
  %s0 = inlined_call_operand.vmem [shape: f32[4,256,48], index: 0, kind: input, shape index: {}]
  %s1 = inlined_call_operand.vmem [shape: f32[288,256], index: 1, kind: input, shape index: {}]
  %s2 = inlined_call_operand.vmem [shape: f32[256,288], index: 2, kind: input, shape index: {}]
  %s3 = inlined_call_operand.vmem [shape: f32[2,288,48], index: 3, kind: input, shape index: {}]
  %s4 = inlined_call_operand.vmem [shape: f32[48,192], index: 4, kind: input, shape index: {}]
  %s5 = inlined_call_operand.vmem [shape: f32[192,48], index: 5, kind: input, shape index: {}]
  %s6 = inlined_call_operand.vmem [shape: f32[3,192], index: 6, kind: input, shape index: {}]
  %s7 = inlined_call_operand.vmem [shape: f32[4,256,48], index: 7, kind: output, shape index: {}]
  %s8 = sld [smem:[#allocation0]]
  $region61: #{tpu_custom_call.1} parent=0
    _
  %s10 = ssub.s32 1, %s8
  %s11 = scalar_select 0, %s10, %s8
  loop: start=0, step=1, limit=4
  $region2: #{tpu_custom_call.1} parent=0 // loop_pre_header
    _
  $region3: #{tpu_custom_call.1} parent=0 // loop_header
    %s13 = sphi 0, %s17
    %p14 = scmp.ge.s32.totalorder %s13, 4
    %s23 = sphi 0, %s25
    %s26 = sphi 0, %s23
    %s27 = sphi 0, %s26
    %s43 = sphi 0, %s27
    %s47 = sphi 0, %s47
    %s49 = sphi 0, %s47
    %s50 = sphi 0, %s49
    %s64 = sphi 0, %s50
    %s68 = sphi 0, %s68
    %s70 = sphi 0, %s68
    %s71 = sphi 0, %s70
    %s85 = sphi 0, %s71
    %s89 = sphi 0, %s89
    %s91 = sphi 0, %s89
    %s92 = sphi 0, %s91
    %s106 = sphi 0, %s92
    %s110 = sphi 0, %s110
    %s112 = sphi 0, %s110
    %s113 = sphi 0, %s112
    %s127 = sphi 0, %s113
    %s131 = sphi 0, %s131
    %s133 = sphi 0, %s131
    %s134 = sphi 0, %s133
    %s148 = sphi 0, %s134
    %s152 = sphi 0, %s152
    %s154 = sphi 0, %s152
    %s155 = sphi 0, %s154
    %s169 = sphi 0, %s155
    %s175 = sphi 0, %s177
    %s178 = sphi 0, %s175
    %s179 = sphi 0, %s178
    %s195 = sphi 0, %s179
  $region4: #{tpu_custom_call.1} parent=0 // loop_header_branch
    %16 = sbr.rel (%p14) target = $region8
  $region5: #{tpu_custom_call.1} parent=0 // loop_body
    %s18 = ssub.s32 %s13, 1
    %s19 = ssub.s32 %s13, 2
    %s20 = sadd.s32 %s13, 1
    %s21 = ssub.s32 %s13, %s20
    %p22 = scmp.eq.s32.totalorder %s21, 0
    %s24 = sadd.s32 %s23, 1
    %s25 = scalar_select %p22, %s23, %s24
    %p28 = pneg %p22
    %p29 = scmp.eq.s32.totalorder %s13, 1
    %p30 = por %p28, %p29
    %p31 = scmp.ne.s32.totalorder %s23, %s26
    %p32 = scmp.eq.s32.totalorder %s13, 0
    %p33 = por %p31, %p32
    %p34 = scmp.ne.s32.totalorder %s23, %s26
    %p35 = scmp.eq.s32.totalorder %s18, 1
    %p36 = por %p34, %p35
    %p37 = scmp.ne.s32.totalorder %s26, %s27
    %p38 = scmp.eq.s32.totalorder %s18, 0
    %p39 = por %p37, %p38
    %p40 = scmp.ne.s32.totalorder %s26, %s27
    %p41 = scmp.eq.s32.totalorder %s19, 1
    %p42 = por %p40, %p41
    %p44 = scmp.ne.s32.totalorder %s27, %s43
    %p45 = scmp.eq.s32.totalorder %s19, 0
    %p46 = por %p44, %p45
    %s48 = sadd.s32 %s47, 1
    %p51 = scmp.eq.s32.totalorder %s13, 1
    %p52 = scmp.ne.s32.totalorder %s47, %s49
    %p53 = scmp.eq.s32.totalorder %s13, 0
    %p54 = por %p52, %p53
    %p55 = scmp.ne.s32.totalorder %s47, %s49
    %p56 = scmp.eq.s32.totalorder %s18, 1
    %p57 = por %p55, %p56
    %p58 = scmp.ne.s32.totalorder %s49, %s50
    %p59 = scmp.eq.s32.totalorder %s18, 0
    %p60 = por %p58, %p59
    %p61 = scmp.ne.s32.totalorder %s49, %s50
    %p62 = scmp.eq.s32.totalorder %s19, 1
    %p63 = por %p61, %p62
    %p65 = scmp.ne.s32.totalorder %s50, %s64
    %p66 = scmp.eq.s32.totalorder %s19, 0
    %p67 = por %p65, %p66
    %s69 = sadd.s32 %s68, 1
    %p72 = scmp.eq.s32.totalorder %s13, 1
    %p73 = scmp.ne.s32.totalorder %s68, %s70
    %p74 = scmp.eq.s32.totalorder %s13, 0
    %p75 = por %p73, %p74
    %p76 = scmp.ne.s32.totalorder %s68, %s70
    %p77 = scmp.eq.s32.totalorder %s18, 1
    %p78 = por %p76, %p77
    %p79 = scmp.ne.s32.totalorder %s70, %s71
    %p80 = scmp.eq.s32.totalorder %s18, 0
    %p81 = por %p79, %p80
    %p82 = scmp.ne.s32.totalorder %s70, %s71
    %p83 = scmp.eq.s32.totalorder %s19, 1
    %p84 = por %p82, %p83
    %p86 = scmp.ne.s32.totalorder %s71, %s85
    %p87 = scmp.eq.s32.totalorder %s19, 0
    %p88 = por %p86, %p87
    %s90 = sadd.s32 %s89, 1
    %p93 = scmp.eq.s32.totalorder %s13, 1
    %p94 = scmp.ne.s32.totalorder %s89, %s91
    %p95 = scmp.eq.s32.totalorder %s13, 0
    %p96 = por %p94, %p95
    %p97 = scmp.ne.s32.totalorder %s89, %s91
    %p98 = scmp.eq.s32.totalorder %s18, 1
    %p99 = por %p97, %p98
    %p100 = scmp.ne.s32.totalorder %s91, %s92
    %p101 = scmp.eq.s32.totalorder %s18, 0
    %p102 = por %p100, %p101
    %p103 = scmp.ne.s32.totalorder %s91, %s92
    %p104 = scmp.eq.s32.totalorder %s19, 1
    %p105 = por %p103, %p104
    %p107 = scmp.ne.s32.totalorder %s92, %s106
    %p108 = scmp.eq.s32.totalorder %s19, 0
    %p109 = por %p107, %p108
    %s111 = sadd.s32 %s110, 1
    %p114 = scmp.eq.s32.totalorder %s13, 1
    %p115 = scmp.ne.s32.totalorder %s110, %s112
    %p116 = scmp.eq.s32.totalorder %s13, 0
    %p117 = por %p115, %p116
    %p118 = scmp.ne.s32.totalorder %s110, %s112
    %p119 = scmp.eq.s32.totalorder %s18, 1
    %p120 = por %p118, %p119
    %p121 = scmp.ne.s32.totalorder %s112, %s113
    %p122 = scmp.eq.s32.totalorder %s18, 0
    %p123 = por %p121, %p122
    %p124 = scmp.ne.s32.totalorder %s112, %s113
    %p125 = scmp.eq.s32.totalorder %s19, 1
    %p126 = por %p124, %p125
    %p128 = scmp.ne.s32.totalorder %s113, %s127
    %p129 = scmp.eq.s32.totalorder %s19, 0
    %p130 = por %p128, %p129
    %s132 = sadd.s32 %s131, 1
    %p135 = scmp.eq.s32.totalorder %s13, 1
    %p136 = scmp.ne.s32.totalorder %s131, %s133
    %p137 = scmp.eq.s32.totalorder %s13, 0
    %p138 = por %p136, %p137
    %p139 = scmp.ne.s32.totalorder %s131, %s133
    %p140 = scmp.eq.s32.totalorder %s18, 1
    %p141 = por %p139, %p140
    %p142 = scmp.ne.s32.totalorder %s133, %s134
    %p143 = scmp.eq.s32.totalorder %s18, 0
    %p144 = por %p142, %p143
    %p145 = scmp.ne.s32.totalorder %s133, %s134
    %p146 = scmp.eq.s32.totalorder %s19, 1
    %p147 = por %p145, %p146
    %p149 = scmp.ne.s32.totalorder %s134, %s148
    %p150 = scmp.eq.s32.totalorder %s19, 0
    %p151 = por %p149, %p150
    %s153 = sadd.s32 %s152, 1
    %p156 = scmp.eq.s32.totalorder %s13, 1
    %p157 = scmp.ne.s32.totalorder %s152, %s154
    %p158 = scmp.eq.s32.totalorder %s13, 0
    %p159 = por %p157, %p158
    %p160 = scmp.ne.s32.totalorder %s152, %s154
    %p161 = scmp.eq.s32.totalorder %s18, 1
    %p162 = por %p160, %p161
    %p163 = scmp.ne.s32.totalorder %s154, %s155
    %p164 = scmp.eq.s32.totalorder %s18, 0
    %p165 = por %p163, %p164
    %p166 = scmp.ne.s32.totalorder %s154, %s155
    %p167 = scmp.eq.s32.totalorder %s19, 1
    %p168 = por %p166, %p167
    %p170 = scmp.ne.s32.totalorder %s155, %s169
    %p171 = scmp.eq.s32.totalorder %s19, 0
    %p172 = por %p170, %p171
    %s173 = ssub.s32 %s13, %s20
    %p174 = scmp.eq.s32.totalorder %s173, 0
    %s176 = sadd.s32 %s175, 1
    %s177 = scalar_select %p174, %s175, %s176
    %p180 = pneg %p174
    %p181 = scmp.eq.s32.totalorder %s13, 1
    %p182 = por %p180, %p181
    %p183 = scmp.ne.s32.totalorder %s175, %s178
    %p184 = scmp.eq.s32.totalorder %s13, 0
    %p185 = por %p183, %p184
    %p186 = scmp.ne.s32.totalorder %s175, %s178
    %p187 = scmp.eq.s32.totalorder %s18, 1
    %p188 = por %p186, %p187
    %p189 = scmp.ne.s32.totalorder %s178, %s179
    %p190 = scmp.eq.s32.totalorder %s18, 0
    %p191 = por %p189, %p190
    %p192 = scmp.ne.s32.totalorder %s178, %s179
    %p193 = scmp.eq.s32.totalorder %s19, 1
    %p194 = por %p192, %p193
    %p196 = scmp.ne.s32.totalorder %s179, %s195
    %p197 = scmp.eq.s32.totalorder %s19, 0
    %p198 = por %p196, %p197
    %p199 = scmp.le.s32.totalorder 1, %s13
    %p200 = scmp.lt.s32.totalorder %s13, 3
    %p201 = pnand %p199, %p200
    %p202 = pneg %p201
    // Predicated region
    $region9: #{tpu_custom_call.1} parent=5 // pred_check
      _
    $region10: #{tpu_custom_call.1} parent=5 // pred_check_branch
      %204 = sbr.rel (%p201) target = $region12
    $region11: #{tpu_custom_call.1} parent=5 // pred_region
      %s205 = ssub.s32 %s13, 1
      // Predicated region
      $region13: #{tpu_custom_call.1} parent=11 // pred_check
        %p206 = pneg %p60
      $region14: #{tpu_custom_call.1} parent=11 // pred_check_branch
        %208 = sbr.rel (%p206) target = $region16
      $region15: #{tpu_custom_call.1} parent=11 // pred_region
        _
      $region16: #{tpu_custom_call.1} parent=11 // pred_fallthru
        _
      // Predicated region
      $region17: #{tpu_custom_call.1} parent=11 // pred_check
        %p209 = pneg %p81
      $region18: #{tpu_custom_call.1} parent=11 // pred_check_branch
        %211 = sbr.rel (%p209) target = $region20
      $region19: #{tpu_custom_call.1} parent=11 // pred_region
        _
      $region20: #{tpu_custom_call.1} parent=11 // pred_fallthru
        _
      // Predicated region
      $region21: #{tpu_custom_call.1} parent=11 // pred_check
        %p212 = pneg %p102
      $region22: #{tpu_custom_call.1} parent=11 // pred_check_branch
        %214 = sbr.rel (%p212) target = $region24
      $region23: #{tpu_custom_call.1} parent=11 // pred_region
        _
      $region24: #{tpu_custom_call.1} parent=11 // pred_fallthru
        _
      // Predicated region
      $region25: #{tpu_custom_call.1} parent=11 // pred_check
        %p215 = pneg %p123
      $region26: #{tpu_custom_call.1} parent=11 // pred_check_branch
        %217 = sbr.rel (%p215) target = $region28
      $region27: #{tpu_custom_call.1} parent=11 // pred_region
        _
      $region28: #{tpu_custom_call.1} parent=11 // pred_fallthru
        _
      // Predicated region
      $region29: #{tpu_custom_call.1} parent=11 // pred_check
        %p218 = pneg %p144
      $region30: #{tpu_custom_call.1} parent=11 // pred_check_branch
        %220 = sbr.rel (%p218) target = $region32
      $region31: #{tpu_custom_call.1} parent=11 // pred_region
        _
      $region32: #{tpu_custom_call.1} parent=11 // pred_fallthru
        _
      // Predicated region
      $region33: #{tpu_custom_call.1} parent=11 // pred_check
        %p221 = pneg %p165
      $region34: #{tpu_custom_call.1} parent=11 // pred_check_branch
        %223 = sbr.rel (%p221) target = $region36
      $region35: #{tpu_custom_call.1} parent=11 // pred_region
        _
      $region36: #{tpu_custom_call.1} parent=11 // pred_fallthru
        _
    $region12: #{tpu_custom_call.1} parent=5 // pred_fallthru
      _
    %p224 = scmp.lt.s32.totalorder %s13, 2
    // Predicated region
    $region37: #{tpu_custom_call.1} parent=5 // pred_check
      %p225 = pneg %p224
    $region38: #{tpu_custom_call.1} parent=5 // pred_check_branch
      %227 = sbr.rel (%p225) target = $region40
    $region39: #{tpu_custom_call.1} parent=5 // pred_region
      // Predicated region
      $region41: #{tpu_custom_call.1} parent=39 // pred_check
        %p228 = pneg %p33
      $region42: #{tpu_custom_call.1} parent=39 // pred_check_branch
        %230 = sbr.rel (%p228) target = $region44
      $region43: #{tpu_custom_call.1} parent=39 // pred_region
        %s231 = smul.u32 2, %s13
        %p232 = scmp.lt.s32.totalorder %s231, 3
        %s233 = scalar_select %p232, %s231, 3
        %s234 = smul.addr %s233, 32
        %s235 = smul.addr %s234, 8
        %s236 = scalar_lea.vmem %s0, %s235
        %s237 = smul.u32 2, %s13
      $region44: #{tpu_custom_call.1} parent=39 // pred_fallthru
        _
    $region40: #{tpu_custom_call.1} parent=5 // pred_fallthru
      _
    %p238 = scmp.le.s32.totalorder 1, %s13
    %p239 = scmp.lt.s32.totalorder %s13, 3
    %p240 = pnand %p238, %p239
    %p241 = pneg %p240
    // Predicated region
    $region45: #{tpu_custom_call.1} parent=5 // pred_check
      _
    $region46: #{tpu_custom_call.1} parent=5 // pred_check_branch
      %243 = sbr.rel (%p240) target = $region48
    $region47: #{tpu_custom_call.1} parent=5 // pred_region
      %s244 = ssub.s32 %s13, 1
      %s245 = smul.u32 2, %s18
      %p246 = scmp.lt.s32.totalorder %s245, 3
      %s247 = scalar_select %p246, %s245, 3
      %s248 = smul.addr %s247, 32
      %s249 = smul.addr %s248, 8
      %s250 = scalar_lea.vmem %s0, %s249
      %p251 = pneg %p39
      %p252 = pneg %p36
      %p253 = pneg %p60
      %p254 = pneg %p57
      %p255 = pneg %p81
      %p256 = pneg %p78
      %p257 = pneg %p102
      %p258 = pneg %p99
      %p259 = pneg %p123
      %p260 = pneg %p120
      %p261 = pneg %p144
      %p262 = pneg %p141
      %p263 = pneg %p165
      %p264 = pneg %p162
      %p265 = pneg %p191
      %p266 = pneg %p188
      %s267 = smul.u32 2, %s18
      %p268 = scmp.lt.s32.totalorder %s267, 3
      %s269 = scalar_select %p268, %s267, 3
      %s270 = smul.addr %s269, 32
      %s271 = smul.addr %s270, 8
      %s272 = scalar_lea.vmem %s7, %s271
      %s273 = smul.u32 2, %s18
      %p274 = scmp.lt.s32.totalorder %s273, 3
      %s275 = scalar_select %p274, %s273, 3
      %s276 = smul.addr %s275, 32
      %s277 = smul.addr %s276, 8
      %s278 = scalar_lea.vmem %s0, %s277
      %s279 = smul.u32 2, %s18
      %s280 = smul.u32 2, %s18
      %p281 = scmp.lt.s32.totalorder %s280, 3
      %s282 = scalar_select %p281, %s280, 3
      %s283 = smul.addr %s282, 32
      %s284 = smul.addr %s283, 8
      %s285 = scalar_lea.vmem %s7, %s284
      %s286 = smul.u32 2, %s18
      %v287 = vld [vmem:[%s278] sm:$0xff]
      %v288 = vld [vmem:[%s278 + $0x8] sm:$0xff]
      %v289 = vld [vmem:[%s278 + $0x10] sm:$0xff]
      %v290 = vld [vmem:[%s278 + $0x18] sm:$0xff]
      %v291 = vld [vmem:[%s278 + $0x20] sm:$0xff]
      %v292 = vld [vmem:[%s278 + $0x28] sm:$0xff]
      %v293 = vld [vmem:[%s278 + $0x30] sm:$0xff]
      %v294 = vld [vmem:[%s278 + $0x38] sm:$0xff]
      %v295 = vld [vmem:[%s278 + $0x40] sm:$0xff]
      %v296 = vld [vmem:[%s278 + $0x48] sm:$0xff]
      %v297 = vld [vmem:[%s278 + $0x50] sm:$0xff]
      %v298 = vld [vmem:[%s278 + $0x58] sm:$0xff]
      %v299 = vld [vmem:[%s278 + $0x60] sm:$0xff]
      %v300 = vld [vmem:[%s278 + $0x68] sm:$0xff]
      %v301 = vld [vmem:[%s278 + $0x70] sm:$0xff]
      %v302 = vld [vmem:[%s278 + $0x78] sm:$0xff]
      %v303 = vld [vmem:[%s278 + $0x80] sm:$0xff]
      %v304 = vld [vmem:[%s278 + $0x88] sm:$0xff]
      %v305 = vld [vmem:[%s278 + $0x90] sm:$0xff]
      %v306 = vld [vmem:[%s278 + $0x98] sm:$0xff]
      %v307 = vld [vmem:[%s278 + $0xa0] sm:$0xff]
      %v308 = vld [vmem:[%s278 + $0xa8] sm:$0xff]
      %v309 = vld [vmem:[%s278 + $0xb0] sm:$0xff]
      %v310 = vld [vmem:[%s278 + $0xb8] sm:$0xff]
      %v311 = vld [vmem:[%s278 + $0xc0] sm:$0xff]
      %v312 = vld [vmem:[%s278 + $0xc8] sm:$0xff]
      %v313 = vld [vmem:[%s278 + $0xd0] sm:$0xff]
      %v314 = vld [vmem:[%s278 + $0xd8] sm:$0xff]
      %v315 = vld [vmem:[%s278 + $0xe0] sm:$0xff]
      %v316 = vld [vmem:[%s278 + $0xe8] sm:$0xff]
      %v317 = vld [vmem:[%s278 + $0xf0] sm:$0xff]
      %v318 = vld [vmem:[%s278 + $0xf8] sm:$0xff]
      %v319 = vld [vmem:[%s278 + $0x100] sm:$0xff]
      %v320 = vld [vmem:[%s278 + $0x108] sm:$0xff]
      %v321 = vld [vmem:[%s278 + $0x110] sm:$0xff]
      %v322 = vld [vmem:[%s278 + $0x118] sm:$0xff]
      %v323 = vld [vmem:[%s278 + $0x120] sm:$0xff]
      %v324 = vld [vmem:[%s278 + $0x128] sm:$0xff]
      %v325 = vld [vmem:[%s278 + $0x130] sm:$0xff]
      %v326 = vld [vmem:[%s278 + $0x138] sm:$0xff]
      %v327 = vld [vmem:[%s278 + $0x140] sm:$0xff]
      %v328 = vld [vmem:[%s278 + $0x148] sm:$0xff]
      %v329 = vld [vmem:[%s278 + $0x150] sm:$0xff]
      %v330 = vld [vmem:[%s278 + $0x158] sm:$0xff]
      %v331 = vld [vmem:[%s278 + $0x160] sm:$0xff]
      %v332 = vld [vmem:[%s278 + $0x168] sm:$0xff]
      %v333 = vld [vmem:[%s278 + $0x170] sm:$0xff]
      %v334 = vld [vmem:[%s278 + $0x178] sm:$0xff]
      %v335 = vld [vmem:[%s278 + $0x180] sm:$0xff]
      %v336 = vld [vmem:[%s278 + $0x188] sm:$0xff]
      %v337 = vld [vmem:[%s278 + $0x190] sm:$0xff]
      %v338 = vld [vmem:[%s278 + $0x198] sm:$0xff]
      %v339 = vld [vmem:[%s278 + $0x1a0] sm:$0xff]
      %v340 = vld [vmem:[%s278 + $0x1a8] sm:$0xff]
      %v341 = vld [vmem:[%s278 + $0x1b0] sm:$0xff]
      %v342 = vld [vmem:[%s278 + $0x1b8] sm:$0xff]
      %v343 = vld [vmem:[%s278 + $0x1c0] sm:$0xff]
      %v344 = vld [vmem:[%s278 + $0x1c8] sm:$0xff]
      %v345 = vld [vmem:[%s278 + $0x1d0] sm:$0xff]
      %v346 = vld [vmem:[%s278 + $0x1d8] sm:$0xff]
      %v347 = vld [vmem:[%s278 + $0x1e0] sm:$0xff]
      %v348 = vld [vmem:[%s278 + $0x1e8] sm:$0xff]
      %v349 = vld [vmem:[%s278 + $0x1f0] sm:$0xff]
      %v350 = vld [vmem:[%s278 + $0x1f8] sm:$0xff]
      %vm351 = vcmask 392192
      %v352 = vsel %vm351, %v287, 0.0
      %353 = vadd.xlane.f32.xlu0 %v352
      %v354 = vpop.xlane.xlu0 %353
      %v355 = vsel %vm351, %v288, 0.0
      %356 = vadd.xlane.f32.xlu0 %v355
      %v357 = vpop.xlane.xlu0 %356
      %v358 = vsel %vm351, %v289, 0.0
      %359 = vadd.xlane.f32.xlu0 %v358
      %v360 = vpop.xlane.xlu0 %359
      %v361 = vsel %vm351, %v290, 0.0
      %362 = vadd.xlane.f32.xlu0 %v361
      %v363 = vpop.xlane.xlu0 %362
      %v364 = vsel %vm351, %v291, 0.0
      %365 = vadd.xlane.f32.xlu0 %v364
      %v366 = vpop.xlane.xlu0 %365
      %v367 = vsel %vm351, %v292, 0.0
      %368 = vadd.xlane.f32.xlu0 %v367
      %v369 = vpop.xlane.xlu0 %368
      %v370 = vsel %vm351, %v293, 0.0
      %371 = vadd.xlane.f32.xlu0 %v370
      %v372 = vpop.xlane.xlu0 %371
      %v373 = vsel %vm351, %v294, 0.0
      %374 = vadd.xlane.f32.xlu0 %v373
      %v375 = vpop.xlane.xlu0 %374
      %v376 = vsel %vm351, %v295, 0.0
      %377 = vadd.xlane.f32.xlu0 %v376
      %v378 = vpop.xlane.xlu0 %377
      %v379 = vsel %vm351, %v296, 0.0
      %380 = vadd.xlane.f32.xlu0 %v379
      %v381 = vpop.xlane.xlu0 %380
      %v382 = vsel %vm351, %v297, 0.0
      %383 = vadd.xlane.f32.xlu0 %v382
      %v384 = vpop.xlane.xlu0 %383
      %v385 = vsel %vm351, %v298, 0.0
      %386 = vadd.xlane.f32.xlu0 %v385
      %v387 = vpop.xlane.xlu0 %386
      %v388 = vsel %vm351, %v299, 0.0
      %389 = vadd.xlane.f32.xlu0 %v388
      %v390 = vpop.xlane.xlu0 %389
      %v391 = vsel %vm351, %v300, 0.0
      %392 = vadd.xlane.f32.xlu0 %v391
      %v393 = vpop.xlane.xlu0 %392
      %v394 = vsel %vm351, %v301, 0.0
      %395 = vadd.xlane.f32.xlu0 %v394
      %v396 = vpop.xlane.xlu0 %395
      %v397 = vsel %vm351, %v302, 0.0
      %398 = vadd.xlane.f32.xlu0 %v397
      %v399 = vpop.xlane.xlu0 %398
      %v400 = vsel %vm351, %v303, 0.0
      %401 = vadd.xlane.f32.xlu0 %v400
      %v402 = vpop.xlane.xlu0 %401
      %v403 = vsel %vm351, %v304, 0.0
      %404 = vadd.xlane.f32.xlu0 %v403
      %v405 = vpop.xlane.xlu0 %404
      %v406 = vsel %vm351, %v305, 0.0
      %407 = vadd.xlane.f32.xlu0 %v406
      %v408 = vpop.xlane.xlu0 %407
      %v409 = vsel %vm351, %v306, 0.0
      %410 = vadd.xlane.f32.xlu0 %v409
      %v411 = vpop.xlane.xlu0 %410
      %v412 = vsel %vm351, %v307, 0.0
      %413 = vadd.xlane.f32.xlu0 %v412
      %v414 = vpop.xlane.xlu0 %413
      %v415 = vsel %vm351, %v308, 0.0
      %416 = vadd.xlane.f32.xlu0 %v415
      %v417 = vpop.xlane.xlu0 %416
      %v418 = vsel %vm351, %v309, 0.0
      %419 = vadd.xlane.f32.xlu0 %v418
      %v420 = vpop.xlane.xlu0 %419
      %v421 = vsel %vm351, %v310, 0.0
      %422 = vadd.xlane.f32.xlu0 %v421
      %v423 = vpop.xlane.xlu0 %422
      %v424 = vsel %vm351, %v311, 0.0
      %425 = vadd.xlane.f32.xlu0 %v424
      %v426 = vpop.xlane.xlu0 %425
      %v427 = vsel %vm351, %v312, 0.0
      %428 = vadd.xlane.f32.xlu0 %v427
      %v429 = vpop.xlane.xlu0 %428
      %v430 = vsel %vm351, %v313, 0.0
      %431 = vadd.xlane.f32.xlu0 %v430
      %v432 = vpop.xlane.xlu0 %431
      %v433 = vsel %vm351, %v314, 0.0
      %434 = vadd.xlane.f32.xlu0 %v433
      %v435 = vpop.xlane.xlu0 %434
      %v436 = vsel %vm351, %v315, 0.0
      %437 = vadd.xlane.f32.xlu0 %v436
      %v438 = vpop.xlane.xlu0 %437
      %v439 = vsel %vm351, %v316, 0.0
      %440 = vadd.xlane.f32.xlu0 %v439
      %v441 = vpop.xlane.xlu0 %440
      %v442 = vsel %vm351, %v317, 0.0
      %443 = vadd.xlane.f32.xlu0 %v442
      %v444 = vpop.xlane.xlu0 %443
      %v445 = vsel %vm351, %v318, 0.0
      %446 = vadd.xlane.f32.xlu0 %v445
      %v447 = vpop.xlane.xlu0 %446
      %v448 = vsel %vm351, %v319, 0.0
      %449 = vadd.xlane.f32.xlu0 %v448
      %v450 = vpop.xlane.xlu0 %449
      %v451 = vsel %vm351, %v320, 0.0
      %452 = vadd.xlane.f32.xlu0 %v451
      %v453 = vpop.xlane.xlu0 %452
      %v454 = vsel %vm351, %v321, 0.0
      %455 = vadd.xlane.f32.xlu0 %v454
      %v456 = vpop.xlane.xlu0 %455
      %v457 = vsel %vm351, %v322, 0.0
      %458 = vadd.xlane.f32.xlu0 %v457
      %v459 = vpop.xlane.xlu0 %458
      %v460 = vsel %vm351, %v323, 0.0
      %461 = vadd.xlane.f32.xlu0 %v460
      %v462 = vpop.xlane.xlu0 %461
      %v463 = vsel %vm351, %v324, 0.0
      %464 = vadd.xlane.f32.xlu0 %v463
      %v465 = vpop.xlane.xlu0 %464
      %v466 = vsel %vm351, %v325, 0.0
      %467 = vadd.xlane.f32.xlu0 %v466
      %v468 = vpop.xlane.xlu0 %467
      %v469 = vsel %vm351, %v326, 0.0
      %470 = vadd.xlane.f32.xlu0 %v469
      %v471 = vpop.xlane.xlu0 %470
      %v472 = vsel %vm351, %v327, 0.0
      %473 = vadd.xlane.f32.xlu0 %v472
      %v474 = vpop.xlane.xlu0 %473
      %v475 = vsel %vm351, %v328, 0.0
      %476 = vadd.xlane.f32.xlu0 %v475
      %v477 = vpop.xlane.xlu0 %476
      %v478 = vsel %vm351, %v329, 0.0
      %479 = vadd.xlane.f32.xlu0 %v478
      %v480 = vpop.xlane.xlu0 %479
      %v481 = vsel %vm351, %v330, 0.0
      %482 = vadd.xlane.f32.xlu0 %v481
      %v483 = vpop.xlane.xlu0 %482
      %v484 = vsel %vm351, %v331, 0.0
      %485 = vadd.xlane.f32.xlu0 %v484
      %v486 = vpop.xlane.xlu0 %485
      %v487 = vsel %vm351, %v332, 0.0
      %488 = vadd.xlane.f32.xlu0 %v487
      %v489 = vpop.xlane.xlu0 %488
      %v490 = vsel %vm351, %v333, 0.0
      %491 = vadd.xlane.f32.xlu0 %v490
      %v492 = vpop.xlane.xlu0 %491
      %v493 = vsel %vm351, %v334, 0.0
      %494 = vadd.xlane.f32.xlu0 %v493
      %v495 = vpop.xlane.xlu0 %494
      %v496 = vsel %vm351, %v335, 0.0
      %497 = vadd.xlane.f32.xlu0 %v496
      %v498 = vpop.xlane.xlu0 %497
      %v499 = vsel %vm351, %v336, 0.0
      %500 = vadd.xlane.f32.xlu0 %v499
      %v501 = vpop.xlane.xlu0 %500
      %v502 = vsel %vm351, %v337, 0.0
      %503 = vadd.xlane.f32.xlu0 %v502
      %v504 = vpop.xlane.xlu0 %503
      %v505 = vsel %vm351, %v338, 0.0
      %506 = vadd.xlane.f32.xlu0 %v505
      %v507 = vpop.xlane.xlu0 %506
      %v508 = vsel %vm351, %v339, 0.0
      %509 = vadd.xlane.f32.xlu0 %v508
      %v510 = vpop.xlane.xlu0 %509
      %v511 = vsel %vm351, %v340, 0.0
      %512 = vadd.xlane.f32.xlu0 %v511
      %v513 = vpop.xlane.xlu0 %512
      %v514 = vsel %vm351, %v341, 0.0
      %515 = vadd.xlane.f32.xlu0 %v514
      %v516 = vpop.xlane.xlu0 %515
      %v517 = vsel %vm351, %v342, 0.0
      %518 = vadd.xlane.f32.xlu0 %v517
      %v519 = vpop.xlane.xlu0 %518
      %v520 = vsel %vm351, %v343, 0.0
      %521 = vadd.xlane.f32.xlu0 %v520
      %v522 = vpop.xlane.xlu0 %521
      %v523 = vsel %vm351, %v344, 0.0
      %524 = vadd.xlane.f32.xlu0 %v523
      %v525 = vpop.xlane.xlu0 %524
      %v526 = vsel %vm351, %v345, 0.0
      %527 = vadd.xlane.f32.xlu0 %v526
      %v528 = vpop.xlane.xlu0 %527
      %v529 = vsel %vm351, %v346, 0.0
      %530 = vadd.xlane.f32.xlu0 %v529
      %v531 = vpop.xlane.xlu0 %530
      %v532 = vsel %vm351, %v347, 0.0
      %533 = vadd.xlane.f32.xlu0 %v532
      %v534 = vpop.xlane.xlu0 %533
      %v535 = vsel %vm351, %v348, 0.0
      %536 = vadd.xlane.f32.xlu0 %v535
      %v537 = vpop.xlane.xlu0 %536
      %v538 = vsel %vm351, %v349, 0.0
      %539 = vadd.xlane.f32.xlu0 %v538
      %v540 = vpop.xlane.xlu0 %539
      %v541 = vsel %vm351, %v350, 0.0
      %542 = vadd.xlane.f32.xlu0 %v541
      %v543 = vpop.xlane.xlu0 %542
      %v544 = vrcp.pop 48.0
      %v545 = vmul.f32 %v354, %v544
      %v546 = vmul.f32 %v357, %v544
      %v547 = vmul.f32 %v360, %v544
      %v548 = vmul.f32 %v363, %v544
      %v549 = vmul.f32 %v366, %v544
      %v550 = vmul.f32 %v369, %v544
      %v551 = vmul.f32 %v372, %v544
      %v552 = vmul.f32 %v375, %v544
      %v553 = vmul.f32 %v378, %v544
      %v554 = vmul.f32 %v381, %v544
      %v555 = vmul.f32 %v384, %v544
      %v556 = vmul.f32 %v387, %v544
      %v557 = vmul.f32 %v390, %v544
      %v558 = vmul.f32 %v393, %v544
      %v559 = vmul.f32 %v396, %v544
      %v560 = vmul.f32 %v399, %v544
      %v561 = vmul.f32 %v402, %v544
      %v562 = vmul.f32 %v405, %v544
      %v563 = vmul.f32 %v408, %v544
      %v564 = vmul.f32 %v411, %v544
      %v565 = vmul.f32 %v414, %v544
      %v566 = vmul.f32 %v417, %v544
      %v567 = vmul.f32 %v420, %v544
      %v568 = vmul.f32 %v423, %v544
      %v569 = vmul.f32 %v426, %v544
      %v570 = vmul.f32 %v429, %v544
      %v571 = vmul.f32 %v432, %v544
      %v572 = vmul.f32 %v435, %v544
      %v573 = vmul.f32 %v438, %v544
      %v574 = vmul.f32 %v441, %v544
      %v575 = vmul.f32 %v444, %v544
      %v576 = vmul.f32 %v447, %v544
      %v577 = vmul.f32 %v450, %v544
      %v578 = vmul.f32 %v453, %v544
      %v579 = vmul.f32 %v456, %v544
      %v580 = vmul.f32 %v459, %v544
      %v581 = vmul.f32 %v462, %v544
      %v582 = vmul.f32 %v465, %v544
      %v583 = vmul.f32 %v468, %v544
      %v584 = vmul.f32 %v471, %v544
      %v585 = vmul.f32 %v474, %v544
      %v586 = vmul.f32 %v477, %v544
      %v587 = vmul.f32 %v480, %v544
      %v588 = vmul.f32 %v483, %v544
      %v589 = vmul.f32 %v486, %v544
      %v590 = vmul.f32 %v489, %v544
      %v591 = vmul.f32 %v492, %v544
      %v592 = vmul.f32 %v495, %v544
      %v593 = vmul.f32 %v498, %v544
      %v594 = vmul.f32 %v501, %v544
      %v595 = vmul.f32 %v504, %v544
      %v596 = vmul.f32 %v507, %v544
      %v597 = vmul.f32 %v510, %v544
      %v598 = vmul.f32 %v513, %v544
      %v599 = vmul.f32 %v516, %v544
      %v600 = vmul.f32 %v519, %v544
      %v601 = vmul.f32 %v522, %v544
      %v602 = vmul.f32 %v525, %v544
      %v603 = vmul.f32 %v528, %v544
      %v604 = vmul.f32 %v531, %v544
      %v605 = vmul.f32 %v534, %v544
      %v606 = vmul.f32 %v537, %v544
      %v607 = vmul.f32 %v540, %v544
      %v608 = vmul.f32 %v543, %v544
      %v609 = vsub.f32 %v287, %v545
      %v610 = vsub.f32 %v288, %v546
      %v611 = vsub.f32 %v289, %v547
      %v612 = vsub.f32 %v290, %v548
      %v613 = vsub.f32 %v291, %v549
      %v614 = vsub.f32 %v292, %v550
      %v615 = vsub.f32 %v293, %v551
      %v616 = vsub.f32 %v294, %v552
      %v617 = vsub.f32 %v295, %v553
      %v618 = vsub.f32 %v296, %v554
      %v619 = vsub.f32 %v297, %v555
      %v620 = vsub.f32 %v298, %v556
      %v621 = vsub.f32 %v299, %v557
      %v622 = vsub.f32 %v300, %v558
      %v623 = vsub.f32 %v301, %v559
      %v624 = vsub.f32 %v302, %v560
      %v625 = vsub.f32 %v303, %v561
      %v626 = vsub.f32 %v304, %v562
      %v627 = vsub.f32 %v305, %v563
      %v628 = vsub.f32 %v306, %v564
      %v629 = vsub.f32 %v307, %v565
      %v630 = vsub.f32 %v308, %v566
      %v631 = vsub.f32 %v309, %v567
      %v632 = vsub.f32 %v310, %v568
      %v633 = vsub.f32 %v311, %v569
      %v634 = vsub.f32 %v312, %v570
      %v635 = vsub.f32 %v313, %v571
      %v636 = vsub.f32 %v314, %v572
      %v637 = vsub.f32 %v315, %v573
      %v638 = vsub.f32 %v316, %v574
      %v639 = vsub.f32 %v317, %v575
      %v640 = vsub.f32 %v318, %v576
      %v641 = vsub.f32 %v319, %v577
      %v642 = vsub.f32 %v320, %v578
      %v643 = vsub.f32 %v321, %v579
      %v644 = vsub.f32 %v322, %v580
      %v645 = vsub.f32 %v323, %v581
      %v646 = vsub.f32 %v324, %v582
      %v647 = vsub.f32 %v325, %v583
      %v648 = vsub.f32 %v326, %v584
      %v649 = vsub.f32 %v327, %v585
      %v650 = vsub.f32 %v328, %v586
      %v651 = vsub.f32 %v329, %v587
      %v652 = vsub.f32 %v330, %v588
      %v653 = vsub.f32 %v331, %v589
      %v654 = vsub.f32 %v332, %v590
      %v655 = vsub.f32 %v333, %v591
      %v656 = vsub.f32 %v334, %v592
      %v657 = vsub.f32 %v335, %v593
      %v658 = vsub.f32 %v336, %v594
      %v659 = vsub.f32 %v337, %v595
      %v660 = vsub.f32 %v338, %v596
      %v661 = vsub.f32 %v339, %v597
      %v662 = vsub.f32 %v340, %v598
      %v663 = vsub.f32 %v341, %v599
      %v664 = vsub.f32 %v342, %v600
      %v665 = vsub.f32 %v343, %v601
      %v666 = vsub.f32 %v344, %v602
      %v667 = vsub.f32 %v345, %v603
      %v668 = vsub.f32 %v346, %v604
      %v669 = vsub.f32 %v347, %v605
      %v670 = vsub.f32 %v348, %v606
      %v671 = vsub.f32 %v349, %v607
      %v672 = vsub.f32 %v350, %v608
      %v673 = vmul.f32 %v609, %v609
      %v674 = vmul.f32 %v610, %v610
      %v675 = vmul.f32 %v611, %v611
      %v676 = vmul.f32 %v612, %v612
      %v677 = vmul.f32 %v613, %v613
      %v678 = vmul.f32 %v614, %v614
      %v679 = vmul.f32 %v615, %v615
      %v680 = vmul.f32 %v616, %v616
      %v681 = vmul.f32 %v617, %v617
      %v682 = vmul.f32 %v618, %v618
      %v683 = vmul.f32 %v619, %v619
      %v684 = vmul.f32 %v620, %v620
      %v685 = vmul.f32 %v621, %v621
      %v686 = vmul.f32 %v622, %v622
      %v687 = vmul.f32 %v623, %v623
      %v688 = vmul.f32 %v624, %v624
      %v689 = vmul.f32 %v625, %v625
      %v690 = vmul.f32 %v626, %v626
      %v691 = vmul.f32 %v627, %v627
      %v692 = vmul.f32 %v628, %v628
      %v693 = vmul.f32 %v629, %v629
      %v694 = vmul.f32 %v630, %v630
      %v695 = vmul.f32 %v631, %v631
      %v696 = vmul.f32 %v632, %v632
      %v697 = vmul.f32 %v633, %v633
      %v698 = vmul.f32 %v634, %v634
      %v699 = vmul.f32 %v635, %v635
      %v700 = vmul.f32 %v636, %v636
      %v701 = vmul.f32 %v637, %v637
      %v702 = vmul.f32 %v638, %v638
      %v703 = vmul.f32 %v639, %v639
      %v704 = vmul.f32 %v640, %v640
      %v705 = vmul.f32 %v641, %v641
      %v706 = vmul.f32 %v642, %v642
      %v707 = vmul.f32 %v643, %v643
      %v708 = vmul.f32 %v644, %v644
      %v709 = vmul.f32 %v645, %v645
      %v710 = vmul.f32 %v646, %v646
      %v711 = vmul.f32 %v647, %v647
      %v712 = vmul.f32 %v648, %v648
      %v713 = vmul.f32 %v649, %v649
      %v714 = vmul.f32 %v650, %v650
      %v715 = vmul.f32 %v651, %v651
      %v716 = vmul.f32 %v652, %v652
      %v717 = vmul.f32 %v653, %v653
      %v718 = vmul.f32 %v654, %v654
      %v719 = vmul.f32 %v655, %v655
      %v720 = vmul.f32 %v656, %v656
      %v721 = vmul.f32 %v657, %v657
      %v722 = vmul.f32 %v658, %v658
      %v723 = vmul.f32 %v659, %v659
      %v724 = vmul.f32 %v660, %v660
      %v725 = vmul.f32 %v661, %v661
      %v726 = vmul.f32 %v662, %v662
      %v727 = vmul.f32 %v663, %v663
      %v728 = vmul.f32 %v664, %v664
      %v729 = vmul.f32 %v665, %v665
      %v730 = vmul.f32 %v666, %v666
      %v731 = vmul.f32 %v667, %v667
      %v732 = vmul.f32 %v668, %v668
      %v733 = vmul.f32 %v669, %v669
      %v734 = vmul.f32 %v670, %v670
      %v735 = vmul.f32 %v671, %v671
      %v736 = vmul.f32 %v672, %v672
      %v737 = vsel %vm351, %v673, 0.0
      %738 = vadd.xlane.f32.xlu0 %v737
      %v739 = vpop.xlane.xlu0 %738
      %v740 = vsel %vm351, %v674, 0.0
      %741 = vadd.xlane.f32.xlu0 %v740
      %v742 = vpop.xlane.xlu0 %741
      %v743 = vsel %vm351, %v675, 0.0
      %744 = vadd.xlane.f32.xlu0 %v743
      %v745 = vpop.xlane.xlu0 %744
      %v746 = vsel %vm351, %v676, 0.0
      %747 = vadd.xlane.f32.xlu0 %v746
      %v748 = vpop.xlane.xlu0 %747
      %v749 = vsel %vm351, %v677, 0.0
      %750 = vadd.xlane.f32.xlu0 %v749
      %v751 = vpop.xlane.xlu0 %750
      %v752 = vsel %vm351, %v678, 0.0
      %753 = vadd.xlane.f32.xlu0 %v752
      %v754 = vpop.xlane.xlu0 %753
      %v755 = vsel %vm351, %v679, 0.0
      %756 = vadd.xlane.f32.xlu0 %v755
      %v757 = vpop.xlane.xlu0 %756
      %v758 = vsel %vm351, %v680, 0.0
      %759 = vadd.xlane.f32.xlu0 %v758
      %v760 = vpop.xlane.xlu0 %759
      %v761 = vsel %vm351, %v681, 0.0
      %762 = vadd.xlane.f32.xlu0 %v761
      %v763 = vpop.xlane.xlu0 %762
      %v764 = vsel %vm351, %v682, 0.0
      %765 = vadd.xlane.f32.xlu0 %v764
      %v766 = vpop.xlane.xlu0 %765
      %v767 = vsel %vm351, %v683, 0.0
      %768 = vadd.xlane.f32.xlu0 %v767
      %v769 = vpop.xlane.xlu0 %768
      %v770 = vsel %vm351, %v684, 0.0
      %771 = vadd.xlane.f32.xlu0 %v770
      %v772 = vpop.xlane.xlu0 %771
      %v773 = vsel %vm351, %v685, 0.0
      %774 = vadd.xlane.f32.xlu0 %v773
      %v775 = vpop.xlane.xlu0 %774
      %v776 = vsel %vm351, %v686, 0.0
      %777 = vadd.xlane.f32.xlu0 %v776
      %v778 = vpop.xlane.xlu0 %777
      %v779 = vsel %vm351, %v687, 0.0
      %780 = vadd.xlane.f32.xlu0 %v779
      %v781 = vpop.xlane.xlu0 %780
      %v782 = vsel %vm351, %v688, 0.0
      %783 = vadd.xlane.f32.xlu0 %v782
      %v784 = vpop.xlane.xlu0 %783
      %v785 = vsel %vm351, %v689, 0.0
      %786 = vadd.xlane.f32.xlu0 %v785
      %v787 = vpop.xlane.xlu0 %786
      %v788 = vsel %vm351, %v690, 0.0
      %789 = vadd.xlane.f32.xlu0 %v788
      %v790 = vpop.xlane.xlu0 %789
      %v791 = vsel %vm351, %v691, 0.0
      %792 = vadd.xlane.f32.xlu0 %v791
      %v793 = vpop.xlane.xlu0 %792
      %v794 = vsel %vm351, %v692, 0.0
      %795 = vadd.xlane.f32.xlu0 %v794
      %v796 = vpop.xlane.xlu0 %795
      %v797 = vsel %vm351, %v693, 0.0
      %798 = vadd.xlane.f32.xlu0 %v797
      %v799 = vpop.xlane.xlu0 %798
      %v800 = vsel %vm351, %v694, 0.0
      %801 = vadd.xlane.f32.xlu0 %v800
      %v802 = vpop.xlane.xlu0 %801
      %v803 = vsel %vm351, %v695, 0.0
      %804 = vadd.xlane.f32.xlu0 %v803
      %v805 = vpop.xlane.xlu0 %804
      %v806 = vsel %vm351, %v696, 0.0
      %807 = vadd.xlane.f32.xlu0 %v806
      %v808 = vpop.xlane.xlu0 %807
      %v809 = vsel %vm351, %v697, 0.0
      %810 = vadd.xlane.f32.xlu0 %v809
      %v811 = vpop.xlane.xlu0 %810
      %v812 = vsel %vm351, %v698, 0.0
      %813 = vadd.xlane.f32.xlu0 %v812
      %v814 = vpop.xlane.xlu0 %813
      %v815 = vsel %vm351, %v699, 0.0
      %816 = vadd.xlane.f32.xlu0 %v815
      %v817 = vpop.xlane.xlu0 %816
      %v818 = vsel %vm351, %v700, 0.0
      %819 = vadd.xlane.f32.xlu0 %v818
      %v820 = vpop.xlane.xlu0 %819
      %v821 = vsel %vm351, %v701, 0.0
      %822 = vadd.xlane.f32.xlu0 %v821
      %v823 = vpop.xlane.xlu0 %822
      %v824 = vsel %vm351, %v702, 0.0
      %825 = vadd.xlane.f32.xlu0 %v824
      %v826 = vpop.xlane.xlu0 %825
      %v827 = vsel %vm351, %v703, 0.0
      %828 = vadd.xlane.f32.xlu0 %v827
      %v829 = vpop.xlane.xlu0 %828
      %v830 = vsel %vm351, %v704, 0.0
      %831 = vadd.xlane.f32.xlu0 %v830
      %v832 = vpop.xlane.xlu0 %831
      %v833 = vsel %vm351, %v705, 0.0
      %834 = vadd.xlane.f32.xlu0 %v833
      %v835 = vpop.xlane.xlu0 %834
      %v836 = vsel %vm351, %v706, 0.0
      %837 = vadd.xlane.f32.xlu0 %v836
      %v838 = vpop.xlane.xlu0 %837
      %v839 = vsel %vm351, %v707, 0.0
      %840 = vadd.xlane.f32.xlu0 %v839
      %v841 = vpop.xlane.xlu0 %840
      %v842 = vsel %vm351, %v708, 0.0
      %843 = vadd.xlane.f32.xlu0 %v842
      %v844 = vpop.xlane.xlu0 %843
      %v845 = vsel %vm351, %v709, 0.0
      %846 = vadd.xlane.f32.xlu0 %v845
      %v847 = vpop.xlane.xlu0 %846
      %v848 = vsel %vm351, %v710, 0.0
      %849 = vadd.xlane.f32.xlu0 %v848
      %v850 = vpop.xlane.xlu0 %849
      %v851 = vsel %vm351, %v711, 0.0
      %852 = vadd.xlane.f32.xlu0 %v851
      %v853 = vpop.xlane.xlu0 %852
      %v854 = vsel %vm351, %v712, 0.0
      %855 = vadd.xlane.f32.xlu0 %v854
      %v856 = vpop.xlane.xlu0 %855
      %v857 = vsel %vm351, %v713, 0.0
      %858 = vadd.xlane.f32.xlu0 %v857
      %v859 = vpop.xlane.xlu0 %858
      %v860 = vsel %vm351, %v714, 0.0
      %861 = vadd.xlane.f32.xlu0 %v860
      %v862 = vpop.xlane.xlu0 %861
      %v863 = vsel %vm351, %v715, 0.0
      %864 = vadd.xlane.f32.xlu0 %v863
      %v865 = vpop.xlane.xlu0 %864
      %v866 = vsel %vm351, %v716, 0.0
      %867 = vadd.xlane.f32.xlu0 %v866
      %v868 = vpop.xlane.xlu0 %867
      %v869 = vsel %vm351, %v717, 0.0
      %870 = vadd.xlane.f32.xlu0 %v869
      %v871 = vpop.xlane.xlu0 %870
      %v872 = vsel %vm351, %v718, 0.0
      %873 = vadd.xlane.f32.xlu0 %v872
      %v874 = vpop.xlane.xlu0 %873
      %v875 = vsel %vm351, %v719, 0.0
      %876 = vadd.xlane.f32.xlu0 %v875
      %v877 = vpop.xlane.xlu0 %876
      %v878 = vsel %vm351, %v720, 0.0
      %879 = vadd.xlane.f32.xlu0 %v878
      %v880 = vpop.xlane.xlu0 %879
      %v881 = vsel %vm351, %v721, 0.0
      %882 = vadd.xlane.f32.xlu0 %v881
      %v883 = vpop.xlane.xlu0 %882
      %v884 = vsel %vm351, %v722, 0.0
      %885 = vadd.xlane.f32.xlu0 %v884
      %v886 = vpop.xlane.xlu0 %885
      %v887 = vsel %vm351, %v723, 0.0
      %888 = vadd.xlane.f32.xlu0 %v887
      %v889 = vpop.xlane.xlu0 %888
      %v890 = vsel %vm351, %v724, 0.0
      %891 = vadd.xlane.f32.xlu0 %v890
      %v892 = vpop.xlane.xlu0 %891
      %v893 = vsel %vm351, %v725, 0.0
      %894 = vadd.xlane.f32.xlu0 %v893
      %v895 = vpop.xlane.xlu0 %894
      %v896 = vsel %vm351, %v726, 0.0
      %897 = vadd.xlane.f32.xlu0 %v896
      %v898 = vpop.xlane.xlu0 %897
      %v899 = vsel %vm351, %v727, 0.0
      %900 = vadd.xlane.f32.xlu0 %v899
      %v901 = vpop.xlane.xlu0 %900
      %v902 = vsel %vm351, %v728, 0.0
      %903 = vadd.xlane.f32.xlu0 %v902
      %v904 = vpop.xlane.xlu0 %903
      %v905 = vsel %vm351, %v729, 0.0
      %906 = vadd.xlane.f32.xlu0 %v905
      %v907 = vpop.xlane.xlu0 %906
      %v908 = vsel %vm351, %v730, 0.0
      %909 = vadd.xlane.f32.xlu0 %v908
      %v910 = vpop.xlane.xlu0 %909
      %v911 = vsel %vm351, %v731, 0.0
      %912 = vadd.xlane.f32.xlu0 %v911
      %v913 = vpop.xlane.xlu0 %912
      %v914 = vsel %vm351, %v732, 0.0
      %915 = vadd.xlane.f32.xlu0 %v914
      %v916 = vpop.xlane.xlu0 %915
      %v917 = vsel %vm351, %v733, 0.0
      %918 = vadd.xlane.f32.xlu0 %v917
      %v919 = vpop.xlane.xlu0 %918
      %v920 = vsel %vm351, %v734, 0.0
      %921 = vadd.xlane.f32.xlu0 %v920
      %v922 = vpop.xlane.xlu0 %921
      %v923 = vsel %vm351, %v735, 0.0
      %924 = vadd.xlane.f32.xlu0 %v923
      %v925 = vpop.xlane.xlu0 %924
      %v926 = vsel %vm351, %v736, 0.0
      %927 = vadd.xlane.f32.xlu0 %v926
      %v928 = vpop.xlane.xlu0 %927
      %v929 = vmul.f32 %v739, %v544
      %v930 = vmul.f32 %v742, %v544
      %v931 = vmul.f32 %v745, %v544
      %v932 = vmul.f32 %v748, %v544
      %v933 = vmul.f32 %v751, %v544
      %v934 = vmul.f32 %v754, %v544
      %v935 = vmul.f32 %v757, %v544
      %v936 = vmul.f32 %v760, %v544
      %v937 = vmul.f32 %v763, %v544
      %v938 = vmul.f32 %v766, %v544
      %v939 = vmul.f32 %v769, %v544
      %v940 = vmul.f32 %v772, %v544
      %v941 = vmul.f32 %v775, %v544
      %v942 = vmul.f32 %v778, %v544
      %v943 = vmul.f32 %v781, %v544
      %v944 = vmul.f32 %v784, %v544
      %v945 = vmul.f32 %v787, %v544
      %v946 = vmul.f32 %v790, %v544
      %v947 = vmul.f32 %v793, %v544
      %v948 = vmul.f32 %v796, %v544
      %v949 = vmul.f32 %v799, %v544
      %v950 = vmul.f32 %v802, %v544
      %v951 = vmul.f32 %v805, %v544
      %v952 = vmul.f32 %v808, %v544
      %v953 = vmul.f32 %v811, %v544
      %v954 = vmul.f32 %v814, %v544
      %v955 = vmul.f32 %v817, %v544
      %v956 = vmul.f32 %v820, %v544
      %v957 = vmul.f32 %v823, %v544
      %v958 = vmul.f32 %v826, %v544
      %v959 = vmul.f32 %v829, %v544
      %v960 = vmul.f32 %v832, %v544
      %v961 = vmul.f32 %v835, %v544
      %v962 = vmul.f32 %v838, %v544
      %v963 = vmul.f32 %v841, %v544
      %v964 = vmul.f32 %v844, %v544
      %v965 = vmul.f32 %v847, %v544
      %v966 = vmul.f32 %v850, %v544
      %v967 = vmul.f32 %v853, %v544
      %v968 = vmul.f32 %v856, %v544
      %v969 = vmul.f32 %v859, %v544
      %v970 = vmul.f32 %v862, %v544
      %v971 = vmul.f32 %v865, %v544
      %v972 = vmul.f32 %v868, %v544
      %v973 = vmul.f32 %v871, %v544
      %v974 = vmul.f32 %v874, %v544
      %v975 = vmul.f32 %v877, %v544
      %v976 = vmul.f32 %v880, %v544
      %v977 = vmul.f32 %v883, %v544
      %v978 = vmul.f32 %v886, %v544
      %v979 = vmul.f32 %v889, %v544
      %v980 = vmul.f32 %v892, %v544
      %v981 = vmul.f32 %v895, %v544
      %v982 = vmul.f32 %v898, %v544
      %v983 = vmul.f32 %v901, %v544
      %v984 = vmul.f32 %v904, %v544
      %v985 = vmul.f32 %v907, %v544
      %v986 = vmul.f32 %v910, %v544
      %v987 = vmul.f32 %v913, %v544
      %v988 = vmul.f32 %v916, %v544
      %v989 = vmul.f32 %v919, %v544
      %v990 = vmul.f32 %v922, %v544
      %v991 = vmul.f32 %v925, %v544
      %v992 = vmul.f32 %v928, %v544
      %v993 = vadd.f32 %v929, 1e-05
      %v994 = vadd.f32 %v930, 1e-05
      %v995 = vadd.f32 %v931, 1e-05
      %v996 = vadd.f32 %v932, 1e-05
      %v997 = vadd.f32 %v933, 1e-05
      %v998 = vadd.f32 %v934, 1e-05
      %v999 = vadd.f32 %v935, 1e-05
      %v1000 = vadd.f32 %v936, 1e-05
      %v1001 = vadd.f32 %v937, 1e-05
      %v1002 = vadd.f32 %v938, 1e-05
      %v1003 = vadd.f32 %v939, 1e-05
      %v1004 = vadd.f32 %v940, 1e-05
      %v1005 = vadd.f32 %v941, 1e-05
      %v1006 = vadd.f32 %v942, 1e-05
      %v1007 = vadd.f32 %v943, 1e-05
      %v1008 = vadd.f32 %v944, 1e-05
      %v1009 = vadd.f32 %v945, 1e-05
      %v1010 = vadd.f32 %v946, 1e-05
      %v1011 = vadd.f32 %v947, 1e-05
      %v1012 = vadd.f32 %v948, 1e-05
      %v1013 = vadd.f32 %v949, 1e-05
      %v1014 = vadd.f32 %v950, 1e-05
      %v1015 = vadd.f32 %v951, 1e-05
      %v1016 = vadd.f32 %v952, 1e-05
      %v1017 = vadd.f32 %v953, 1e-05
      %v1018 = vadd.f32 %v954, 1e-05
      %v1019 = vadd.f32 %v955, 1e-05
      %v1020 = vadd.f32 %v956, 1e-05
      %v1021 = vadd.f32 %v957, 1e-05
      %v1022 = vadd.f32 %v958, 1e-05
      %v1023 = vadd.f32 %v959, 1e-05
      %v1024 = vadd.f32 %v960, 1e-05
      %v1025 = vadd.f32 %v961, 1e-05
      %v1026 = vadd.f32 %v962, 1e-05
      %v1027 = vadd.f32 %v963, 1e-05
      %v1028 = vadd.f32 %v964, 1e-05
      %v1029 = vadd.f32 %v965, 1e-05
      %v1030 = vadd.f32 %v966, 1e-05
      %v1031 = vadd.f32 %v967, 1e-05
      %v1032 = vadd.f32 %v968, 1e-05
      %v1033 = vadd.f32 %v969, 1e-05
      %v1034 = vadd.f32 %v970, 1e-05
      %v1035 = vadd.f32 %v971, 1e-05
      %v1036 = vadd.f32 %v972, 1e-05
      %v1037 = vadd.f32 %v973, 1e-05
      %v1038 = vadd.f32 %v974, 1e-05
      %v1039 = vadd.f32 %v975, 1e-05
      %v1040 = vadd.f32 %v976, 1e-05
      %v1041 = vadd.f32 %v977, 1e-05
      %v1042 = vadd.f32 %v978, 1e-05
      %v1043 = vadd.f32 %v979, 1e-05
      %v1044 = vadd.f32 %v980, 1e-05
      %v1045 = vadd.f32 %v981, 1e-05
      %v1046 = vadd.f32 %v982, 1e-05
      %v1047 = vadd.f32 %v983, 1e-05
      %v1048 = vadd.f32 %v984, 1e-05
      %v1049 = vadd.f32 %v985, 1e-05
      %v1050 = vadd.f32 %v986, 1e-05
      %v1051 = vadd.f32 %v987, 1e-05
      %v1052 = vadd.f32 %v988, 1e-05
      %v1053 = vadd.f32 %v989, 1e-05
      %v1054 = vadd.f32 %v990, 1e-05
      %v1055 = vadd.f32 %v991, 1e-05
      %v1056 = vadd.f32 %v992, 1e-05
      %v1057 = vrsqrt.pop %v993
      %v1058 = vrsqrt.pop %v994
      %v1059 = vrsqrt.pop %v995
      %v1060 = vrsqrt.pop %v996
      %v1061 = vrsqrt.pop %v997
      %v1062 = vrsqrt.pop %v998
      %v1063 = vrsqrt.pop %v999
      %v1064 = vrsqrt.pop %v1000
      %v1065 = vrsqrt.pop %v1001
      %v1066 = vrsqrt.pop %v1002
      %v1067 = vrsqrt.pop %v1003
      %v1068 = vrsqrt.pop %v1004
      %v1069 = vrsqrt.pop %v1005
      %v1070 = vrsqrt.pop %v1006
      %v1071 = vrsqrt.pop %v1007
      %v1072 = vrsqrt.pop %v1008
      %v1073 = vrsqrt.pop %v1009
      %v1074 = vrsqrt.pop %v1010
      %v1075 = vrsqrt.pop %v1011
      %v1076 = vrsqrt.pop %v1012
      %v1077 = vrsqrt.pop %v1013
      %v1078 = vrsqrt.pop %v1014
      %v1079 = vrsqrt.pop %v1015
      %v1080 = vrsqrt.pop %v1016
      %v1081 = vrsqrt.pop %v1017
      %v1082 = vrsqrt.pop %v1018
      %v1083 = vrsqrt.pop %v1019
      %v1084 = vrsqrt.pop %v1020
      %v1085 = vrsqrt.pop %v1021
      %v1086 = vrsqrt.pop %v1022
      %v1087 = vrsqrt.pop %v1023
      %v1088 = vrsqrt.pop %v1024
      %v1089 = vrsqrt.pop %v1025
      %v1090 = vrsqrt.pop %v1026
      %v1091 = vrsqrt.pop %v1027
      %v1092 = vrsqrt.pop %v1028
      %v1093 = vrsqrt.pop %v1029
      %v1094 = vrsqrt.pop %v1030
      %v1095 = vrsqrt.pop %v1031
      %v1096 = vrsqrt.pop %v1032
      %v1097 = vrsqrt.pop %v1033
      %v1098 = vrsqrt.pop %v1034
      %v1099 = vrsqrt.pop %v1035
      %v1100 = vrsqrt.pop %v1036
      %v1101 = vrsqrt.pop %v1037
      %v1102 = vrsqrt.pop %v1038
      %v1103 = vrsqrt.pop %v1039
      %v1104 = vrsqrt.pop %v1040
      %v1105 = vrsqrt.pop %v1041
      %v1106 = vrsqrt.pop %v1042
      %v1107 = vrsqrt.pop %v1043
      %v1108 = vrsqrt.pop %v1044
      %v1109 = vrsqrt.pop %v1045
      %v1110 = vrsqrt.pop %v1046
      %v1111 = vrsqrt.pop %v1047
      %v1112 = vrsqrt.pop %v1048
      %v1113 = vrsqrt.pop %v1049
      %v1114 = vrsqrt.pop %v1050
      %v1115 = vrsqrt.pop %v1051
      %v1116 = vrsqrt.pop %v1052
      %v1117 = vrsqrt.pop %v1053
      %v1118 = vrsqrt.pop %v1054
      %v1119 = vrsqrt.pop %v1055
      %v1120 = vrsqrt.pop %v1056
      %v1121 = vmul.f32 %v609, %v1057
      %v1122 = vmul.f32 %v610, %v1058
      %v1123 = vmul.f32 %v611, %v1059
      %v1124 = vmul.f32 %v612, %v1060
      %v1125 = vmul.f32 %v613, %v1061
      %v1126 = vmul.f32 %v614, %v1062
      %v1127 = vmul.f32 %v615, %v1063
      %v1128 = vmul.f32 %v616, %v1064
      %v1129 = vmul.f32 %v617, %v1065
      %v1130 = vmul.f32 %v618, %v1066
      %v1131 = vmul.f32 %v619, %v1067
      %v1132 = vmul.f32 %v620, %v1068
      %v1133 = vmul.f32 %v621, %v1069
      %v1134 = vmul.f32 %v622, %v1070
      %v1135 = vmul.f32 %v623, %v1071
      %v1136 = vmul.f32 %v624, %v1072
      %v1137 = vmul.f32 %v625, %v1073
      %v1138 = vmul.f32 %v626, %v1074
      %v1139 = vmul.f32 %v627, %v1075
      %v1140 = vmul.f32 %v628, %v1076
      %v1141 = vmul.f32 %v629, %v1077
      %v1142 = vmul.f32 %v630, %v1078
      %v1143 = vmul.f32 %v631, %v1079
      %v1144 = vmul.f32 %v632, %v1080
      %v1145 = vmul.f32 %v633, %v1081
      %v1146 = vmul.f32 %v634, %v1082
      %v1147 = vmul.f32 %v635, %v1083
      %v1148 = vmul.f32 %v636, %v1084
      %v1149 = vmul.f32 %v637, %v1085
      %v1150 = vmul.f32 %v638, %v1086
      %v1151 = vmul.f32 %v639, %v1087
      %v1152 = vmul.f32 %v640, %v1088
      %v1153 = vmul.f32 %v641, %v1089
      %v1154 = vmul.f32 %v642, %v1090
      %v1155 = vmul.f32 %v643, %v1091
      %v1156 = vmul.f32 %v644, %v1092
      %v1157 = vmul.f32 %v645, %v1093
      %v1158 = vmul.f32 %v646, %v1094
      %v1159 = vmul.f32 %v647, %v1095
      %v1160 = vmul.f32 %v648, %v1096
      %v1161 = vmul.f32 %v649, %v1097
      %v1162 = vmul.f32 %v650, %v1098
      %v1163 = vmul.f32 %v651, %v1099
      %v1164 = vmul.f32 %v652, %v1100
      %v1165 = vmul.f32 %v653, %v1101
      %v1166 = vmul.f32 %v654, %v1102
      %v1167 = vmul.f32 %v655, %v1103
      %v1168 = vmul.f32 %v656, %v1104
      %v1169 = vmul.f32 %v657, %v1105
      %v1170 = vmul.f32 %v658, %v1106
      %v1171 = vmul.f32 %v659, %v1107
      %v1172 = vmul.f32 %v660, %v1108
      %v1173 = vmul.f32 %v661, %v1109
      %v1174 = vmul.f32 %v662, %v1110
      %v1175 = vmul.f32 %v663, %v1111
      %v1176 = vmul.f32 %v664, %v1112
      %v1177 = vmul.f32 %v665, %v1113
      %v1178 = vmul.f32 %v666, %v1114
      %v1179 = vmul.f32 %v667, %v1115
      %v1180 = vmul.f32 %v668, %v1116
      %v1181 = vmul.f32 %v669, %v1117
      %v1182 = vmul.f32 %v670, %v1118
      %v1183 = vmul.f32 %v671, %v1119
      %v1184 = vmul.f32 %v672, %v1120
      %v1185 = vld [vmem:[%s3] sm:$0xff]
      %v1186 = vld [vmem:[%s3 + $0x8] sm:$0xff]
      %v1187 = vld [vmem:[%s3 + $0x10] sm:$0xff]
      %v1188 = vld [vmem:[%s3 + $0x18] sm:$0xff]
      %v1189 = vld [vmem:[%s3 + $0x20] sm:$0xff]
      %v1190 = vld [vmem:[%s3 + $0x28] sm:$0xff]
      %v1191 = vld [vmem:[%s3 + $0x30] sm:$0xff]
      %v1192 = vld [vmem:[%s3 + $0x38] sm:$0xff]
      %v1193 = vld [vmem:[%s3 + $0x40] sm:$0xff]
      %v1194 = vld [vmem:[%s3 + $0x48] sm:$0xff]
      %v1195 = vld [vmem:[%s3 + $0x50] sm:$0xff]
      %v1196 = vld [vmem:[%s3 + $0x58] sm:$0xff]
      %v1197 = vld [vmem:[%s3 + $0x60] sm:$0xff]
      %v1198 = vld [vmem:[%s3 + $0x68] sm:$0xff]
      %v1199 = vld [vmem:[%s3 + $0x70] sm:$0xff]
      %v1200 = vld [vmem:[%s3 + $0x78] sm:$0xff]
      %v1201 = vld [vmem:[%s3 + $0x80] sm:$0xff]
      %v1202 = vld [vmem:[%s3 + $0x88] sm:$0xff]
      %v1203 = vld [vmem:[%s3 + $0x90] sm:$0xff]
      %v1204 = vld [vmem:[%s3 + $0x98] sm:$0xff]
      %v1205 = vld [vmem:[%s3 + $0xa0] sm:$0xff]
      %v1206 = vld [vmem:[%s3 + $0xa8] sm:$0xff]
      %v1207 = vld [vmem:[%s3 + $0xb0] sm:$0xff]
      %v1208 = vld [vmem:[%s3 + $0xb8] sm:$0xff]
      %v1209 = vld [vmem:[%s3 + $0xc0] sm:$0xff]
      %v1210 = vld [vmem:[%s3 + $0xc8] sm:$0xff]
      %v1211 = vld [vmem:[%s3 + $0xd0] sm:$0xff]
      %v1212 = vld [vmem:[%s3 + $0xd8] sm:$0xff]
      %v1213 = vld [vmem:[%s3 + $0xe0] sm:$0xff]
      %v1214 = vld [vmem:[%s3 + $0xe8] sm:$0xff]
      %v1215 = vld [vmem:[%s3 + $0xf0] sm:$0xff]
      %v1216 = vld [vmem:[%s3 + $0xf8] sm:$0xff]
      %v1217 = vld [vmem:[%s3 + $0x100] sm:$0xff]
      %v1218 = vld [vmem:[%s3 + $0x108] sm:$0xff]
      %v1219 = vld [vmem:[%s3 + $0x110] sm:$0xff]
      %v1220 = vld [vmem:[%s3 + $0x118] sm:$0xff]
      %s1221 = scalar_lea.vmem %s3, 288
      %v1222 = vld [vmem:[%s1221] sm:$0xff]
      %v1223 = vld [vmem:[%s1221 + $0x8] sm:$0xff]
      %v1224 = vld [vmem:[%s1221 + $0x10] sm:$0xff]
      %v1225 = vld [vmem:[%s1221 + $0x18] sm:$0xff]
      %v1226 = vld [vmem:[%s1221 + $0x20] sm:$0xff]
      %v1227 = vld [vmem:[%s1221 + $0x28] sm:$0xff]
      %v1228 = vld [vmem:[%s1221 + $0x30] sm:$0xff]
      %v1229 = vld [vmem:[%s1221 + $0x38] sm:$0xff]
      %v1230 = vld [vmem:[%s1221 + $0x40] sm:$0xff]
      %v1231 = vld [vmem:[%s1221 + $0x48] sm:$0xff]
      %v1232 = vld [vmem:[%s1221 + $0x50] sm:$0xff]
      %v1233 = vld [vmem:[%s1221 + $0x58] sm:$0xff]
      %v1234 = vld [vmem:[%s1221 + $0x60] sm:$0xff]
      %v1235 = vld [vmem:[%s1221 + $0x68] sm:$0xff]
      %v1236 = vld [vmem:[%s1221 + $0x70] sm:$0xff]
      %v1237 = vld [vmem:[%s1221 + $0x78] sm:$0xff]
      %v1238 = vld [vmem:[%s1221 + $0x80] sm:$0xff]
      %v1239 = vld [vmem:[%s1221 + $0x88] sm:$0xff]
      %v1240 = vld [vmem:[%s1221 + $0x90] sm:$0xff]
      %v1241 = vld [vmem:[%s1221 + $0x98] sm:$0xff]
      %v1242 = vld [vmem:[%s1221 + $0xa0] sm:$0xff]
      %v1243 = vld [vmem:[%s1221 + $0xa8] sm:$0xff]
      %v1244 = vld [vmem:[%s1221 + $0xb0] sm:$0xff]
      %v1245 = vld [vmem:[%s1221 + $0xb8] sm:$0xff]
      %v1246 = vld [vmem:[%s1221 + $0xc0] sm:$0xff]
      %v1247 = vld [vmem:[%s1221 + $0xc8] sm:$0xff]
      %v1248 = vld [vmem:[%s1221 + $0xd0] sm:$0xff]
      %v1249 = vld [vmem:[%s1221 + $0xd8] sm:$0xff]
      %v1250 = vld [vmem:[%s1221 + $0xe0] sm:$0xff]
      %v1251 = vld [vmem:[%s1221 + $0xe8] sm:$0xff]
      %v1252 = vld [vmem:[%s1221 + $0xf0] sm:$0xff]
      %v1253 = vld [vmem:[%s1221 + $0xf8] sm:$0xff]
      %v1254 = vld [vmem:[%s1221 + $0x100] sm:$0xff]
      %v1255 = vld [vmem:[%s1221 + $0x108] sm:$0xff]
      %v1256 = vld [vmem:[%s1221 + $0x110] sm:$0xff]
      %v1257 = vld [vmem:[%s1221 + $0x118] sm:$0xff]
      %v1258 = vld [vmem:[%s1] sm:$0xff]
      %v1259 = vld [vmem:[%s1 + $0x8] sm:$0xff]
      %v1260 = vld [vmem:[%s1 + $0x10] sm:$0xff]
      %v1261 = vld [vmem:[%s1 + $0x18] sm:$0xff]
      %v1262 = vld [vmem:[%s1 + $0x20] sm:$0xff]
      %v1263 = vld [vmem:[%s1 + $0x28] sm:$0xff]
      %v1264 = vld [vmem:[%s1 + $0x30] sm:$0xff]
      %v1265 = vld [vmem:[%s1 + $0x38] sm:$0xff]
      %v1266 = vld [vmem:[%s1 + $0x40] sm:$0xff]
      %v1267 = vld [vmem:[%s1 + $0x48] sm:$0xff]
      %v1268 = vld [vmem:[%s1 + $0x50] sm:$0xff]
      %v1269 = vld [vmem:[%s1 + $0x58] sm:$0xff]
      %v1270 = vld [vmem:[%s1 + $0x60] sm:$0xff]
      %v1271 = vld [vmem:[%s1 + $0x68] sm:$0xff]
      %v1272 = vld [vmem:[%s1 + $0x70] sm:$0xff]
      %v1273 = vld [vmem:[%s1 + $0x78] sm:$0xff]
      %v1274 = vld [vmem:[%s1 + $0x80] sm:$0xff]
      %v1275 = vld [vmem:[%s1 + $0x88] sm:$0xff]
      %v1276 = vld [vmem:[%s1 + $0x90] sm:$0xff]
      %v1277 = vld [vmem:[%s1 + $0x98] sm:$0xff]
      %v1278 = vld [vmem:[%s1 + $0xa0] sm:$0xff]
      %v1279 = vld [vmem:[%s1 + $0xa8] sm:$0xff]
      %v1280 = vld [vmem:[%s1 + $0xb0] sm:$0xff]
      %v1281 = vld [vmem:[%s1 + $0xb8] sm:$0xff]
      %v1282 = vld [vmem:[%s1 + $0xc0] sm:$0xff]
      %v1283 = vld [vmem:[%s1 + $0xc8] sm:$0xff]
      %v1284 = vld [vmem:[%s1 + $0xd0] sm:$0xff]
      %v1285 = vld [vmem:[%s1 + $0xd8] sm:$0xff]
      %v1286 = vld [vmem:[%s1 + $0xe0] sm:$0xff]
      %v1287 = vld [vmem:[%s1 + $0xe8] sm:$0xff]
      %v1288 = vld [vmem:[%s1 + $0xf0] sm:$0xff]
      %v1289 = vld [vmem:[%s1 + $0xf8] sm:$0xff]
      %v1290 = vld [vmem:[%s1 + $0x100] sm:$0xff]
      %v1291 = vld [vmem:[%s1 + $0x108] sm:$0xff]
      %v1292 = vld [vmem:[%s1 + $0x110] sm:$0xff]
      %v1293 = vld [vmem:[%s1 + $0x118] sm:$0xff]
      %v1294 = vld [vmem:[%s1 + $0x120] sm:$0xff]
      %v1295 = vld [vmem:[%s1 + $0x128] sm:$0xff]
      %v1296 = vld [vmem:[%s1 + $0x130] sm:$0xff]
      %v1297 = vld [vmem:[%s1 + $0x138] sm:$0xff]
      %v1298 = vld [vmem:[%s1 + $0x140] sm:$0xff]
      %v1299 = vld [vmem:[%s1 + $0x148] sm:$0xff]
      %v1300 = vld [vmem:[%s1 + $0x150] sm:$0xff]
      %v1301 = vld [vmem:[%s1 + $0x158] sm:$0xff]
      %v1302 = vld [vmem:[%s1 + $0x160] sm:$0xff]
      %v1303 = vld [vmem:[%s1 + $0x168] sm:$0xff]
      %v1304 = vld [vmem:[%s1 + $0x170] sm:$0xff]
      %v1305 = vld [vmem:[%s1 + $0x178] sm:$0xff]
      %v1306 = vld [vmem:[%s1 + $0x180] sm:$0xff]
      %v1307 = vld [vmem:[%s1 + $0x188] sm:$0xff]
      %v1308 = vld [vmem:[%s1 + $0x190] sm:$0xff]
      %v1309 = vld [vmem:[%s1 + $0x198] sm:$0xff]
      %v1310 = vld [vmem:[%s1 + $0x1a0] sm:$0xff]
      %v1311 = vld [vmem:[%s1 + $0x1a8] sm:$0xff]
      %v1312 = vld [vmem:[%s1 + $0x1b0] sm:$0xff]
      %v1313 = vld [vmem:[%s1 + $0x1b8] sm:$0xff]
      %v1314 = vld [vmem:[%s1 + $0x1c0] sm:$0xff]
      %v1315 = vld [vmem:[%s1 + $0x1c8] sm:$0xff]
      %v1316 = vld [vmem:[%s1 + $0x1d0] sm:$0xff]
      %v1317 = vld [vmem:[%s1 + $0x1d8] sm:$0xff]
      %v1318 = vld [vmem:[%s1 + $0x1e0] sm:$0xff]
      %v1319 = vld [vmem:[%s1 + $0x1e8] sm:$0xff]
      %v1320 = vld [vmem:[%s1 + $0x1f0] sm:$0xff]
      %v1321 = vld [vmem:[%s1 + $0x1f8] sm:$0xff]
      %v1322 = vld [vmem:[%s1 + $0x200] sm:$0xff]
      %v1323 = vld [vmem:[%s1 + $0x208] sm:$0xff]
      %v1324 = vld [vmem:[%s1 + $0x210] sm:$0xff]
      %v1325 = vld [vmem:[%s1 + $0x218] sm:$0xff]
      %v1326 = vld [vmem:[%s1 + $0x220] sm:$0xff]
      %v1327 = vld [vmem:[%s1 + $0x228] sm:$0xff]
      %v1328 = vld [vmem:[%s1 + $0x230] sm:$0xff]
      %v1329 = vld [vmem:[%s1 + $0x238] sm:$0xff]
      %1330 = vmatprep.subr.mxu0 0.0
      %1331 = vmatpush1.msra.mxu0 %v1121
      %1332 = vmatprep.subr.mxu0 0.0
      %1333 = vmatpush1.msra.mxu0 %v1122
      %1334 = vmatprep.subr.mxu0 0.0
      %1335 = vmatpush1.msra.mxu0 %v1123
      %1336 = vmatprep.subr.mxu0 0.0
      %1337 = vmatpush1.msra.mxu0 %v1124
      %1338 = vmatprep.subr.mxu0 0.0
      %1339 = vmatpush1.msra.mxu0 %v1125
      %1340 = vmatprep.subr.mxu0 0.0
      %1341 = vmatpush1.msra.mxu0 %v1126
      %1342 = vmatprep.subr.mxu0 0.0
      %1343 = vmatpush1.msra.mxu0 %v1127
      %1344 = vmatprep.subr.mxu0 0.0
      %1345 = vmatpush1.msra.mxu0 %v1128
      %1346 = vmatprep.subr.mxu0 0.0
      %1347 = vmatpush1.msra.mxu0 %v1129
      %1348 = vmatprep.subr.mxu0 0.0
      %1349 = vmatpush1.msra.mxu0 %v1130
      %1350 = vmatprep.subr.mxu0 0.0
      %1351 = vmatpush1.msra.mxu0 %v1131
      %1352 = vmatprep.subr.mxu0 0.0
      %1353 = vmatpush1.msra.mxu0 %v1132
      %1354 = vmatprep.subr.mxu0 0.0
      %1355 = vmatpush1.msra.mxu0 %v1133
      %1356 = vmatprep.subr.mxu0 0.0
      %1357 = vmatpush1.msra.mxu0 %v1134
      %1358 = vmatprep.subr.mxu0 0.0
      %1359 = vmatpush1.msra.mxu0 %v1135
      %1360 = vmatprep.subr.mxu0 0.0
      %1361 = vmatpush1.msra.mxu0 %v1136
      %1362 = vmatprep.subr.mxu0 0.0
      %1363 = vmatpush1.msra.mxu0 %v1137
      %1364 = vmatprep.subr.mxu0 0.0
      %1365 = vmatpush1.msra.mxu0 %v1138
      %1366 = vmatprep.subr.mxu0 0.0
      %1367 = vmatpush1.msra.mxu0 %v1139
      %1368 = vmatprep.subr.mxu0 0.0
      %1369 = vmatpush1.msra.mxu0 %v1140
      %1370 = vmatprep.subr.mxu0 0.0
      %1371 = vmatpush1.msra.mxu0 %v1141
      %1372 = vmatprep.subr.mxu0 0.0
      %1373 = vmatpush1.msra.mxu0 %v1142
      %1374 = vmatprep.subr.mxu0 0.0
      %1375 = vmatpush1.msra.mxu0 %v1143
      %1376 = vmatprep.subr.mxu0 0.0
      %1377 = vmatpush1.msra.mxu0 %v1144
      %1378 = vmatprep.subr.mxu0 0.0
      %1379 = vmatpush1.msra.mxu0 %v1145
      %1380 = vmatprep.subr.mxu0 0.0
      %1381 = vmatpush1.msra.mxu0 %v1146
      %1382 = vmatprep.subr.mxu0 0.0
      %1383 = vmatpush1.msra.mxu0 %v1147
      %1384 = vmatprep.subr.mxu0 0.0
      %1385 = vmatpush1.msra.mxu0 %v1148
      %1386 = vmatprep.subr.mxu0 0.0
      %1387 = vmatpush1.msra.mxu0 %v1149
      %1388 = vmatprep.subr.mxu0 0.0
      %1389 = vmatpush1.msra.mxu0 %v1150
      %1390 = vmatprep.subr.mxu0 0.0
      %1391 = vmatpush1.msra.mxu0 %v1151
      %1392 = vmatprep.subr.mxu0 0.0
      %1393 = vmatpush1.msra.mxu0 %v1152
      %1394 = vmatprep.mubr.f32.mxu0 %v1259
      %1395 = vmatmul.mubr.f32.gmra.mrb[0].mxu0 %v1258
      %v1396 = vpop.f32.mrb[0].mxu0
      %v1397 = vadd.f32 0.0, %v1396
      %v1398 = vpop.f32.mrb[0].mxu0
      %1399 = vmatprep.mubr.f32.mxu0 %v1261
      %1400 = vmatmul.mubr.f32.gmra.mrb[0].mxu0 %v1260
      %v1401 = vpop.f32.mrb[0].mxu0
      %v1402 = vadd.f32 0.0, %v1401
      %v1403 = vpop.f32.mrb[0].mxu0
      %1404 = vmatprep.mubr.f32.mxu0 %v1263
      %1405 = vmatmul.mubr.f32.gmra.mrb[0].mxu0 %v1262
      %v1406 = vpop.f32.mrb[0].mxu0
      %v1407 = vadd.f32 0.0, %v1406
      %v1408 = vpop.f32.mrb[0].mxu0
      %1409 = vmatprep.mubr.f32.mxu0 %v1265
      %1410 = vmatmul.mubr.f32.gmra.mrb[0].mxu0 %v1264
      %v1411 = vpop.f32.mrb[0].mxu0
      %v1412 = vadd.f32 0.0, %v1411
      %v1413 = vpop.f32.mrb[0].mxu0
      %1414 = vmatprep.mubr.f32.mxu0 %v1267
      %1415 = vmatmul.mubr.f32.gmra.mrb[0].mxu0 %v1266
      %v1416 = vpop.f32.mrb[0].mxu0
      %v1417 = vadd.f32 0.0, %v1416
      %v1418 = vpop.f32.mrb[0].mxu0
      %1419 = vmatprep.mubr.f32.mxu0 %v1269
      %1420 = vmatmul.mubr.f32.gmra.mrb[0].mxu0 %v1268
      %v1421 = vpop.f32.mrb[0].mxu0
      %v1422 = vadd.f32 0.0, %v1421
      %v1423 = vpop.f32.mrb[0].mxu0
      %1424 = vmatprep.mubr.f32.mxu0 %v1271
      %1425 = vmatmul.mubr.f32.gmra.mrb[0].mxu0 %v1270
      %v1426 = vpop.f32.mrb[0].mxu0
      %v1427 = vadd.f32 0.0, %v1426
      %v1428 = vpop.f32.mrb[0].mxu0
      %1429 = vmatprep.mubr.f32.mxu0 %v1273
      %1430 = vmatmul.mubr.f32.gmra.mrb[0].mxu0 %v1272
      %v1431 = vpop.f32.mrb[0].mxu0
      %v1432 = vadd.f32 0.0, %v1431
      %v1433 = vpop.f32.mrb[0].mxu0
      %1434 = vmatprep.mubr.f32.mxu0 %v1275
      %1435 = vmatmul.mubr.f32.gmra.mrb[0].mxu0 %v1274
      %v1436 = vpop.f32.mrb[0].mxu0
      %v1437 = vadd.f32 0.0, %v1436
      %v1438 = vpop.f32.mrb[0].mxu0
      %1439 = vmatprep.mubr.f32.mxu0 %v1277
      %1440 = vmatmul.mubr.f32.gmra.mrb[0].mxu0 %v1276
      %v1441 = vpop.f32.mrb[0].mxu0
      %v1442 = vadd.f32 0.0, %v1441
      %v1443 = vpop.f32.mrb[0].mxu0
      %1444 = vmatprep.mubr.f32.mxu0 %v1279
      %1445 = vmatmul.mubr.f32.gmra.mrb[0].mxu0 %v1278
      %v1446 = vpop.f32.mrb[0].mxu0
      %v1447 = vadd.f32 0.0, %v1446
      %v1448 = vpop.f32.mrb[0].mxu0
      %1449 = vmatprep.mubr.f32.mxu0 %v1281
      %1450 = vmatmul.mubr.f32.gmra.mrb[0].mxu0 %v1280
      %v1451 = vpop.f32.mrb[0].mxu0
      %v1452 = vadd.f32 0.0, %v1451
      %v1453 = vpop.f32.mrb[0].mxu0
      %1454 = vmatprep.mubr.f32.mxu0 %v1283
      %1455 = vmatmul.mubr.f32.gmra.mrb[0].mxu0 %v1282
      %v1456 = vpop.f32.mrb[0].mxu0
      %v1457 = vadd.f32 0.0, %v1456
      %v1458 = vpop.f32.mrb[0].mxu0
      %1459 = vmatprep.mubr.f32.mxu0 %v1285
      %1460 = vmatmul.mubr.f32.gmra.mrb[0].mxu0 %v1284
      %v1461 = vpop.f32.mrb[0].mxu0
      %v1462 = vadd.f32 0.0, %v1461
      %v1463 = vpop.f32.mrb[0].mxu0
      %1464 = vmatprep.mubr.f32.mxu0 %v1287
      %1465 = vmatmul.mubr.f32.gmra.mrb[0].mxu0 %v1286
      %v1466 = vpop.f32.mrb[0].mxu0
      %v1467 = vadd.f32 0.0, %v1466
      %v1468 = vpop.f32.mrb[0].mxu0
      %1469 = vmatprep.mubr.f32.mxu0 %v1289
      %1470 = vmatmul.mubr.f32.gmra.mrb[0].mxu0 %v1288
      %v1471 = vpop.f32.mrb[0].mxu0
      %v1472 = vadd.f32 0.0, %v1471
      %v1473 = vpop.f32.mrb[0].mxu0
      %1474 = vmatprep.mubr.f32.mxu0 %v1291
      %1475 = vmatmul.mubr.f32.gmra.mrb[0].mxu0 %v1290
      %v1476 = vpop.f32.mrb[0].mxu0
      %v1477 = vadd.f32 0.0, %v1476
      %v1478 = vpop.f32.mrb[0].mxu0
      %1479 = vmatprep.mubr.f32.mxu0 %v1293
      %1480 = vmatmul.mubr.f32.gmra.mrb[0].mxu0 %v1292
      %v1481 = vpop.f32.mrb[0].mxu0
      %v1482 = vadd.f32 0.0, %v1481
      %v1483 = vpop.f32.mrb[0].mxu0
      %1484 = vmatprep.mubr.f32.mxu0 %v1295
      %1485 = vmatmul.mubr.f32.gmra.mrb[0].mxu0 %v1294
      %v1486 = vpop.f32.mrb[0].mxu0
      %v1487 = vadd.f32 0.0, %v1486
      %v1488 = vpop.f32.mrb[0].mxu0
      %1489 = vmatprep.mubr.f32.mxu0 %v1297
      %1490 = vmatmul.mubr.f32.gmra.mrb[0].mxu0 %v1296
      %v1491 = vpop.f32.mrb[0].mxu0
      %v1492 = vadd.f32 0.0, %v1491
      %v1493 = vpop.f32.mrb[0].mxu0
      %1494 = vmatprep.mubr.f32.mxu0 %v1299
      %1495 = vmatmul.mubr.f32.gmra.mrb[0].mxu0 %v1298
      %v1496 = vpop.f32.mrb[0].mxu0
      %v1497 = vadd.f32 0.0, %v1496
      %v1498 = vpop.f32.mrb[0].mxu0
      %1499 = vmatprep.mubr.f32.mxu0 %v1301
      %1500 = vmatmul.mubr.f32.gmra.mrb[0].mxu0 %v1300
      %v1501 = vpop.f32.mrb[0].mxu0
      %v1502 = vadd.f32 0.0, %v1501
      %v1503 = vpop.f32.mrb[0].mxu0
      %1504 = vmatprep.mubr.f32.mxu0 %v1303
      %1505 = vmatmul.mubr.f32.gmra.mrb[0].mxu0 %v1302
      %v1506 = vpop.f32.mrb[0].mxu0
      %v1507 = vadd.f32 0.0, %v1506
      %v1508 = vpop.f32.mrb[0].mxu0
      %1509 = vmatprep.mubr.f32.mxu0 %v1305
      %1510 = vmatmul.mubr.f32.gmra.mrb[0].mxu0 %v1304
      %v1511 = vpop.f32.mrb[0].mxu0
      %v1512 = vadd.f32 0.0, %v1511
      %v1513 = vpop.f32.mrb[0].mxu0
      %1514 = vmatprep.mubr.f32.mxu0 %v1307
      %1515 = vmatmul.mubr.f32.gmra.mrb[0].mxu0 %v1306
      %v1516 = vpop.f32.mrb[0].mxu0
      %v1517 = vadd.f32 0.0, %v1516
      %v1518 = vpop.f32.mrb[0].mxu0
      %1519 = vmatprep.mubr.f32.mxu0 %v1309
      %1520 = vmatmul.mubr.f32.gmra.mrb[0].mxu0 %v1308
      %v1521 = vpop.f32.mrb[0].mxu0
      %v1522 = vadd.f32 0.0, %v1521
      %v1523 = vpop.f32.mrb[0].mxu0
      %1524 = vmatprep.mubr.f32.mxu0 %v1311
      %1525 = vmatmul.mubr.f32.gmra.mrb[0].mxu0 %v1310
      %v1526 = vpop.f32.mrb[0].mxu0
      %v1527 = vadd.f32 0.0, %v1526
      %v1528 = vpop.f32.mrb[0].mxu0
      %1529 = vmatprep.mubr.f32.mxu0 %v1313
      %1530 = vmatmul.mubr.f32.gmra.mrb[0].mxu0 %v1312
      %v1531 = vpop.f32.mrb[0].mxu0
      %v1532 = vadd.f32 0.0, %v1531
      %v1533 = vpop.f32.mrb[0].mxu0
      %1534 = vmatprep.mubr.f32.mxu0 %v1315
      %1535 = vmatmul.mubr.f32.gmra.mrb[0].mxu0 %v1314
      %v1536 = vpop.f32.mrb[0].mxu0
      %v1537 = vadd.f32 0.0, %v1536
      %v1538 = vpop.f32.mrb[0].mxu0
      %1539 = vmatprep.mubr.f32.mxu0 %v1317
      %1540 = vmatmul.mubr.f32.gmra.mrb[0].mxu0 %v1316
      %v1541 = vpop.f32.mrb[0].mxu0
      %v1542 = vadd.f32 0.0, %v1541
      %v1543 = vpop.f32.mrb[0].mxu0
      %1544 = vmatprep.mubr.f32.mxu0 %v1319
      %1545 = vmatmul.mubr.f32.gmra.mrb[0].mxu0 %v1318
      %v1546 = vpop.f32.mrb[0].mxu0
      %v1547 = vadd.f32 0.0, %v1546
      %v1548 = vpop.f32.mrb[0].mxu0
      %1549 = vmatprep.mubr.f32.mxu0 %v1321
      %1550 = vmatmul.mubr.f32.gmra.mrb[0].mxu0 %v1320
      %v1551 = vpop.f32.mrb[0].mxu0
      %v1552 = vadd.f32 0.0, %v1551
      %v1553 = vpop.f32.mrb[0].mxu0
      %1554 = vmatprep.mubr.f32.mxu0 %v1323
      %1555 = vmatmul.mubr.f32.gmra.mrb[0].mxu0 %v1322
      %v1556 = vpop.f32.mrb[0].mxu0
      %v1557 = vadd.f32 0.0, %v1556
      %v1558 = vpop.f32.mrb[0].mxu0
      %1559 = vmatprep.mubr.f32.mxu0 %v1325
      %1560 = vmatmul.mubr.f32.gmra.mrb[0].mxu0 %v1324
      %v1561 = vpop.f32.mrb[0].mxu0
      %v1562 = vadd.f32 0.0, %v1561
      %v1563 = vpop.f32.mrb[0].mxu0
      %1564 = vmatprep.mubr.f32.mxu0 %v1327
      %1565 = vmatmul.mubr.f32.gmra.mrb[0].mxu0 %v1326
      %v1566 = vpop.f32.mrb[0].mxu0
      %v1567 = vadd.f32 0.0, %v1566
      %v1568 = vpop.f32.mrb[0].mxu0
      %1569 = vmatprep.mubr.f32.mxu0 %v1329
      %1570 = vmatmul.mubr.f32.gmra.mrb[0].mxu0 %v1328
      %v1571 = vpop.f32.mrb[0].mxu0
      %v1572 = vadd.f32 0.0, %v1571
      %v1573 = vpop.f32.mrb[0].mxu0
      %1574 = vdwg.mxu0
      %v1575 = vmul.f32 %v1397, %v1185
      %v1576 = vmul.f32 %v1402, %v1186
      %v1577 = vmul.f32 %v1407, %v1187
      %v1578 = vmul.f32 %v1412, %v1188
      %v1579 = vmul.f32 %v1417, %v1189
      %v1580 = vmul.f32 %v1422, %v1190
      %v1581 = vmul.f32 %v1427, %v1191
      %v1582 = vmul.f32 %v1432, %v1192
      %v1583 = vmul.f32 %v1437, %v1193
      %v1584 = vmul.f32 %v1442, %v1194
      %v1585 = vmul.f32 %v1447, %v1195
      %v1586 = vmul.f32 %v1452, %v1196
      %v1587 = vmul.f32 %v1457, %v1197
      %v1588 = vmul.f32 %v1462, %v1198
      %v1589 = vmul.f32 %v1467, %v1199
      %v1590 = vmul.f32 %v1472, %v1200
      %v1591 = vmul.f32 %v1477, %v1201
      %v1592 = vmul.f32 %v1482, %v1202
      %v1593 = vmul.f32 %v1487, %v1203
      %v1594 = vmul.f32 %v1492, %v1204
      %v1595 = vmul.f32 %v1497, %v1205
      %v1596 = vmul.f32 %v1502, %v1206
      %v1597 = vmul.f32 %v1507, %v1207
      %v1598 = vmul.f32 %v1512, %v1208
      %v1599 = vmul.f32 %v1517, %v1209
      %v1600 = vmul.f32 %v1522, %v1210
      %v1601 = vmul.f32 %v1527, %v1211
      %v1602 = vmul.f32 %v1532, %v1212
      %v1603 = vmul.f32 %v1537, %v1213
      %v1604 = vmul.f32 %v1542, %v1214
      %v1605 = vmul.f32 %v1547, %v1215
      %v1606 = vmul.f32 %v1552, %v1216
      %v1607 = vmul.f32 %v1557, %v1217
      %v1608 = vmul.f32 %v1562, %v1218
      %v1609 = vmul.f32 %v1567, %v1219
      %v1610 = vmul.f32 %v1572, %v1220
      %v1611 = vmul.f32 %v1487, %v1222
      %v1612 = vmul.f32 %v1492, %v1223
      %v1613 = vmul.f32 %v1497, %v1224
      %v1614 = vmul.f32 %v1502, %v1225
      %v1615 = vmul.f32 %v1507, %v1226
      %v1616 = vmul.f32 %v1512, %v1227
      %v1617 = vmul.f32 %v1517, %v1228
      %v1618 = vmul.f32 %v1522, %v1229
      %v1619 = vmul.f32 %v1527, %v1230
      %v1620 = vmul.f32 %v1532, %v1231
      %v1621 = vmul.f32 %v1537, %v1232
      %v1622 = vmul.f32 %v1542, %v1233
      %v1623 = vmul.f32 %v1547, %v1234
      %v1624 = vmul.f32 %v1552, %v1235
      %v1625 = vmul.f32 %v1557, %v1236
      %v1626 = vmul.f32 %v1562, %v1237
      %v1627 = vmul.f32 %v1567, %v1238
      %v1628 = vmul.f32 %v1572, %v1239
      %v1629 = vmul.f32 %v1397, %v1240
      %v1630 = vmul.f32 %v1402, %v1241
      %v1631 = vmul.f32 %v1407, %v1242
      %v1632 = vmul.f32 %v1412, %v1243
      %v1633 = vmul.f32 %v1417, %v1244
      %v1634 = vmul.f32 %v1422, %v1245
      %v1635 = vmul.f32 %v1427, %v1246
      %v1636 = vmul.f32 %v1432, %v1247
      %v1637 = vmul.f32 %v1437, %v1248
      %v1638 = vmul.f32 %v1442, %v1249
      %v1639 = vmul.f32 %v1447, %v1250
      %v1640 = vmul.f32 %v1452, %v1251
      %v1641 = vmul.f32 %v1457, %v1252
      %v1642 = vmul.f32 %v1462, %v1253
      %v1643 = vmul.f32 %v1467, %v1254
      %v1644 = vmul.f32 %v1472, %v1255
      %v1645 = vmul.f32 %v1477, %v1256
      %v1646 = vmul.f32 %v1482, %v1257
      %v1647 = vadd.f32 %v1575, %v1611
      %v1648 = vadd.f32 %v1576, %v1612
      %v1649 = vadd.f32 %v1577, %v1613
      %v1650 = vadd.f32 %v1578, %v1614
      %v1651 = vadd.f32 %v1579, %v1615
      %v1652 = vadd.f32 %v1580, %v1616
      %v1653 = vadd.f32 %v1581, %v1617
      %v1654 = vadd.f32 %v1582, %v1618
      %v1655 = vadd.f32 %v1583, %v1619
      %v1656 = vadd.f32 %v1584, %v1620
      %v1657 = vadd.f32 %v1585, %v1621
      %v1658 = vadd.f32 %v1586, %v1622
      %v1659 = vadd.f32 %v1587, %v1623
      %v1660 = vadd.f32 %v1588, %v1624
      %v1661 = vadd.f32 %v1589, %v1625
      %v1662 = vadd.f32 %v1590, %v1626
      %v1663 = vadd.f32 %v1591, %v1627
      %v1664 = vadd.f32 %v1592, %v1628
      %v1665 = vadd.f32 %v1593, %v1629
      %v1666 = vadd.f32 %v1594, %v1630
      %v1667 = vadd.f32 %v1595, %v1631
      %v1668 = vadd.f32 %v1596, %v1632
      %v1669 = vadd.f32 %v1597, %v1633
      %v1670 = vadd.f32 %v1598, %v1634
      %v1671 = vadd.f32 %v1599, %v1635
      %v1672 = vadd.f32 %v1600, %v1636
      %v1673 = vadd.f32 %v1601, %v1637
      %v1674 = vadd.f32 %v1602, %v1638
      %v1675 = vadd.f32 %v1603, %v1639
      %v1676 = vadd.f32 %v1604, %v1640
      %v1677 = vadd.f32 %v1605, %v1641
      %v1678 = vadd.f32 %v1606, %v1642
      %v1679 = vadd.f32 %v1607, %v1643
      %v1680 = vadd.f32 %v1608, %v1644
      %v1681 = vadd.f32 %v1609, %v1645
      %v1682 = vadd.f32 %v1610, %v1646
      %v1683 = vld [vmem:[%s2] sm:$0xff]
      %v1684 = vld [vmem:[%s2 + $0x8] sm:$0xff]
      %v1685 = vld [vmem:[%s2 + $0x10] sm:$0xff]
      %v1686 = vld [vmem:[%s2 + $0x18] sm:$0xff]
      %v1687 = vld [vmem:[%s2 + $0x20] sm:$0xff]
      %v1688 = vld [vmem:[%s2 + $0x28] sm:$0xff]
      %v1689 = vld [vmem:[%s2 + $0x30] sm:$0xff]
      %v1690 = vld [vmem:[%s2 + $0x38] sm:$0xff]
      %v1691 = vld [vmem:[%s2 + $0x40] sm:$0xff]
      %v1692 = vld [vmem:[%s2 + $0x48] sm:$0xff]
      %v1693 = vld [vmem:[%s2 + $0x50] sm:$0xff]
      %v1694 = vld [vmem:[%s2 + $0x58] sm:$0xff]
      %v1695 = vld [vmem:[%s2 + $0x60] sm:$0xff]
      %v1696 = vld [vmem:[%s2 + $0x68] sm:$0xff]
      %v1697 = vld [vmem:[%s2 + $0x70] sm:$0xff]
      %v1698 = vld [vmem:[%s2 + $0x78] sm:$0xff]
      %v1699 = vld [vmem:[%s2 + $0x80] sm:$0xff]
      %v1700 = vld [vmem:[%s2 + $0x88] sm:$0xff]
      %v1701 = vld [vmem:[%s2 + $0x90] sm:$0xff]
      %v1702 = vld [vmem:[%s2 + $0x98] sm:$0xff]
      %v1703 = vld [vmem:[%s2 + $0xa0] sm:$0xff]
      %v1704 = vld [vmem:[%s2 + $0xa8] sm:$0xff]
      %v1705 = vld [vmem:[%s2 + $0xb0] sm:$0xff]
      %v1706 = vld [vmem:[%s2 + $0xb8] sm:$0xff]
      %v1707 = vld [vmem:[%s2 + $0xc0] sm:$0xff]
      %v1708 = vld [vmem:[%s2 + $0xc8] sm:$0xff]
      %v1709 = vld [vmem:[%s2 + $0xd0] sm:$0xff]
      %v1710 = vld [vmem:[%s2 + $0xd8] sm:$0xff]
      %v1711 = vld [vmem:[%s2 + $0xe0] sm:$0xff]
      %v1712 = vld [vmem:[%s2 + $0xe8] sm:$0xff]
      %v1713 = vld [vmem:[%s2 + $0xf0] sm:$0xff]
      %v1714 = vld [vmem:[%s2 + $0xf8] sm:$0xff]
      %v1715 = vld [vmem:[%s2 + $0x100] sm:$0xff]
      %v1716 = vld [vmem:[%s2 + $0x108] sm:$0xff]
      %v1717 = vld [vmem:[%s2 + $0x110] sm:$0xff]
      %v1718 = vld [vmem:[%s2 + $0x118] sm:$0xff]
      %v1719 = vld [vmem:[%s2 + $0x120] sm:$0xff]
      %v1720 = vld [vmem:[%s2 + $0x128] sm:$0xff]
      %v1721 = vld [vmem:[%s2 + $0x130] sm:$0xff]
      %v1722 = vld [vmem:[%s2 + $0x138] sm:$0xff]
      %v1723 = vld [vmem:[%s2 + $0x140] sm:$0xff]
      %v1724 = vld [vmem:[%s2 + $0x148] sm:$0xff]
      %v1725 = vld [vmem:[%s2 + $0x150] sm:$0xff]
      %v1726 = vld [vmem:[%s2 + $0x158] sm:$0xff]
      %v1727 = vld [vmem:[%s2 + $0x160] sm:$0xff]
      %v1728 = vld [vmem:[%s2 + $0x168] sm:$0xff]
      %v1729 = vld [vmem:[%s2 + $0x170] sm:$0xff]
      %v1730 = vld [vmem:[%s2 + $0x178] sm:$0xff]
      %v1731 = vld [vmem:[%s2 + $0x180] sm:$0xff]
      %v1732 = vld [vmem:[%s2 + $0x188] sm:$0xff]
      %v1733 = vld [vmem:[%s2 + $0x190] sm:$0xff]
      %v1734 = vld [vmem:[%s2 + $0x198] sm:$0xff]
      %v1735 = vld [vmem:[%s2 + $0x1a0] sm:$0xff]
      %v1736 = vld [vmem:[%s2 + $0x1a8] sm:$0xff]
      %v1737 = vld [vmem:[%s2 + $0x1b0] sm:$0xff]
      %v1738 = vld [vmem:[%s2 + $0x1b8] sm:$0xff]
      %v1739 = vld [vmem:[%s2 + $0x1c0] sm:$0xff]
      %v1740 = vld [vmem:[%s2 + $0x1c8] sm:$0xff]
      %v1741 = vld [vmem:[%s2 + $0x1d0] sm:$0xff]
      %v1742 = vld [vmem:[%s2 + $0x1d8] sm:$0xff]
      %v1743 = vld [vmem:[%s2 + $0x1e0] sm:$0xff]
      %v1744 = vld [vmem:[%s2 + $0x1e8] sm:$0xff]
      %v1745 = vld [vmem:[%s2 + $0x1f0] sm:$0xff]
      %v1746 = vld [vmem:[%s2 + $0x1f8] sm:$0xff]
      %v1747 = vld [vmem:[%s2 + $0x200] sm:$0xff]
      %v1748 = vld [vmem:[%s2 + $0x208] sm:$0xff]
      %v1749 = vld [vmem:[%s2 + $0x210] sm:$0xff]
      %v1750 = vld [vmem:[%s2 + $0x218] sm:$0xff]
      %v1751 = vld [vmem:[%s2 + $0x220] sm:$0xff]
      %v1752 = vld [vmem:[%s2 + $0x228] sm:$0xff]
      %v1753 = vld [vmem:[%s2 + $0x230] sm:$0xff]
      %v1754 = vld [vmem:[%s2 + $0x238] sm:$0xff]
      %v1755 = vld [vmem:[%s2 + $0x240] sm:$0xff]
      %v1756 = vld [vmem:[%s2 + $0x248] sm:$0xff]
      %v1757 = vld [vmem:[%s2 + $0x250] sm:$0xff]
      %v1758 = vld [vmem:[%s2 + $0x258] sm:$0xff]
      %v1759 = vld [vmem:[%s2 + $0x260] sm:$0xff]
      %v1760 = vld [vmem:[%s2 + $0x268] sm:$0xff]
      %v1761 = vld [vmem:[%s2 + $0x270] sm:$0xff]
      %v1762 = vld [vmem:[%s2 + $0x278] sm:$0xff]
      %v1763 = vld [vmem:[%s2 + $0x280] sm:$0xff]
      %v1764 = vld [vmem:[%s2 + $0x288] sm:$0xff]
      %v1765 = vld [vmem:[%s2 + $0x290] sm:$0xff]
      %v1766 = vld [vmem:[%s2 + $0x298] sm:$0xff]
      %v1767 = vld [vmem:[%s2 + $0x2a0] sm:$0xff]
      %v1768 = vld [vmem:[%s2 + $0x2a8] sm:$0xff]
      %v1769 = vld [vmem:[%s2 + $0x2b0] sm:$0xff]
      %v1770 = vld [vmem:[%s2 + $0x2b8] sm:$0xff]
      %v1771 = vld [vmem:[%s2 + $0x2c0] sm:$0xff]
      %v1772 = vld [vmem:[%s2 + $0x2c8] sm:$0xff]
      %v1773 = vld [vmem:[%s2 + $0x2d0] sm:$0xff]
      %v1774 = vld [vmem:[%s2 + $0x2d8] sm:$0xff]
      %v1775 = vld [vmem:[%s2 + $0x2e0] sm:$0xff]
      %v1776 = vld [vmem:[%s2 + $0x2e8] sm:$0xff]
      %v1777 = vld [vmem:[%s2 + $0x2f0] sm:$0xff]
      %v1778 = vld [vmem:[%s2 + $0x2f8] sm:$0xff]
      %vm1779 = vcmask 261120
      %v1781 = vsel %vm1779, %v1685, 0
      %v1784 = vsel %vm1779, %v1688, 0
      %v1787 = vsel %vm1779, %v1691, 0
      %v1790 = vsel %vm1779, %v1694, 0
      %v1793 = vsel %vm1779, %v1697, 0
      %v1796 = vsel %vm1779, %v1700, 0
      %v1799 = vsel %vm1779, %v1703, 0
      %v1802 = vsel %vm1779, %v1706, 0
      %v1805 = vsel %vm1779, %v1709, 0
      %v1808 = vsel %vm1779, %v1712, 0
      %v1811 = vsel %vm1779, %v1715, 0
      %v1814 = vsel %vm1779, %v1718, 0
      %v1817 = vsel %vm1779, %v1721, 0
      %v1820 = vsel %vm1779, %v1724, 0
      %v1823 = vsel %vm1779, %v1727, 0
      %v1826 = vsel %vm1779, %v1730, 0
      %v1829 = vsel %vm1779, %v1733, 0
      %v1832 = vsel %vm1779, %v1736, 0
      %v1835 = vsel %vm1779, %v1739, 0
      %v1838 = vsel %vm1779, %v1742, 0
      %v1841 = vsel %vm1779, %v1745, 0
      %v1844 = vsel %vm1779, %v1748, 0
      %v1847 = vsel %vm1779, %v1751, 0
      %v1850 = vsel %vm1779, %v1754, 0
      %v1853 = vsel %vm1779, %v1757, 0
      %v1856 = vsel %vm1779, %v1760, 0
      %v1859 = vsel %vm1779, %v1763, 0
      %v1862 = vsel %vm1779, %v1766, 0
      %v1865 = vsel %vm1779, %v1769, 0
      %v1868 = vsel %vm1779, %v1772, 0
      %v1871 = vsel %vm1779, %v1775, 0
      %v1874 = vsel %vm1779, %v1778, 0
      %1876 = vmatprep.subr.mxu0 0.0
      %1877 = vmatpush1.msra.mxu0 %v1647
      %1878 = vmatprep.subr.mxu0 0.0
      %1879 = vmatpush1.msra.mxu0 %v1648
      %1880 = vmatprep.subr.mxu0 0.0
      %1881 = vmatpush1.msra.mxu0 %v1649
      %1882 = vmatprep.subr.mxu0 0.0
      %1883 = vmatpush1.msra.mxu0 %v1650
      %1884 = vmatprep.subr.mxu0 0.0
      %1885 = vmatpush1.msra.mxu0 %v1651
      %1886 = vmatprep.subr.mxu0 0.0
      %1887 = vmatpush1.msra.mxu0 %v1652
      %1888 = vmatprep.subr.mxu0 0.0
      %1889 = vmatpush1.msra.mxu0 %v1653
      %1890 = vmatprep.subr.mxu0 0.0
      %1891 = vmatpush1.msra.mxu0 %v1654
      %1892 = vmatprep.subr.mxu0 0.0
      %1893 = vmatpush1.msra.mxu0 %v1655
      %1894 = vmatprep.subr.mxu0 0.0
      %1895 = vmatpush1.msra.mxu0 %v1656
      %1896 = vmatprep.subr.mxu0 0.0
      %1897 = vmatpush1.msra.mxu0 %v1657
      %1898 = vmatprep.subr.mxu0 0.0
      %1899 = vmatpush1.msra.mxu0 %v1658
      %1900 = vmatprep.subr.mxu0 0.0
      %1901 = vmatpush1.msra.mxu0 %v1659
      %1902 = vmatprep.subr.mxu0 0.0
      %1903 = vmatpush1.msra.mxu0 %v1660
      %1904 = vmatprep.subr.mxu0 0.0
      %1905 = vmatpush1.msra.mxu0 %v1661
      %1906 = vmatprep.subr.mxu0 0.0
      %1907 = vmatpush1.msra.mxu0 %v1662
      %1908 = vmatprep.subr.mxu0 0.0
      %1909 = vmatpush1.msra.mxu0 %v1663
      %1910 = vmatprep.subr.mxu0 0.0
      %1911 = vmatpush1.msra.mxu0 %v1664
      %1912 = vmatprep.subr.mxu0 0.0
      %1913 = vmatpush1.msra.mxu0 %v1665
      %1914 = vmatprep.subr.mxu0 0.0
      %1915 = vmatpush1.msra.mxu0 %v1666
      %1916 = vmatprep.subr.mxu0 0.0
      %1917 = vmatpush1.msra.mxu0 %v1667
      %1918 = vmatprep.subr.mxu0 0.0
      %1919 = vmatpush1.msra.mxu0 %v1668
      %1920 = vmatprep.subr.mxu0 0.0
      %1921 = vmatpush1.msra.mxu0 %v1669
      %1922 = vmatprep.subr.mxu0 0.0
      %1923 = vmatpush1.msra.mxu0 %v1670
      %1924 = vmatprep.subr.mxu0 0.0
      %1925 = vmatpush1.msra.mxu0 %v1671
      %1926 = vmatprep.subr.mxu0 0.0
      %1927 = vmatpush1.msra.mxu0 %v1672
      %1928 = vmatprep.subr.mxu0 0.0
      %1929 = vmatpush1.msra.mxu0 %v1673
      %1930 = vmatprep.subr.mxu0 0.0
      %1931 = vmatpush1.msra.mxu0 %v1674
      %1932 = vmatprep.subr.mxu0 0.0
      %1933 = vmatpush1.msra.mxu0 %v1675
      %1934 = vmatprep.subr.mxu0 0.0
      %1935 = vmatpush1.msra.mxu0 %v1676
      %1936 = vmatprep.subr.mxu0 0.0
      %1937 = vmatpush1.msra.mxu0 %v1677
      %1938 = vmatprep.subr.mxu0 0.0
      %1939 = vmatpush1.msra.mxu0 %v1678
      %1940 = vmatprep.mubr.f32.mxu0 %v1684
      %1941 = vmatmul.mubr.f32.gmra.mrb[0].mxu0 %v1683
      %v1942 = vpop.f32.mrb[0].mxu0
      %v1943 = vadd.f32 0.0, %v1942
      %v1944 = vpop.f32.mrb[0].mxu0
      %1945 = vmatprep.mubr.f32.mxu0 %v1687
      %1946 = vmatmul.mubr.f32.gmra.mrb[0].mxu0 %v1686
      %v1947 = vpop.f32.mrb[0].mxu0
      %v1948 = vadd.f32 0.0, %v1947
      %v1949 = vpop.f32.mrb[0].mxu0
      %1950 = vmatprep.mubr.f32.mxu0 %v1690
      %1951 = vmatmul.mubr.f32.gmra.mrb[0].mxu0 %v1689
      %v1952 = vpop.f32.mrb[0].mxu0
      %v1953 = vadd.f32 0.0, %v1952
      %v1954 = vpop.f32.mrb[0].mxu0
      %1955 = vmatprep.mubr.f32.mxu0 %v1693
      %1956 = vmatmul.mubr.f32.gmra.mrb[0].mxu0 %v1692
      %v1957 = vpop.f32.mrb[0].mxu0
      %v1958 = vadd.f32 0.0, %v1957
      %v1959 = vpop.f32.mrb[0].mxu0
      %1960 = vmatprep.mubr.f32.mxu0 %v1696
      %1961 = vmatmul.mubr.f32.gmra.mrb[0].mxu0 %v1695
      %v1962 = vpop.f32.mrb[0].mxu0
      %v1963 = vadd.f32 0.0, %v1962
      %v1964 = vpop.f32.mrb[0].mxu0
      %1965 = vmatprep.mubr.f32.mxu0 %v1699
      %1966 = vmatmul.mubr.f32.gmra.mrb[0].mxu0 %v1698
      %v1967 = vpop.f32.mrb[0].mxu0
      %v1968 = vadd.f32 0.0, %v1967
      %v1969 = vpop.f32.mrb[0].mxu0
      %1970 = vmatprep.mubr.f32.mxu0 %v1702
      %1971 = vmatmul.mubr.f32.gmra.mrb[0].mxu0 %v1701
      %v1972 = vpop.f32.mrb[0].mxu0
      %v1973 = vadd.f32 0.0, %v1972
      %v1974 = vpop.f32.mrb[0].mxu0
      %1975 = vmatprep.mubr.f32.mxu0 %v1705
      %1976 = vmatmul.mubr.f32.gmra.mrb[0].mxu0 %v1704
      %v1977 = vpop.f32.mrb[0].mxu0
      %v1978 = vadd.f32 0.0, %v1977
      %v1979 = vpop.f32.mrb[0].mxu0
      %1980 = vmatprep.mubr.f32.mxu0 %v1708
      %1981 = vmatmul.mubr.f32.gmra.mrb[0].mxu0 %v1707
      %v1982 = vpop.f32.mrb[0].mxu0
      %v1983 = vadd.f32 0.0, %v1982
      %v1984 = vpop.f32.mrb[0].mxu0
      %1985 = vmatprep.mubr.f32.mxu0 %v1711
      %1986 = vmatmul.mubr.f32.gmra.mrb[0].mxu0 %v1710
      %v1987 = vpop.f32.mrb[0].mxu0
      %v1988 = vadd.f32 0.0, %v1987
      %v1989 = vpop.f32.mrb[0].mxu0
      %1990 = vmatprep.mubr.f32.mxu0 %v1714
      %1991 = vmatmul.mubr.f32.gmra.mrb[0].mxu0 %v1713
      %v1992 = vpop.f32.mrb[0].mxu0
      %v1993 = vadd.f32 0.0, %v1992
      %v1994 = vpop.f32.mrb[0].mxu0
      %1995 = vmatprep.mubr.f32.mxu0 %v1717
      %1996 = vmatmul.mubr.f32.gmra.mrb[0].mxu0 %v1716
      %v1997 = vpop.f32.mrb[0].mxu0
      %v1998 = vadd.f32 0.0, %v1997
      %v1999 = vpop.f32.mrb[0].mxu0
      %2000 = vmatprep.mubr.f32.mxu0 %v1720
      %2001 = vmatmul.mubr.f32.gmra.mrb[0].mxu0 %v1719
      %v2002 = vpop.f32.mrb[0].mxu0
      %v2003 = vadd.f32 0.0, %v2002
      %v2004 = vpop.f32.mrb[0].mxu0
      %2005 = vmatprep.mubr.f32.mxu0 %v1723
      %2006 = vmatmul.mubr.f32.gmra.mrb[0].mxu0 %v1722
      %v2007 = vpop.f32.mrb[0].mxu0
      %v2008 = vadd.f32 0.0, %v2007
      %v2009 = vpop.f32.mrb[0].mxu0
      %2010 = vmatprep.mubr.f32.mxu0 %v1726
      %2011 = vmatmul.mubr.f32.gmra.mrb[0].mxu0 %v1725
      %v2012 = vpop.f32.mrb[0].mxu0
      %v2013 = vadd.f32 0.0, %v2012
      %v2014 = vpop.f32.mrb[0].mxu0
      %2015 = vmatprep.mubr.f32.mxu0 %v1729
      %2016 = vmatmul.mubr.f32.gmra.mrb[0].mxu0 %v1728
      %v2017 = vpop.f32.mrb[0].mxu0
      %v2018 = vadd.f32 0.0, %v2017
      %v2019 = vpop.f32.mrb[0].mxu0
      %2020 = vmatprep.mubr.f32.mxu0 %v1732
      %2021 = vmatmul.mubr.f32.gmra.mrb[0].mxu0 %v1731
      %v2022 = vpop.f32.mrb[0].mxu0
      %v2023 = vadd.f32 0.0, %v2022
      %v2024 = vpop.f32.mrb[0].mxu0
      %2025 = vmatprep.mubr.f32.mxu0 %v1735
      %2026 = vmatmul.mubr.f32.gmra.mrb[0].mxu0 %v1734
      %v2027 = vpop.f32.mrb[0].mxu0
      %v2028 = vadd.f32 0.0, %v2027
      %v2029 = vpop.f32.mrb[0].mxu0
      %2030 = vmatprep.mubr.f32.mxu0 %v1738
      %2031 = vmatmul.mubr.f32.gmra.mrb[0].mxu0 %v1737
      %v2032 = vpop.f32.mrb[0].mxu0
      %v2033 = vadd.f32 0.0, %v2032
      %v2034 = vpop.f32.mrb[0].mxu0
      %2035 = vmatprep.mubr.f32.mxu0 %v1741
      %2036 = vmatmul.mubr.f32.gmra.mrb[0].mxu0 %v1740
      %v2037 = vpop.f32.mrb[0].mxu0
      %v2038 = vadd.f32 0.0, %v2037
      %v2039 = vpop.f32.mrb[0].mxu0
      %2040 = vmatprep.mubr.f32.mxu0 %v1744
      %2041 = vmatmul.mubr.f32.gmra.mrb[0].mxu0 %v1743
      %v2042 = vpop.f32.mrb[0].mxu0
      %v2043 = vadd.f32 0.0, %v2042
      %v2044 = vpop.f32.mrb[0].mxu0
      %2045 = vmatprep.mubr.f32.mxu0 %v1747
      %2046 = vmatmul.mubr.f32.gmra.mrb[0].mxu0 %v1746
      %v2047 = vpop.f32.mrb[0].mxu0
      %v2048 = vadd.f32 0.0, %v2047
      %v2049 = vpop.f32.mrb[0].mxu0
      %2050 = vmatprep.mubr.f32.mxu0 %v1750
      %2051 = vmatmul.mubr.f32.gmra.mrb[0].mxu0 %v1749
      %v2052 = vpop.f32.mrb[0].mxu0
      %v2053 = vadd.f32 0.0, %v2052
      %v2054 = vpop.f32.mrb[0].mxu0
      %2055 = vmatprep.mubr.f32.mxu0 %v1753
      %2056 = vmatmul.mubr.f32.gmra.mrb[0].mxu0 %v1752
      %v2057 = vpop.f32.mrb[0].mxu0
      %v2058 = vadd.f32 0.0, %v2057
      %v2059 = vpop.f32.mrb[0].mxu0
      %2060 = vmatprep.mubr.f32.mxu0 %v1756
      %2061 = vmatmul.mubr.f32.gmra.mrb[0].mxu0 %v1755
      %v2062 = vpop.f32.mrb[0].mxu0
      %v2063 = vadd.f32 0.0, %v2062
      %v2064 = vpop.f32.mrb[0].mxu0
      %2065 = vmatprep.mubr.f32.mxu0 %v1759
      %2066 = vmatmul.mubr.f32.gmra.mrb[0].mxu0 %v1758
      %v2067 = vpop.f32.mrb[0].mxu0
      %v2068 = vadd.f32 0.0, %v2067
      %v2069 = vpop.f32.mrb[0].mxu0
      %2070 = vmatprep.mubr.f32.mxu0 %v1762
      %2071 = vmatmul.mubr.f32.gmra.mrb[0].mxu0 %v1761
      %v2072 = vpop.f32.mrb[0].mxu0
      %v2073 = vadd.f32 0.0, %v2072
      %v2074 = vpop.f32.mrb[0].mxu0
      %2075 = vmatprep.mubr.f32.mxu0 %v1765
      %2076 = vmatmul.mubr.f32.gmra.mrb[0].mxu0 %v1764
      %v2077 = vpop.f32.mrb[0].mxu0
      %v2078 = vadd.f32 0.0, %v2077
      %v2079 = vpop.f32.mrb[0].mxu0
      %2080 = vmatprep.mubr.f32.mxu0 %v1768
      %2081 = vmatmul.mubr.f32.gmra.mrb[0].mxu0 %v1767
      %v2082 = vpop.f32.mrb[0].mxu0
      %v2083 = vadd.f32 0.0, %v2082
      %v2084 = vpop.f32.mrb[0].mxu0
      %2085 = vmatprep.mubr.f32.mxu0 %v1771
      %2086 = vmatmul.mubr.f32.gmra.mrb[0].mxu0 %v1770
      %v2087 = vpop.f32.mrb[0].mxu0
      %v2088 = vadd.f32 0.0, %v2087
      %v2089 = vpop.f32.mrb[0].mxu0
      %2090 = vmatprep.mubr.f32.mxu0 %v1774
      %2091 = vmatmul.mubr.f32.gmra.mrb[0].mxu0 %v1773
      %v2092 = vpop.f32.mrb[0].mxu0
      %v2093 = vadd.f32 0.0, %v2092
      %v2094 = vpop.f32.mrb[0].mxu0
      %2095 = vmatprep.mubr.f32.mxu0 %v1777
      %2096 = vmatmul.mubr.f32.gmra.mrb[0].mxu0 %v1776
      %v2097 = vpop.f32.mrb[0].mxu0
      %v2098 = vadd.f32 0.0, %v2097
      %v2099 = vpop.f32.mrb[0].mxu0
      %2100 = vdwg.mxu0
      %2101 = vmatprep.subr.mxu0 0.0
      %2102 = vmatpush1.msra.mxu0 %v1679
      %2103 = vmatprep.subr.mxu0 0.0
      %2104 = vmatpush1.msra.mxu0 %v1680
      %2105 = vmatprep.subr.mxu0 0.0
      %2106 = vmatpush1.msra.mxu0 %v1681
      %2107 = vmatprep.subr.mxu0 0.0
      %2108 = vmatpush1.msra.mxu0 %v1682
      %2109 = vmatprep.subr.mxu0 0.0
      %2110 = vmatpush1.msra.mxu0 0.0
      %2111 = vmatprep.subr.mxu0 0.0
      %2112 = vmatpush1.msra.mxu0 0.0
      %2113 = vmatprep.subr.mxu0 0.0
      %2114 = vmatpush1.msra.mxu0 0.0
      %2115 = vmatprep.subr.mxu0 0.0
      %2116 = vmatpush1.msra.mxu0 0.0
      %2117 = vmatprep.subr.mxu0 0.0
      %2118 = vmatpush1.msra.mxu0 0.0
      %2119 = vmatprep.subr.mxu0 0.0
      %2120 = vmatpush1.msra.mxu0 0.0
      %2121 = vmatprep.subr.mxu0 0.0
      %2122 = vmatpush1.msra.mxu0 0.0
      %2123 = vmatprep.subr.mxu0 0.0
      %2124 = vmatpush1.msra.mxu0 0.0
      %2125 = vmatprep.subr.mxu0 0.0
      %2126 = vmatpush1.msra.mxu0 0.0
      %2127 = vmatprep.subr.mxu0 0.0
      %2128 = vmatpush1.msra.mxu0 0.0
      %2129 = vmatprep.subr.mxu0 0.0
      %2130 = vmatpush1.msra.mxu0 0.0
      %2131 = vmatprep.subr.mxu0 0.0
      %2132 = vmatpush1.msra.mxu0 0.0
      %2133 = vmatprep.subr.mxu0 0.0
      %2134 = vmatpush1.msra.mxu0 0.0
      %2135 = vmatprep.subr.mxu0 0.0
      %2136 = vmatpush1.msra.mxu0 0.0
      %2137 = vmatprep.subr.mxu0 0.0
      %2138 = vmatpush1.msra.mxu0 0.0
      %2139 = vmatprep.subr.mxu0 0.0
      %2140 = vmatpush1.msra.mxu0 0.0
      %2141 = vmatprep.subr.mxu0 0.0
      %2142 = vmatpush1.msra.mxu0 0.0
      %2143 = vmatprep.subr.mxu0 0.0
      %2144 = vmatpush1.msra.mxu0 0.0
      %2145 = vmatprep.subr.mxu0 0.0
      %2146 = vmatpush1.msra.mxu0 0.0
      %2147 = vmatprep.subr.mxu0 0.0
      %2148 = vmatpush1.msra.mxu0 0.0
      %2149 = vmatprep.subr.mxu0 0.0
      %2150 = vmatpush1.msra.mxu0 0.0
      %2151 = vmatprep.subr.mxu0 0.0
      %2152 = vmatpush1.msra.mxu0 0.0
      %2153 = vmatprep.subr.mxu0 0.0
      %2154 = vmatpush1.msra.mxu0 0.0
      %2155 = vmatprep.subr.mxu0 0.0
      %2156 = vmatpush1.msra.mxu0 0.0
      %2157 = vmatprep.subr.mxu0 0.0
      %2158 = vmatpush1.msra.mxu0 0.0
      %2159 = vmatprep.subr.mxu0 0.0
      %2160 = vmatpush1.msra.mxu0 0.0
      %2161 = vmatprep.subr.mxu0 0.0
      %2162 = vmatpush1.msra.mxu0 0.0
      %2163 = vmatprep.subr.mxu0 0.0
      %2164 = vmatpush1.msra.mxu0 0.0
      %2165 = vmatprep.mubr.f32.mxu0 0.0
      %2166 = vmatmul.mubr.f32.gmra.mrb[0].mxu0 %v1781
      %v2167 = vpop.f32.mrb[0].mxu0
      %v2168 = vadd.f32 %v1943, %v2167
      %v2169 = vpop.f32.mrb[0].mxu0
      %2170 = vmatprep.mubr.f32.mxu0 0.0
      %2171 = vmatmul.mubr.f32.gmra.mrb[0].mxu0 %v1784
      %v2172 = vpop.f32.mrb[0].mxu0
      %v2173 = vadd.f32 %v1948, %v2172
      %v2174 = vpop.f32.mrb[0].mxu0
      %2175 = vmatprep.mubr.f32.mxu0 0.0
      %2176 = vmatmul.mubr.f32.gmra.mrb[0].mxu0 %v1787
      %v2177 = vpop.f32.mrb[0].mxu0
      %v2178 = vadd.f32 %v1953, %v2177
      %v2179 = vpop.f32.mrb[0].mxu0
      %2180 = vmatprep.mubr.f32.mxu0 0.0
      %2181 = vmatmul.mubr.f32.gmra.mrb[0].mxu0 %v1790
      %v2182 = vpop.f32.mrb[0].mxu0
      %v2183 = vadd.f32 %v1958, %v2182
      %v2184 = vpop.f32.mrb[0].mxu0
      %2185 = vmatprep.mubr.f32.mxu0 0.0
      %2186 = vmatmul.mubr.f32.gmra.mrb[0].mxu0 %v1793
      %v2187 = vpop.f32.mrb[0].mxu0
      %v2188 = vadd.f32 %v1963, %v2187
      %v2189 = vpop.f32.mrb[0].mxu0
      %2190 = vmatprep.mubr.f32.mxu0 0.0
      %2191 = vmatmul.mubr.f32.gmra.mrb[0].mxu0 %v1796
      %v2192 = vpop.f32.mrb[0].mxu0
      %v2193 = vadd.f32 %v1968, %v2192
      %v2194 = vpop.f32.mrb[0].mxu0
      %2195 = vmatprep.mubr.f32.mxu0 0.0
      %2196 = vmatmul.mubr.f32.gmra.mrb[0].mxu0 %v1799
      %v2197 = vpop.f32.mrb[0].mxu0
      %v2198 = vadd.f32 %v1973, %v2197
      %v2199 = vpop.f32.mrb[0].mxu0
      %2200 = vmatprep.mubr.f32.mxu0 0.0
      %2201 = vmatmul.mubr.f32.gmra.mrb[0].mxu0 %v1802
      %v2202 = vpop.f32.mrb[0].mxu0
      %v2203 = vadd.f32 %v1978, %v2202
      %v2204 = vpop.f32.mrb[0].mxu0
      %2205 = vmatprep.mubr.f32.mxu0 0.0
      %2206 = vmatmul.mubr.f32.gmra.mrb[0].mxu0 %v1805
      %v2207 = vpop.f32.mrb[0].mxu0
      %v2208 = vadd.f32 %v1983, %v2207
      %v2209 = vpop.f32.mrb[0].mxu0
      %2210 = vmatprep.mubr.f32.mxu0 0.0
      %2211 = vmatmul.mubr.f32.gmra.mrb[0].mxu0 %v1808
      %v2212 = vpop.f32.mrb[0].mxu0
      %v2213 = vadd.f32 %v1988, %v2212
      %v2214 = vpop.f32.mrb[0].mxu0
      %2215 = vmatprep.mubr.f32.mxu0 0.0
      %2216 = vmatmul.mubr.f32.gmra.mrb[0].mxu0 %v1811
      %v2217 = vpop.f32.mrb[0].mxu0
      %v2218 = vadd.f32 %v1993, %v2217
      %v2219 = vpop.f32.mrb[0].mxu0
      %2220 = vmatprep.mubr.f32.mxu0 0.0
      %2221 = vmatmul.mubr.f32.gmra.mrb[0].mxu0 %v1814
      %v2222 = vpop.f32.mrb[0].mxu0
      %v2223 = vadd.f32 %v1998, %v2222
      %v2224 = vpop.f32.mrb[0].mxu0
      %2225 = vmatprep.mubr.f32.mxu0 0.0
      %2226 = vmatmul.mubr.f32.gmra.mrb[0].mxu0 %v1817
      %v2227 = vpop.f32.mrb[0].mxu0
      %v2228 = vadd.f32 %v2003, %v2227
      %v2229 = vpop.f32.mrb[0].mxu0
      %2230 = vmatprep.mubr.f32.mxu0 0.0
      %2231 = vmatmul.mubr.f32.gmra.mrb[0].mxu0 %v1820
      %v2232 = vpop.f32.mrb[0].mxu0
      %v2233 = vadd.f32 %v2008, %v2232
      %v2234 = vpop.f32.mrb[0].mxu0
      %2235 = vmatprep.mubr.f32.mxu0 0.0
      %2236 = vmatmul.mubr.f32.gmra.mrb[0].mxu0 %v1823
      %v2237 = vpop.f32.mrb[0].mxu0
      %v2238 = vadd.f32 %v2013, %v2237
      %v2239 = vpop.f32.mrb[0].mxu0
      %2240 = vmatprep.mubr.f32.mxu0 0.0
      %2241 = vmatmul.mubr.f32.gmra.mrb[0].mxu0 %v1826
      %v2242 = vpop.f32.mrb[0].mxu0
      %v2243 = vadd.f32 %v2018, %v2242
      %v2244 = vpop.f32.mrb[0].mxu0
      %2245 = vmatprep.mubr.f32.mxu0 0.0
      %2246 = vmatmul.mubr.f32.gmra.mrb[0].mxu0 %v1829
      %v2247 = vpop.f32.mrb[0].mxu0
      %v2248 = vadd.f32 %v2023, %v2247
      %v2249 = vpop.f32.mrb[0].mxu0
      %2250 = vmatprep.mubr.f32.mxu0 0.0
      %2251 = vmatmul.mubr.f32.gmra.mrb[0].mxu0 %v1832
      %v2252 = vpop.f32.mrb[0].mxu0
      %v2253 = vadd.f32 %v2028, %v2252
      %v2254 = vpop.f32.mrb[0].mxu0
      %2255 = vmatprep.mubr.f32.mxu0 0.0
      %2256 = vmatmul.mubr.f32.gmra.mrb[0].mxu0 %v1835
      %v2257 = vpop.f32.mrb[0].mxu0
      %v2258 = vadd.f32 %v2033, %v2257
      %v2259 = vpop.f32.mrb[0].mxu0
      %2260 = vmatprep.mubr.f32.mxu0 0.0
      %2261 = vmatmul.mubr.f32.gmra.mrb[0].mxu0 %v1838
      %v2262 = vpop.f32.mrb[0].mxu0
      %v2263 = vadd.f32 %v2038, %v2262
      %v2264 = vpop.f32.mrb[0].mxu0
      %2265 = vmatprep.mubr.f32.mxu0 0.0
      %2266 = vmatmul.mubr.f32.gmra.mrb[0].mxu0 %v1841
      %v2267 = vpop.f32.mrb[0].mxu0
      %v2268 = vadd.f32 %v2043, %v2267
      %v2269 = vpop.f32.mrb[0].mxu0
      %2270 = vmatprep.mubr.f32.mxu0 0.0
      %2271 = vmatmul.mubr.f32.gmra.mrb[0].mxu0 %v1844
      %v2272 = vpop.f32.mrb[0].mxu0
      %v2273 = vadd.f32 %v2048, %v2272
      %v2274 = vpop.f32.mrb[0].mxu0
      %2275 = vmatprep.mubr.f32.mxu0 0.0
      %2276 = vmatmul.mubr.f32.gmra.mrb[0].mxu0 %v1847
      %v2277 = vpop.f32.mrb[0].mxu0
      %v2278 = vadd.f32 %v2053, %v2277
      %v2279 = vpop.f32.mrb[0].mxu0
      %2280 = vmatprep.mubr.f32.mxu0 0.0
      %2281 = vmatmul.mubr.f32.gmra.mrb[0].mxu0 %v1850
      %v2282 = vpop.f32.mrb[0].mxu0
      %v2283 = vadd.f32 %v2058, %v2282
      %v2284 = vpop.f32.mrb[0].mxu0
      %2285 = vmatprep.mubr.f32.mxu0 0.0
      %2286 = vmatmul.mubr.f32.gmra.mrb[0].mxu0 %v1853
      %v2287 = vpop.f32.mrb[0].mxu0
      %v2288 = vadd.f32 %v2063, %v2287
      %v2289 = vpop.f32.mrb[0].mxu0
      %2290 = vmatprep.mubr.f32.mxu0 0.0
      %2291 = vmatmul.mubr.f32.gmra.mrb[0].mxu0 %v1856
      %v2292 = vpop.f32.mrb[0].mxu0
      %v2293 = vadd.f32 %v2068, %v2292
      %v2294 = vpop.f32.mrb[0].mxu0
      %2295 = vmatprep.mubr.f32.mxu0 0.0
      %2296 = vmatmul.mubr.f32.gmra.mrb[0].mxu0 %v1859
      %v2297 = vpop.f32.mrb[0].mxu0
      %v2298 = vadd.f32 %v2073, %v2297
      %v2299 = vpop.f32.mrb[0].mxu0
      %2300 = vmatprep.mubr.f32.mxu0 0.0
      %2301 = vmatmul.mubr.f32.gmra.mrb[0].mxu0 %v1862
      %v2302 = vpop.f32.mrb[0].mxu0
      %v2303 = vadd.f32 %v2078, %v2302
      %v2304 = vpop.f32.mrb[0].mxu0
      %2305 = vmatprep.mubr.f32.mxu0 0.0
      %2306 = vmatmul.mubr.f32.gmra.mrb[0].mxu0 %v1865
      %v2307 = vpop.f32.mrb[0].mxu0
      %v2308 = vadd.f32 %v2083, %v2307
      %v2309 = vpop.f32.mrb[0].mxu0
      %2310 = vmatprep.mubr.f32.mxu0 0.0
      %2311 = vmatmul.mubr.f32.gmra.mrb[0].mxu0 %v1868
      %v2312 = vpop.f32.mrb[0].mxu0
      %v2313 = vadd.f32 %v2088, %v2312
      %v2314 = vpop.f32.mrb[0].mxu0
      %2315 = vmatprep.mubr.f32.mxu0 0.0
      %2316 = vmatmul.mubr.f32.gmra.mrb[0].mxu0 %v1871
      %v2317 = vpop.f32.mrb[0].mxu0
      %v2318 = vadd.f32 %v2093, %v2317
      %v2319 = vpop.f32.mrb[0].mxu0
      %2320 = vmatprep.mubr.f32.mxu0 0.0
      %2321 = vmatmul.mubr.f32.gmra.mrb[0].mxu0 %v1874
      %v2322 = vpop.f32.mrb[0].mxu0
      %v2323 = vadd.f32 %v2098, %v2322
      %v2324 = vpop.f32.mrb[0].mxu0
      %2325 = vdwg.mxu0
      %2326 = vmatprep.subr.mxu0 0.0
      %2327 = vmatpush1.msra.mxu0 %v1153
      %2328 = vmatprep.subr.mxu0 0.0
      %2329 = vmatpush1.msra.mxu0 %v1154
      %2330 = vmatprep.subr.mxu0 0.0
      %2331 = vmatpush1.msra.mxu0 %v1155
      %2332 = vmatprep.subr.mxu0 0.0
      %2333 = vmatpush1.msra.mxu0 %v1156
      %2334 = vmatprep.subr.mxu0 0.0
      %2335 = vmatpush1.msra.mxu0 %v1157
      %2336 = vmatprep.subr.mxu0 0.0
      %2337 = vmatpush1.msra.mxu0 %v1158
      %2338 = vmatprep.subr.mxu0 0.0
      %2339 = vmatpush1.msra.mxu0 %v1159
      %2340 = vmatprep.subr.mxu0 0.0
      %2341 = vmatpush1.msra.mxu0 %v1160
      %2342 = vmatprep.subr.mxu0 0.0
      %2343 = vmatpush1.msra.mxu0 %v1161
      %2344 = vmatprep.subr.mxu0 0.0
      %2345 = vmatpush1.msra.mxu0 %v1162
      %2346 = vmatprep.subr.mxu0 0.0
      %2347 = vmatpush1.msra.mxu0 %v1163
      %2348 = vmatprep.subr.mxu0 0.0
      %2349 = vmatpush1.msra.mxu0 %v1164
      %2350 = vmatprep.subr.mxu0 0.0
      %2351 = vmatpush1.msra.mxu0 %v1165
      %2352 = vmatprep.subr.mxu0 0.0
      %2353 = vmatpush1.msra.mxu0 %v1166
      %2354 = vmatprep.subr.mxu0 0.0
      %2355 = vmatpush1.msra.mxu0 %v1167
      %2356 = vmatprep.subr.mxu0 0.0
      %2357 = vmatpush1.msra.mxu0 %v1168
      %2358 = vmatprep.subr.mxu0 0.0
      %2359 = vmatpush1.msra.mxu0 %v1169
      %2360 = vmatprep.subr.mxu0 0.0
      %2361 = vmatpush1.msra.mxu0 %v1170
      %2362 = vmatprep.subr.mxu0 0.0
      %2363 = vmatpush1.msra.mxu0 %v1171
      %2364 = vmatprep.subr.mxu0 0.0
      %2365 = vmatpush1.msra.mxu0 %v1172
      %2366 = vmatprep.subr.mxu0 0.0
      %2367 = vmatpush1.msra.mxu0 %v1173
      %2368 = vmatprep.subr.mxu0 0.0
      %2369 = vmatpush1.msra.mxu0 %v1174
      %2370 = vmatprep.subr.mxu0 0.0
      %2371 = vmatpush1.msra.mxu0 %v1175
      %2372 = vmatprep.subr.mxu0 0.0
      %2373 = vmatpush1.msra.mxu0 %v1176
      %2374 = vmatprep.subr.mxu0 0.0
      %2375 = vmatpush1.msra.mxu0 %v1177
      %2376 = vmatprep.subr.mxu0 0.0
      %2377 = vmatpush1.msra.mxu0 %v1178
      %2378 = vmatprep.subr.mxu0 0.0
      %2379 = vmatpush1.msra.mxu0 %v1179
      %2380 = vmatprep.subr.mxu0 0.0
      %2381 = vmatpush1.msra.mxu0 %v1180
      %2382 = vmatprep.subr.mxu0 0.0
      %2383 = vmatpush1.msra.mxu0 %v1181
      %2384 = vmatprep.subr.mxu0 0.0
      %2385 = vmatpush1.msra.mxu0 %v1182
      %2386 = vmatprep.subr.mxu0 0.0
      %2387 = vmatpush1.msra.mxu0 %v1183
      %2388 = vmatprep.subr.mxu0 0.0
      %2389 = vmatpush1.msra.mxu0 %v1184
      %2390 = vmatprep.mubr.f32.mxu0 %v1259
      %2391 = vmatmul.mubr.f32.gmra.mrb[0].mxu0 %v1258
      %v2392 = vpop.f32.mrb[0].mxu0
      %v2393 = vadd.f32 0.0, %v2392
      %v2394 = vpop.f32.mrb[0].mxu0
      %2395 = vmatprep.mubr.f32.mxu0 %v1261
      %2396 = vmatmul.mubr.f32.gmra.mrb[0].mxu0 %v1260
      %v2397 = vpop.f32.mrb[0].mxu0
      %v2398 = vadd.f32 0.0, %v2397
      %v2399 = vpop.f32.mrb[0].mxu0
      %2400 = vmatprep.mubr.f32.mxu0 %v1263
      %2401 = vmatmul.mubr.f32.gmra.mrb[0].mxu0 %v1262
      %v2402 = vpop.f32.mrb[0].mxu0
      %v2403 = vadd.f32 0.0, %v2402
      %v2404 = vpop.f32.mrb[0].mxu0
      %2405 = vmatprep.mubr.f32.mxu0 %v1265
      %2406 = vmatmul.mubr.f32.gmra.mrb[0].mxu0 %v1264
      %v2407 = vpop.f32.mrb[0].mxu0
      %v2408 = vadd.f32 0.0, %v2407
      %v2409 = vpop.f32.mrb[0].mxu0
      %2410 = vmatprep.mubr.f32.mxu0 %v1267
      %2411 = vmatmul.mubr.f32.gmra.mrb[0].mxu0 %v1266
      %v2412 = vpop.f32.mrb[0].mxu0
      %v2413 = vadd.f32 0.0, %v2412
      %v2414 = vpop.f32.mrb[0].mxu0
      %2415 = vmatprep.mubr.f32.mxu0 %v1269
      %2416 = vmatmul.mubr.f32.gmra.mrb[0].mxu0 %v1268
      %v2417 = vpop.f32.mrb[0].mxu0
      %v2418 = vadd.f32 0.0, %v2417
      %v2419 = vpop.f32.mrb[0].mxu0
      %2420 = vmatprep.mubr.f32.mxu0 %v1271
      %2421 = vmatmul.mubr.f32.gmra.mrb[0].mxu0 %v1270
      %v2422 = vpop.f32.mrb[0].mxu0
      %v2423 = vadd.f32 0.0, %v2422
      %v2424 = vpop.f32.mrb[0].mxu0
      %2425 = vmatprep.mubr.f32.mxu0 %v1273
      %2426 = vmatmul.mubr.f32.gmra.mrb[0].mxu0 %v1272
      %v2427 = vpop.f32.mrb[0].mxu0
      %v2428 = vadd.f32 0.0, %v2427
      %v2429 = vpop.f32.mrb[0].mxu0
      %2430 = vmatprep.mubr.f32.mxu0 %v1275
      %2431 = vmatmul.mubr.f32.gmra.mrb[0].mxu0 %v1274
      %v2432 = vpop.f32.mrb[0].mxu0
      %v2433 = vadd.f32 0.0, %v2432
      %v2434 = vpop.f32.mrb[0].mxu0
      %2435 = vmatprep.mubr.f32.mxu0 %v1277
      %2436 = vmatmul.mubr.f32.gmra.mrb[0].mxu0 %v1276
      %v2437 = vpop.f32.mrb[0].mxu0
      %v2438 = vadd.f32 0.0, %v2437
      %v2439 = vpop.f32.mrb[0].mxu0
      %2440 = vmatprep.mubr.f32.mxu0 %v1279
      %2441 = vmatmul.mubr.f32.gmra.mrb[0].mxu0 %v1278
      %v2442 = vpop.f32.mrb[0].mxu0
      %v2443 = vadd.f32 0.0, %v2442
      %v2444 = vpop.f32.mrb[0].mxu0
      %2445 = vmatprep.mubr.f32.mxu0 %v1281
      %2446 = vmatmul.mubr.f32.gmra.mrb[0].mxu0 %v1280
      %v2447 = vpop.f32.mrb[0].mxu0
      %v2448 = vadd.f32 0.0, %v2447
      %v2449 = vpop.f32.mrb[0].mxu0
      %2450 = vmatprep.mubr.f32.mxu0 %v1283
      %2451 = vmatmul.mubr.f32.gmra.mrb[0].mxu0 %v1282
      %v2452 = vpop.f32.mrb[0].mxu0
      %v2453 = vadd.f32 0.0, %v2452
      %v2454 = vpop.f32.mrb[0].mxu0
      %2455 = vmatprep.mubr.f32.mxu0 %v1285
      %2456 = vmatmul.mubr.f32.gmra.mrb[0].mxu0 %v1284
      %v2457 = vpop.f32.mrb[0].mxu0
      %v2458 = vadd.f32 0.0, %v2457
      %v2459 = vpop.f32.mrb[0].mxu0
      %2460 = vmatprep.mubr.f32.mxu0 %v1287
      %2461 = vmatmul.mubr.f32.gmra.mrb[0].mxu0 %v1286
      %v2462 = vpop.f32.mrb[0].mxu0
      %v2463 = vadd.f32 0.0, %v2462
      %v2464 = vpop.f32.mrb[0].mxu0
      %2465 = vmatprep.mubr.f32.mxu0 %v1289
      %2466 = vmatmul.mubr.f32.gmra.mrb[0].mxu0 %v1288
      %v2467 = vpop.f32.mrb[0].mxu0
      %v2468 = vadd.f32 0.0, %v2467
      %v2469 = vpop.f32.mrb[0].mxu0
      %2470 = vmatprep.mubr.f32.mxu0 %v1291
      %2471 = vmatmul.mubr.f32.gmra.mrb[0].mxu0 %v1290
      %v2472 = vpop.f32.mrb[0].mxu0
      %v2473 = vadd.f32 0.0, %v2472
      %v2474 = vpop.f32.mrb[0].mxu0
      %2475 = vmatprep.mubr.f32.mxu0 %v1293
      %2476 = vmatmul.mubr.f32.gmra.mrb[0].mxu0 %v1292
      %v2477 = vpop.f32.mrb[0].mxu0
      %v2478 = vadd.f32 0.0, %v2477
      %v2479 = vpop.f32.mrb[0].mxu0
      %2480 = vmatprep.mubr.f32.mxu0 %v1295
      %2481 = vmatmul.mubr.f32.gmra.mrb[0].mxu0 %v1294
      %v2482 = vpop.f32.mrb[0].mxu0
      %v2483 = vadd.f32 0.0, %v2482
      %v2484 = vpop.f32.mrb[0].mxu0
      %2485 = vmatprep.mubr.f32.mxu0 %v1297
      %2486 = vmatmul.mubr.f32.gmra.mrb[0].mxu0 %v1296
      %v2487 = vpop.f32.mrb[0].mxu0
      %v2488 = vadd.f32 0.0, %v2487
      %v2489 = vpop.f32.mrb[0].mxu0
      %2490 = vmatprep.mubr.f32.mxu0 %v1299
      %2491 = vmatmul.mubr.f32.gmra.mrb[0].mxu0 %v1298
      %v2492 = vpop.f32.mrb[0].mxu0
      %v2493 = vadd.f32 0.0, %v2492
      %v2494 = vpop.f32.mrb[0].mxu0
      %2495 = vmatprep.mubr.f32.mxu0 %v1301
      %2496 = vmatmul.mubr.f32.gmra.mrb[0].mxu0 %v1300
      %v2497 = vpop.f32.mrb[0].mxu0
      %v2498 = vadd.f32 0.0, %v2497
      %v2499 = vpop.f32.mrb[0].mxu0
      %2500 = vmatprep.mubr.f32.mxu0 %v1303
      %2501 = vmatmul.mubr.f32.gmra.mrb[0].mxu0 %v1302
      %v2502 = vpop.f32.mrb[0].mxu0
      %v2503 = vadd.f32 0.0, %v2502
      %v2504 = vpop.f32.mrb[0].mxu0
      %2505 = vmatprep.mubr.f32.mxu0 %v1305
      %2506 = vmatmul.mubr.f32.gmra.mrb[0].mxu0 %v1304
      %v2507 = vpop.f32.mrb[0].mxu0
      %v2508 = vadd.f32 0.0, %v2507
      %v2509 = vpop.f32.mrb[0].mxu0
      %2510 = vmatprep.mubr.f32.mxu0 %v1307
      %2511 = vmatmul.mubr.f32.gmra.mrb[0].mxu0 %v1306
      %v2512 = vpop.f32.mrb[0].mxu0
      %v2513 = vadd.f32 0.0, %v2512
      %v2514 = vpop.f32.mrb[0].mxu0
      %2515 = vmatprep.mubr.f32.mxu0 %v1309
      %2516 = vmatmul.mubr.f32.gmra.mrb[0].mxu0 %v1308
      %v2517 = vpop.f32.mrb[0].mxu0
      %v2518 = vadd.f32 0.0, %v2517
      %v2519 = vpop.f32.mrb[0].mxu0
      %2520 = vmatprep.mubr.f32.mxu0 %v1311
      %2521 = vmatmul.mubr.f32.gmra.mrb[0].mxu0 %v1310
      %v2522 = vpop.f32.mrb[0].mxu0
      %v2523 = vadd.f32 0.0, %v2522
      %v2524 = vpop.f32.mrb[0].mxu0
      %2525 = vmatprep.mubr.f32.mxu0 %v1313
      %2526 = vmatmul.mubr.f32.gmra.mrb[0].mxu0 %v1312
      %v2527 = vpop.f32.mrb[0].mxu0
      %v2528 = vadd.f32 0.0, %v2527
      %v2529 = vpop.f32.mrb[0].mxu0
      %2530 = vmatprep.mubr.f32.mxu0 %v1315
      %2531 = vmatmul.mubr.f32.gmra.mrb[0].mxu0 %v1314
      %v2532 = vpop.f32.mrb[0].mxu0
      %v2533 = vadd.f32 0.0, %v2532
      %v2534 = vpop.f32.mrb[0].mxu0
      %2535 = vmatprep.mubr.f32.mxu0 %v1317
      %2536 = vmatmul.mubr.f32.gmra.mrb[0].mxu0 %v1316
      %v2537 = vpop.f32.mrb[0].mxu0
      %v2538 = vadd.f32 0.0, %v2537
      %v2539 = vpop.f32.mrb[0].mxu0
      %2540 = vmatprep.mubr.f32.mxu0 %v1319
      %2541 = vmatmul.mubr.f32.gmra.mrb[0].mxu0 %v1318
      %v2542 = vpop.f32.mrb[0].mxu0
      %v2543 = vadd.f32 0.0, %v2542
      %v2544 = vpop.f32.mrb[0].mxu0
      %2545 = vmatprep.mubr.f32.mxu0 %v1321
      %2546 = vmatmul.mubr.f32.gmra.mrb[0].mxu0 %v1320
      %v2547 = vpop.f32.mrb[0].mxu0
      %v2548 = vadd.f32 0.0, %v2547
      %v2549 = vpop.f32.mrb[0].mxu0
      %2550 = vmatprep.mubr.f32.mxu0 %v1323
      %2551 = vmatmul.mubr.f32.gmra.mrb[0].mxu0 %v1322
      %v2552 = vpop.f32.mrb[0].mxu0
      %v2553 = vadd.f32 0.0, %v2552
      %v2554 = vpop.f32.mrb[0].mxu0
      %2555 = vmatprep.mubr.f32.mxu0 %v1325
      %2556 = vmatmul.mubr.f32.gmra.mrb[0].mxu0 %v1324
      %v2557 = vpop.f32.mrb[0].mxu0
      %v2558 = vadd.f32 0.0, %v2557
      %v2559 = vpop.f32.mrb[0].mxu0
      %2560 = vmatprep.mubr.f32.mxu0 %v1327
      %2561 = vmatmul.mubr.f32.gmra.mrb[0].mxu0 %v1326
      %v2562 = vpop.f32.mrb[0].mxu0
      %v2563 = vadd.f32 0.0, %v2562
      %v2564 = vpop.f32.mrb[0].mxu0
      %2565 = vmatprep.mubr.f32.mxu0 %v1329
      %2566 = vmatmul.mubr.f32.gmra.mrb[0].mxu0 %v1328
      %v2567 = vpop.f32.mrb[0].mxu0
      %v2568 = vadd.f32 0.0, %v2567
      %v2569 = vpop.f32.mrb[0].mxu0
      %2570 = vdwg.mxu0
      %v2571 = vmul.f32 %v2393, %v1185
      %v2572 = vmul.f32 %v2398, %v1186
      %v2573 = vmul.f32 %v2403, %v1187
      %v2574 = vmul.f32 %v2408, %v1188
      %v2575 = vmul.f32 %v2413, %v1189
      %v2576 = vmul.f32 %v2418, %v1190
      %v2577 = vmul.f32 %v2423, %v1191
      %v2578 = vmul.f32 %v2428, %v1192
      %v2579 = vmul.f32 %v2433, %v1193
      %v2580 = vmul.f32 %v2438, %v1194
      %v2581 = vmul.f32 %v2443, %v1195
      %v2582 = vmul.f32 %v2448, %v1196
      %v2583 = vmul.f32 %v2453, %v1197
      %v2584 = vmul.f32 %v2458, %v1198
      %v2585 = vmul.f32 %v2463, %v1199
      %v2586 = vmul.f32 %v2468, %v1200
      %v2587 = vmul.f32 %v2473, %v1201
      %v2588 = vmul.f32 %v2478, %v1202
      %v2589 = vmul.f32 %v2483, %v1203
      %v2590 = vmul.f32 %v2488, %v1204
      %v2591 = vmul.f32 %v2493, %v1205
      %v2592 = vmul.f32 %v2498, %v1206
      %v2593 = vmul.f32 %v2503, %v1207
      %v2594 = vmul.f32 %v2508, %v1208
      %v2595 = vmul.f32 %v2513, %v1209
      %v2596 = vmul.f32 %v2518, %v1210
      %v2597 = vmul.f32 %v2523, %v1211
      %v2598 = vmul.f32 %v2528, %v1212
      %v2599 = vmul.f32 %v2533, %v1213
      %v2600 = vmul.f32 %v2538, %v1214
      %v2601 = vmul.f32 %v2543, %v1215
      %v2602 = vmul.f32 %v2548, %v1216
      %v2603 = vmul.f32 %v2553, %v1217
      %v2604 = vmul.f32 %v2558, %v1218
      %v2605 = vmul.f32 %v2563, %v1219
      %v2606 = vmul.f32 %v2568, %v1220
      %v2607 = vmul.f32 %v2483, %v1222
      %v2608 = vmul.f32 %v2488, %v1223
      %v2609 = vmul.f32 %v2493, %v1224
      %v2610 = vmul.f32 %v2498, %v1225
      %v2611 = vmul.f32 %v2503, %v1226
      %v2612 = vmul.f32 %v2508, %v1227
      %v2613 = vmul.f32 %v2513, %v1228
      %v2614 = vmul.f32 %v2518, %v1229
      %v2615 = vmul.f32 %v2523, %v1230
      %v2616 = vmul.f32 %v2528, %v1231
      %v2617 = vmul.f32 %v2533, %v1232
      %v2618 = vmul.f32 %v2538, %v1233
      %v2619 = vmul.f32 %v2543, %v1234
      %v2620 = vmul.f32 %v2548, %v1235
      %v2621 = vmul.f32 %v2553, %v1236
      %v2622 = vmul.f32 %v2558, %v1237
      %v2623 = vmul.f32 %v2563, %v1238
      %v2624 = vmul.f32 %v2568, %v1239
      %v2625 = vmul.f32 %v2393, %v1240
      %v2626 = vmul.f32 %v2398, %v1241
      %v2627 = vmul.f32 %v2403, %v1242
      %v2628 = vmul.f32 %v2408, %v1243
      %v2629 = vmul.f32 %v2413, %v1244
      %v2630 = vmul.f32 %v2418, %v1245
      %v2631 = vmul.f32 %v2423, %v1246
      %v2632 = vmul.f32 %v2428, %v1247
      %v2633 = vmul.f32 %v2433, %v1248
      %v2634 = vmul.f32 %v2438, %v1249
      %v2635 = vmul.f32 %v2443, %v1250
      %v2636 = vmul.f32 %v2448, %v1251
      %v2637 = vmul.f32 %v2453, %v1252
      %v2638 = vmul.f32 %v2458, %v1253
      %v2639 = vmul.f32 %v2463, %v1254
      %v2640 = vmul.f32 %v2468, %v1255
      %v2641 = vmul.f32 %v2473, %v1256
      %v2642 = vmul.f32 %v2478, %v1257
      %v2643 = vadd.f32 %v2571, %v2607
      %v2644 = vadd.f32 %v2572, %v2608
      %v2645 = vadd.f32 %v2573, %v2609
      %v2646 = vadd.f32 %v2574, %v2610
      %v2647 = vadd.f32 %v2575, %v2611
      %v2648 = vadd.f32 %v2576, %v2612
      %v2649 = vadd.f32 %v2577, %v2613
      %v2650 = vadd.f32 %v2578, %v2614
      %v2651 = vadd.f32 %v2579, %v2615
      %v2652 = vadd.f32 %v2580, %v2616
      %v2653 = vadd.f32 %v2581, %v2617
      %v2654 = vadd.f32 %v2582, %v2618
      %v2655 = vadd.f32 %v2583, %v2619
      %v2656 = vadd.f32 %v2584, %v2620
      %v2657 = vadd.f32 %v2585, %v2621
      %v2658 = vadd.f32 %v2586, %v2622
      %v2659 = vadd.f32 %v2587, %v2623
      %v2660 = vadd.f32 %v2588, %v2624
      %v2661 = vadd.f32 %v2589, %v2625
      %v2662 = vadd.f32 %v2590, %v2626
      %v2663 = vadd.f32 %v2591, %v2627
      %v2664 = vadd.f32 %v2592, %v2628
      %v2665 = vadd.f32 %v2593, %v2629
      %v2666 = vadd.f32 %v2594, %v2630
      %v2667 = vadd.f32 %v2595, %v2631
      %v2668 = vadd.f32 %v2596, %v2632
      %v2669 = vadd.f32 %v2597, %v2633
      %v2670 = vadd.f32 %v2598, %v2634
      %v2671 = vadd.f32 %v2599, %v2635
      %v2672 = vadd.f32 %v2600, %v2636
      %v2673 = vadd.f32 %v2601, %v2637
      %v2674 = vadd.f32 %v2602, %v2638
      %v2675 = vadd.f32 %v2603, %v2639
      %v2676 = vadd.f32 %v2604, %v2640
      %v2677 = vadd.f32 %v2605, %v2641
      %v2678 = vadd.f32 %v2606, %v2642
      %2679 = vmatprep.subr.mxu0 0.0
      %2680 = vmatpush1.msra.mxu0 %v2643
      %2681 = vmatprep.subr.mxu0 0.0
      %2682 = vmatpush1.msra.mxu0 %v2644
      %2683 = vmatprep.subr.mxu0 0.0
      %2684 = vmatpush1.msra.mxu0 %v2645
      %2685 = vmatprep.subr.mxu0 0.0
      %2686 = vmatpush1.msra.mxu0 %v2646
      %2687 = vmatprep.subr.mxu0 0.0
      %2688 = vmatpush1.msra.mxu0 %v2647
      %2689 = vmatprep.subr.mxu0 0.0
      %2690 = vmatpush1.msra.mxu0 %v2648
      %2691 = vmatprep.subr.mxu0 0.0
      %2692 = vmatpush1.msra.mxu0 %v2649
      %2693 = vmatprep.subr.mxu0 0.0
      %2694 = vmatpush1.msra.mxu0 %v2650
      %2695 = vmatprep.subr.mxu0 0.0
      %2696 = vmatpush1.msra.mxu0 %v2651
      %2697 = vmatprep.subr.mxu0 0.0
      %2698 = vmatpush1.msra.mxu0 %v2652
      %2699 = vmatprep.subr.mxu0 0.0
      %2700 = vmatpush1.msra.mxu0 %v2653
      %2701 = vmatprep.subr.mxu0 0.0
      %2702 = vmatpush1.msra.mxu0 %v2654
      %2703 = vmatprep.subr.mxu0 0.0
      %2704 = vmatpush1.msra.mxu0 %v2655
      %2705 = vmatprep.subr.mxu0 0.0
      %2706 = vmatpush1.msra.mxu0 %v2656
      %2707 = vmatprep.subr.mxu0 0.0
      %2708 = vmatpush1.msra.mxu0 %v2657
      %2709 = vmatprep.subr.mxu0 0.0
      %2710 = vmatpush1.msra.mxu0 %v2658
      %2711 = vmatprep.subr.mxu0 0.0
      %2712 = vmatpush1.msra.mxu0 %v2659
      %2713 = vmatprep.subr.mxu0 0.0
      %2714 = vmatpush1.msra.mxu0 %v2660
      %2715 = vmatprep.subr.mxu0 0.0
      %2716 = vmatpush1.msra.mxu0 %v2661
      %2717 = vmatprep.subr.mxu0 0.0
      %2718 = vmatpush1.msra.mxu0 %v2662
      %2719 = vmatprep.subr.mxu0 0.0
      %2720 = vmatpush1.msra.mxu0 %v2663
      %2721 = vmatprep.subr.mxu0 0.0
      %2722 = vmatpush1.msra.mxu0 %v2664
      %2723 = vmatprep.subr.mxu0 0.0
      %2724 = vmatpush1.msra.mxu0 %v2665
      %2725 = vmatprep.subr.mxu0 0.0
      %2726 = vmatpush1.msra.mxu0 %v2666
      %2727 = vmatprep.subr.mxu0 0.0
      %2728 = vmatpush1.msra.mxu0 %v2667
      %2729 = vmatprep.subr.mxu0 0.0
      %2730 = vmatpush1.msra.mxu0 %v2668
      %2731 = vmatprep.subr.mxu0 0.0
      %2732 = vmatpush1.msra.mxu0 %v2669
      %2733 = vmatprep.subr.mxu0 0.0
      %2734 = vmatpush1.msra.mxu0 %v2670
      %2735 = vmatprep.subr.mxu0 0.0
      %2736 = vmatpush1.msra.mxu0 %v2671
      %2737 = vmatprep.subr.mxu0 0.0
      %2738 = vmatpush1.msra.mxu0 %v2672
      %2739 = vmatprep.subr.mxu0 0.0
      %2740 = vmatpush1.msra.mxu0 %v2673
      %2741 = vmatprep.subr.mxu0 0.0
      %2742 = vmatpush1.msra.mxu0 %v2674
      %2743 = vmatprep.mubr.f32.mxu0 %v1684
      %2744 = vmatmul.mubr.f32.gmra.mrb[0].mxu0 %v1683
      %v2745 = vpop.f32.mrb[0].mxu0
      %v2746 = vadd.f32 0.0, %v2745
      %v2747 = vpop.f32.mrb[0].mxu0
      %2748 = vmatprep.mubr.f32.mxu0 %v1687
      %2749 = vmatmul.mubr.f32.gmra.mrb[0].mxu0 %v1686
      %v2750 = vpop.f32.mrb[0].mxu0
      %v2751 = vadd.f32 0.0, %v2750
      %v2752 = vpop.f32.mrb[0].mxu0
      %2753 = vmatprep.mubr.f32.mxu0 %v1690
      %2754 = vmatmul.mubr.f32.gmra.mrb[0].mxu0 %v1689
      %v2755 = vpop.f32.mrb[0].mxu0
      %v2756 = vadd.f32 0.0, %v2755
      %v2757 = vpop.f32.mrb[0].mxu0
      %2758 = vmatprep.mubr.f32.mxu0 %v1693
      %2759 = vmatmul.mubr.f32.gmra.mrb[0].mxu0 %v1692
      %v2760 = vpop.f32.mrb[0].mxu0
      %v2761 = vadd.f32 0.0, %v2760
      %v2762 = vpop.f32.mrb[0].mxu0
      %2763 = vmatprep.mubr.f32.mxu0 %v1696
      %2764 = vmatmul.mubr.f32.gmra.mrb[0].mxu0 %v1695
      %v2765 = vpop.f32.mrb[0].mxu0
      %v2766 = vadd.f32 0.0, %v2765
      %v2767 = vpop.f32.mrb[0].mxu0
      %2768 = vmatprep.mubr.f32.mxu0 %v1699
      %2769 = vmatmul.mubr.f32.gmra.mrb[0].mxu0 %v1698
      %v2770 = vpop.f32.mrb[0].mxu0
      %v2771 = vadd.f32 0.0, %v2770
      %v2772 = vpop.f32.mrb[0].mxu0
      %2773 = vmatprep.mubr.f32.mxu0 %v1702
      %2774 = vmatmul.mubr.f32.gmra.mrb[0].mxu0 %v1701
      %v2775 = vpop.f32.mrb[0].mxu0
      %v2776 = vadd.f32 0.0, %v2775
      %v2777 = vpop.f32.mrb[0].mxu0
      %2778 = vmatprep.mubr.f32.mxu0 %v1705
      %2779 = vmatmul.mubr.f32.gmra.mrb[0].mxu0 %v1704
      %v2780 = vpop.f32.mrb[0].mxu0
      %v2781 = vadd.f32 0.0, %v2780
      %v2782 = vpop.f32.mrb[0].mxu0
      %2783 = vmatprep.mubr.f32.mxu0 %v1708
      %2784 = vmatmul.mubr.f32.gmra.mrb[0].mxu0 %v1707
      %v2785 = vpop.f32.mrb[0].mxu0
      %v2786 = vadd.f32 0.0, %v2785
      %v2787 = vpop.f32.mrb[0].mxu0
      %2788 = vmatprep.mubr.f32.mxu0 %v1711
      %2789 = vmatmul.mubr.f32.gmra.mrb[0].mxu0 %v1710
      %v2790 = vpop.f32.mrb[0].mxu0
      %v2791 = vadd.f32 0.0, %v2790
      %v2792 = vpop.f32.mrb[0].mxu0
      %2793 = vmatprep.mubr.f32.mxu0 %v1714
      %2794 = vmatmul.mubr.f32.gmra.mrb[0].mxu0 %v1713
      %v2795 = vpop.f32.mrb[0].mxu0
      %v2796 = vadd.f32 0.0, %v2795
      %v2797 = vpop.f32.mrb[0].mxu0
      %2798 = vmatprep.mubr.f32.mxu0 %v1717
      %2799 = vmatmul.mubr.f32.gmra.mrb[0].mxu0 %v1716
      %v2800 = vpop.f32.mrb[0].mxu0
      %v2801 = vadd.f32 0.0, %v2800
      %v2802 = vpop.f32.mrb[0].mxu0
      %2803 = vmatprep.mubr.f32.mxu0 %v1720
      %2804 = vmatmul.mubr.f32.gmra.mrb[0].mxu0 %v1719
      %v2805 = vpop.f32.mrb[0].mxu0
      %v2806 = vadd.f32 0.0, %v2805
      %v2807 = vpop.f32.mrb[0].mxu0
      %2808 = vmatprep.mubr.f32.mxu0 %v1723
      %2809 = vmatmul.mubr.f32.gmra.mrb[0].mxu0 %v1722
      %v2810 = vpop.f32.mrb[0].mxu0
      %v2811 = vadd.f32 0.0, %v2810
      %v2812 = vpop.f32.mrb[0].mxu0
      %2813 = vmatprep.mubr.f32.mxu0 %v1726
      %2814 = vmatmul.mubr.f32.gmra.mrb[0].mxu0 %v1725
      %v2815 = vpop.f32.mrb[0].mxu0
      %v2816 = vadd.f32 0.0, %v2815
      %v2817 = vpop.f32.mrb[0].mxu0
      %2818 = vmatprep.mubr.f32.mxu0 %v1729
      %2819 = vmatmul.mubr.f32.gmra.mrb[0].mxu0 %v1728
      %v2820 = vpop.f32.mrb[0].mxu0
      %v2821 = vadd.f32 0.0, %v2820
      %v2822 = vpop.f32.mrb[0].mxu0
      %2823 = vmatprep.mubr.f32.mxu0 %v1732
      %2824 = vmatmul.mubr.f32.gmra.mrb[0].mxu0 %v1731
      %v2825 = vpop.f32.mrb[0].mxu0
      %v2826 = vadd.f32 0.0, %v2825
      %v2827 = vpop.f32.mrb[0].mxu0
      %2828 = vmatprep.mubr.f32.mxu0 %v1735
      %2829 = vmatmul.mubr.f32.gmra.mrb[0].mxu0 %v1734
      %v2830 = vpop.f32.mrb[0].mxu0
      %v2831 = vadd.f32 0.0, %v2830
      %v2832 = vpop.f32.mrb[0].mxu0
      %2833 = vmatprep.mubr.f32.mxu0 %v1738
      %2834 = vmatmul.mubr.f32.gmra.mrb[0].mxu0 %v1737
      %v2835 = vpop.f32.mrb[0].mxu0
      %v2836 = vadd.f32 0.0, %v2835
      %v2837 = vpop.f32.mrb[0].mxu0
      %2838 = vmatprep.mubr.f32.mxu0 %v1741
      %2839 = vmatmul.mubr.f32.gmra.mrb[0].mxu0 %v1740
      %v2840 = vpop.f32.mrb[0].mxu0
      %v2841 = vadd.f32 0.0, %v2840
      %v2842 = vpop.f32.mrb[0].mxu0
      %2843 = vmatprep.mubr.f32.mxu0 %v1744
      %2844 = vmatmul.mubr.f32.gmra.mrb[0].mxu0 %v1743
      %v2845 = vpop.f32.mrb[0].mxu0
      %v2846 = vadd.f32 0.0, %v2845
      %v2847 = vpop.f32.mrb[0].mxu0
      %2848 = vmatprep.mubr.f32.mxu0 %v1747
      %2849 = vmatmul.mubr.f32.gmra.mrb[0].mxu0 %v1746
      %v2850 = vpop.f32.mrb[0].mxu0
      %v2851 = vadd.f32 0.0, %v2850
      %v2852 = vpop.f32.mrb[0].mxu0
      %2853 = vmatprep.mubr.f32.mxu0 %v1750
      %2854 = vmatmul.mubr.f32.gmra.mrb[0].mxu0 %v1749
      %v2855 = vpop.f32.mrb[0].mxu0
      %v2856 = vadd.f32 0.0, %v2855
      %v2857 = vpop.f32.mrb[0].mxu0
      %2858 = vmatprep.mubr.f32.mxu0 %v1753
      %2859 = vmatmul.mubr.f32.gmra.mrb[0].mxu0 %v1752
      %v2860 = vpop.f32.mrb[0].mxu0
      %v2861 = vadd.f32 0.0, %v2860
      %v2862 = vpop.f32.mrb[0].mxu0
      %2863 = vmatprep.mubr.f32.mxu0 %v1756
      %2864 = vmatmul.mubr.f32.gmra.mrb[0].mxu0 %v1755
      %v2865 = vpop.f32.mrb[0].mxu0
      %v2866 = vadd.f32 0.0, %v2865
      %v2867 = vpop.f32.mrb[0].mxu0
      %2868 = vmatprep.mubr.f32.mxu0 %v1759
      %2869 = vmatmul.mubr.f32.gmra.mrb[0].mxu0 %v1758
      %v2870 = vpop.f32.mrb[0].mxu0
      %v2871 = vadd.f32 0.0, %v2870
      %v2872 = vpop.f32.mrb[0].mxu0
      %2873 = vmatprep.mubr.f32.mxu0 %v1762
      %2874 = vmatmul.mubr.f32.gmra.mrb[0].mxu0 %v1761
      %v2875 = vpop.f32.mrb[0].mxu0
      %v2876 = vadd.f32 0.0, %v2875
      %v2877 = vpop.f32.mrb[0].mxu0
      %2878 = vmatprep.mubr.f32.mxu0 %v1765
      %2879 = vmatmul.mubr.f32.gmra.mrb[0].mxu0 %v1764
      %v2880 = vpop.f32.mrb[0].mxu0
      %v2881 = vadd.f32 0.0, %v2880
      %v2882 = vpop.f32.mrb[0].mxu0
      %2883 = vmatprep.mubr.f32.mxu0 %v1768
      %2884 = vmatmul.mubr.f32.gmra.mrb[0].mxu0 %v1767
      %v2885 = vpop.f32.mrb[0].mxu0
      %v2886 = vadd.f32 0.0, %v2885
      %v2887 = vpop.f32.mrb[0].mxu0
      %2888 = vmatprep.mubr.f32.mxu0 %v1771
      %2889 = vmatmul.mubr.f32.gmra.mrb[0].mxu0 %v1770
      %v2890 = vpop.f32.mrb[0].mxu0
      %v2891 = vadd.f32 0.0, %v2890
      %v2892 = vpop.f32.mrb[0].mxu0
      %2893 = vmatprep.mubr.f32.mxu0 %v1774
      %2894 = vmatmul.mubr.f32.gmra.mrb[0].mxu0 %v1773
      %v2895 = vpop.f32.mrb[0].mxu0
      %v2896 = vadd.f32 0.0, %v2895
      %v2897 = vpop.f32.mrb[0].mxu0
      %2898 = vmatprep.mubr.f32.mxu0 %v1777
      %2899 = vmatmul.mubr.f32.gmra.mrb[0].mxu0 %v1776
      %v2900 = vpop.f32.mrb[0].mxu0
      %v2901 = vadd.f32 0.0, %v2900
      %v2902 = vpop.f32.mrb[0].mxu0
      %2903 = vdwg.mxu0
      %2904 = vmatprep.subr.mxu0 0.0
      %2905 = vmatpush1.msra.mxu0 %v2675
      %2906 = vmatprep.subr.mxu0 0.0
      %2907 = vmatpush1.msra.mxu0 %v2676
      %2908 = vmatprep.subr.mxu0 0.0
      %2909 = vmatpush1.msra.mxu0 %v2677
      %2910 = vmatprep.subr.mxu0 0.0
      %2911 = vmatpush1.msra.mxu0 %v2678
      %2912 = vmatprep.subr.mxu0 0.0
      %2913 = vmatpush1.msra.mxu0 0.0
      %2914 = vmatprep.subr.mxu0 0.0
      %2915 = vmatpush1.msra.mxu0 0.0
      %2916 = vmatprep.subr.mxu0 0.0
      %2917 = vmatpush1.msra.mxu0 0.0
      %2918 = vmatprep.subr.mxu0 0.0
      %2919 = vmatpush1.msra.mxu0 0.0
      %2920 = vmatprep.subr.mxu0 0.0
      %2921 = vmatpush1.msra.mxu0 0.0
      %2922 = vmatprep.subr.mxu0 0.0
      %2923 = vmatpush1.msra.mxu0 0.0
      %2924 = vmatprep.subr.mxu0 0.0
      %2925 = vmatpush1.msra.mxu0 0.0
      %2926 = vmatprep.subr.mxu0 0.0
      %2927 = vmatpush1.msra.mxu0 0.0
      %2928 = vmatprep.subr.mxu0 0.0
      %2929 = vmatpush1.msra.mxu0 0.0
      %2930 = vmatprep.subr.mxu0 0.0
      %2931 = vmatpush1.msra.mxu0 0.0
      %2932 = vmatprep.subr.mxu0 0.0
      %2933 = vmatpush1.msra.mxu0 0.0
      %2934 = vmatprep.subr.mxu0 0.0
      %2935 = vmatpush1.msra.mxu0 0.0
      %2936 = vmatprep.subr.mxu0 0.0
      %2937 = vmatpush1.msra.mxu0 0.0
      %2938 = vmatprep.subr.mxu0 0.0
      %2939 = vmatpush1.msra.mxu0 0.0
      %2940 = vmatprep.subr.mxu0 0.0
      %2941 = vmatpush1.msra.mxu0 0.0
      %2942 = vmatprep.subr.mxu0 0.0
      %2943 = vmatpush1.msra.mxu0 0.0
      %2944 = vmatprep.subr.mxu0 0.0
      %2945 = vmatpush1.msra.mxu0 0.0
      %2946 = vmatprep.subr.mxu0 0.0
      %2947 = vmatpush1.msra.mxu0 0.0
      %2948 = vmatprep.subr.mxu0 0.0
      %2949 = vmatpush1.msra.mxu0 0.0
      %2950 = vmatprep.subr.mxu0 0.0
      %2951 = vmatpush1.msra.mxu0 0.0
      %2952 = vmatprep.subr.mxu0 0.0
      %2953 = vmatpush1.msra.mxu0 0.0
      %2954 = vmatprep.subr.mxu0 0.0
      %2955 = vmatpush1.msra.mxu0 0.0
      %2956 = vmatprep.subr.mxu0 0.0
      %2957 = vmatpush1.msra.mxu0 0.0
      %2958 = vmatprep.subr.mxu0 0.0
      %2959 = vmatpush1.msra.mxu0 0.0
      %2960 = vmatprep.subr.mxu0 0.0
      %2961 = vmatpush1.msra.mxu0 0.0
      %2962 = vmatprep.subr.mxu0 0.0
      %2963 = vmatpush1.msra.mxu0 0.0
      %2964 = vmatprep.subr.mxu0 0.0
      %2965 = vmatpush1.msra.mxu0 0.0
      %2966 = vmatprep.subr.mxu0 0.0
      %2967 = vmatpush1.msra.mxu0 0.0
      %2968 = vmatprep.mubr.f32.mxu0 0.0
      %2969 = vmatmul.mubr.f32.gmra.mrb[0].mxu0 %v1781
      %v2970 = vpop.f32.mrb[0].mxu0
      %v2971 = vadd.f32 %v2746, %v2970
      %v2972 = vpop.f32.mrb[0].mxu0
      %2973 = vmatprep.mubr.f32.mxu0 0.0
      %2974 = vmatmul.mubr.f32.gmra.mrb[0].mxu0 %v1784
      %v2975 = vpop.f32.mrb[0].mxu0
      %v2976 = vadd.f32 %v2751, %v2975
      %v2977 = vpop.f32.mrb[0].mxu0
      %2978 = vmatprep.mubr.f32.mxu0 0.0
      %2979 = vmatmul.mubr.f32.gmra.mrb[0].mxu0 %v1787
      %v2980 = vpop.f32.mrb[0].mxu0
      %v2981 = vadd.f32 %v2756, %v2980
      %v2982 = vpop.f32.mrb[0].mxu0
      %2983 = vmatprep.mubr.f32.mxu0 0.0
      %2984 = vmatmul.mubr.f32.gmra.mrb[0].mxu0 %v1790
      %v2985 = vpop.f32.mrb[0].mxu0
      %v2986 = vadd.f32 %v2761, %v2985
      %v2987 = vpop.f32.mrb[0].mxu0
      %2988 = vmatprep.mubr.f32.mxu0 0.0
      %2989 = vmatmul.mubr.f32.gmra.mrb[0].mxu0 %v1793
      %v2990 = vpop.f32.mrb[0].mxu0
      %v2991 = vadd.f32 %v2766, %v2990
      %v2992 = vpop.f32.mrb[0].mxu0
      %2993 = vmatprep.mubr.f32.mxu0 0.0
      %2994 = vmatmul.mubr.f32.gmra.mrb[0].mxu0 %v1796
      %v2995 = vpop.f32.mrb[0].mxu0
      %v2996 = vadd.f32 %v2771, %v2995
      %v2997 = vpop.f32.mrb[0].mxu0
      %2998 = vmatprep.mubr.f32.mxu0 0.0
      %2999 = vmatmul.mubr.f32.gmra.mrb[0].mxu0 %v1799
      %v3000 = vpop.f32.mrb[0].mxu0
      %v3001 = vadd.f32 %v2776, %v3000
      %v3002 = vpop.f32.mrb[0].mxu0
      %3003 = vmatprep.mubr.f32.mxu0 0.0
      %3004 = vmatmul.mubr.f32.gmra.mrb[0].mxu0 %v1802
      %v3005 = vpop.f32.mrb[0].mxu0
      %v3006 = vadd.f32 %v2781, %v3005
      %v3007 = vpop.f32.mrb[0].mxu0
      %3008 = vmatprep.mubr.f32.mxu0 0.0
      %3009 = vmatmul.mubr.f32.gmra.mrb[0].mxu0 %v1805
      %v3010 = vpop.f32.mrb[0].mxu0
      %v3011 = vadd.f32 %v2786, %v3010
      %v3012 = vpop.f32.mrb[0].mxu0
      %3013 = vmatprep.mubr.f32.mxu0 0.0
      %3014 = vmatmul.mubr.f32.gmra.mrb[0].mxu0 %v1808
      %v3015 = vpop.f32.mrb[0].mxu0
      %v3016 = vadd.f32 %v2791, %v3015
      %v3017 = vpop.f32.mrb[0].mxu0
      %3018 = vmatprep.mubr.f32.mxu0 0.0
      %3019 = vmatmul.mubr.f32.gmra.mrb[0].mxu0 %v1811
      %v3020 = vpop.f32.mrb[0].mxu0
      %v3021 = vadd.f32 %v2796, %v3020
      %v3022 = vpop.f32.mrb[0].mxu0
      %3023 = vmatprep.mubr.f32.mxu0 0.0
      %3024 = vmatmul.mubr.f32.gmra.mrb[0].mxu0 %v1814
      %v3025 = vpop.f32.mrb[0].mxu0
      %v3026 = vadd.f32 %v2801, %v3025
      %v3027 = vpop.f32.mrb[0].mxu0
      %3028 = vmatprep.mubr.f32.mxu0 0.0
      %3029 = vmatmul.mubr.f32.gmra.mrb[0].mxu0 %v1817
      %v3030 = vpop.f32.mrb[0].mxu0
      %v3031 = vadd.f32 %v2806, %v3030
      %v3032 = vpop.f32.mrb[0].mxu0
      %3033 = vmatprep.mubr.f32.mxu0 0.0
      %3034 = vmatmul.mubr.f32.gmra.mrb[0].mxu0 %v1820
      %v3035 = vpop.f32.mrb[0].mxu0
      %v3036 = vadd.f32 %v2811, %v3035
      %v3037 = vpop.f32.mrb[0].mxu0
      %3038 = vmatprep.mubr.f32.mxu0 0.0
      %3039 = vmatmul.mubr.f32.gmra.mrb[0].mxu0 %v1823
      %v3040 = vpop.f32.mrb[0].mxu0
      %v3041 = vadd.f32 %v2816, %v3040
      %v3042 = vpop.f32.mrb[0].mxu0
      %3043 = vmatprep.mubr.f32.mxu0 0.0
      %3044 = vmatmul.mubr.f32.gmra.mrb[0].mxu0 %v1826
      %v3045 = vpop.f32.mrb[0].mxu0
      %v3046 = vadd.f32 %v2821, %v3045
      %v3047 = vpop.f32.mrb[0].mxu0
      %3048 = vmatprep.mubr.f32.mxu0 0.0
      %3049 = vmatmul.mubr.f32.gmra.mrb[0].mxu0 %v1829
      %v3050 = vpop.f32.mrb[0].mxu0
      %v3051 = vadd.f32 %v2826, %v3050
      %v3052 = vpop.f32.mrb[0].mxu0
      %3053 = vmatprep.mubr.f32.mxu0 0.0
      %3054 = vmatmul.mubr.f32.gmra.mrb[0].mxu0 %v1832
      %v3055 = vpop.f32.mrb[0].mxu0
      %v3056 = vadd.f32 %v2831, %v3055
      %v3057 = vpop.f32.mrb[0].mxu0
      %3058 = vmatprep.mubr.f32.mxu0 0.0
      %3059 = vmatmul.mubr.f32.gmra.mrb[0].mxu0 %v1835
      %v3060 = vpop.f32.mrb[0].mxu0
      %v3061 = vadd.f32 %v2836, %v3060
      %v3062 = vpop.f32.mrb[0].mxu0
      %3063 = vmatprep.mubr.f32.mxu0 0.0
      %3064 = vmatmul.mubr.f32.gmra.mrb[0].mxu0 %v1838
      %v3065 = vpop.f32.mrb[0].mxu0
      %v3066 = vadd.f32 %v2841, %v3065
      %v3067 = vpop.f32.mrb[0].mxu0
      %3068 = vmatprep.mubr.f32.mxu0 0.0
      %3069 = vmatmul.mubr.f32.gmra.mrb[0].mxu0 %v1841
      %v3070 = vpop.f32.mrb[0].mxu0
      %v3071 = vadd.f32 %v2846, %v3070
      %v3072 = vpop.f32.mrb[0].mxu0
      %3073 = vmatprep.mubr.f32.mxu0 0.0
      %3074 = vmatmul.mubr.f32.gmra.mrb[0].mxu0 %v1844
      %v3075 = vpop.f32.mrb[0].mxu0
      %v3076 = vadd.f32 %v2851, %v3075
      %v3077 = vpop.f32.mrb[0].mxu0
      %3078 = vmatprep.mubr.f32.mxu0 0.0
      %3079 = vmatmul.mubr.f32.gmra.mrb[0].mxu0 %v1847
      %v3080 = vpop.f32.mrb[0].mxu0
      %v3081 = vadd.f32 %v2856, %v3080
      %v3082 = vpop.f32.mrb[0].mxu0
      %3083 = vmatprep.mubr.f32.mxu0 0.0
      %3084 = vmatmul.mubr.f32.gmra.mrb[0].mxu0 %v1850
      %v3085 = vpop.f32.mrb[0].mxu0
      %v3086 = vadd.f32 %v2861, %v3085
      %v3087 = vpop.f32.mrb[0].mxu0
      %3088 = vmatprep.mubr.f32.mxu0 0.0
      %3089 = vmatmul.mubr.f32.gmra.mrb[0].mxu0 %v1853
      %v3090 = vpop.f32.mrb[0].mxu0
      %v3091 = vadd.f32 %v2866, %v3090
      %v3092 = vpop.f32.mrb[0].mxu0
      %3093 = vmatprep.mubr.f32.mxu0 0.0
      %3094 = vmatmul.mubr.f32.gmra.mrb[0].mxu0 %v1856
      %v3095 = vpop.f32.mrb[0].mxu0
      %v3096 = vadd.f32 %v2871, %v3095
      %v3097 = vpop.f32.mrb[0].mxu0
      %3098 = vmatprep.mubr.f32.mxu0 0.0
      %3099 = vmatmul.mubr.f32.gmra.mrb[0].mxu0 %v1859
      %v3100 = vpop.f32.mrb[0].mxu0
      %v3101 = vadd.f32 %v2876, %v3100
      %v3102 = vpop.f32.mrb[0].mxu0
      %3103 = vmatprep.mubr.f32.mxu0 0.0
      %3104 = vmatmul.mubr.f32.gmra.mrb[0].mxu0 %v1862
      %v3105 = vpop.f32.mrb[0].mxu0
      %v3106 = vadd.f32 %v2881, %v3105
      %v3107 = vpop.f32.mrb[0].mxu0
      %3108 = vmatprep.mubr.f32.mxu0 0.0
      %3109 = vmatmul.mubr.f32.gmra.mrb[0].mxu0 %v1865
      %v3110 = vpop.f32.mrb[0].mxu0
      %v3111 = vadd.f32 %v2886, %v3110
      %v3112 = vpop.f32.mrb[0].mxu0
      %3113 = vmatprep.mubr.f32.mxu0 0.0
      %3114 = vmatmul.mubr.f32.gmra.mrb[0].mxu0 %v1868
      %v3115 = vpop.f32.mrb[0].mxu0
      %v3116 = vadd.f32 %v2891, %v3115
      %v3117 = vpop.f32.mrb[0].mxu0
      %3118 = vmatprep.mubr.f32.mxu0 0.0
      %3119 = vmatmul.mubr.f32.gmra.mrb[0].mxu0 %v1871
      %v3120 = vpop.f32.mrb[0].mxu0
      %v3121 = vadd.f32 %v2896, %v3120
      %v3122 = vpop.f32.mrb[0].mxu0
      %3123 = vmatprep.mubr.f32.mxu0 0.0
      %3124 = vmatmul.mubr.f32.gmra.mrb[0].mxu0 %v1874
      %v3125 = vpop.f32.mrb[0].mxu0
      %v3126 = vadd.f32 %v2901, %v3125
      %v3127 = vpop.f32.mrb[0].mxu0
      %3128 = vdwg.mxu0
      %v3129 = vld [vmem:[%s6] sm:$0x1]
      %v3130 = vlaneseq
      %v3131 = vshrl.u32 %v3130, 7
      %v3132 = vsub.s32 0, %v3131
      %v3133 = vrot.slane %v3129, %v3132
      %v3134 = vadd.f32 %v2168, %v3133
      %v3135 = vadd.f32 %v2173, %v3133
      %v3136 = vadd.f32 %v2178, %v3133
      %v3137 = vadd.f32 %v2183, %v3133
      %v3138 = vadd.f32 %v2188, %v3133
      %v3139 = vadd.f32 %v2193, %v3133
      %v3140 = vadd.f32 %v2198, %v3133
      %v3141 = vadd.f32 %v2203, %v3133
      %v3142 = vadd.f32 %v2208, %v3133
      %v3143 = vadd.f32 %v2213, %v3133
      %v3144 = vadd.f32 %v2218, %v3133
      %v3145 = vadd.f32 %v2223, %v3133
      %v3146 = vadd.f32 %v2228, %v3133
      %v3147 = vadd.f32 %v2233, %v3133
      %v3148 = vadd.f32 %v2238, %v3133
      %v3149 = vadd.f32 %v2243, %v3133
      %v3150 = vadd.f32 %v2248, %v3133
      %v3151 = vadd.f32 %v2253, %v3133
      %v3152 = vadd.f32 %v2258, %v3133
      %v3153 = vadd.f32 %v2263, %v3133
      %v3154 = vadd.f32 %v2268, %v3133
      %v3155 = vadd.f32 %v2273, %v3133
      %v3156 = vadd.f32 %v2278, %v3133
      %v3157 = vadd.f32 %v2283, %v3133
      %v3158 = vadd.f32 %v2288, %v3133
      %v3159 = vadd.f32 %v2293, %v3133
      %v3160 = vadd.f32 %v2298, %v3133
      %v3161 = vadd.f32 %v2303, %v3133
      %v3162 = vadd.f32 %v2308, %v3133
      %v3163 = vadd.f32 %v2313, %v3133
      %v3164 = vadd.f32 %v2318, %v3133
      %v3165 = vadd.f32 %v2323, %v3133
      %v3166 = vadd.f32 %v2971, %v3133
      %v3167 = vadd.f32 %v2976, %v3133
      %v3168 = vadd.f32 %v2981, %v3133
      %v3169 = vadd.f32 %v2986, %v3133
      %v3170 = vadd.f32 %v2991, %v3133
      %v3171 = vadd.f32 %v2996, %v3133
      %v3172 = vadd.f32 %v3001, %v3133
      %v3173 = vadd.f32 %v3006, %v3133
      %v3174 = vadd.f32 %v3011, %v3133
      %v3175 = vadd.f32 %v3016, %v3133
      %v3176 = vadd.f32 %v3021, %v3133
      %v3177 = vadd.f32 %v3026, %v3133
      %v3178 = vadd.f32 %v3031, %v3133
      %v3179 = vadd.f32 %v3036, %v3133
      %v3180 = vadd.f32 %v3041, %v3133
      %v3181 = vadd.f32 %v3046, %v3133
      %v3182 = vadd.f32 %v3051, %v3133
      %v3183 = vadd.f32 %v3056, %v3133
      %v3184 = vadd.f32 %v3061, %v3133
      %v3185 = vadd.f32 %v3066, %v3133
      %v3186 = vadd.f32 %v3071, %v3133
      %v3187 = vadd.f32 %v3076, %v3133
      %v3188 = vadd.f32 %v3081, %v3133
      %v3189 = vadd.f32 %v3086, %v3133
      %v3190 = vadd.f32 %v3091, %v3133
      %v3191 = vadd.f32 %v3096, %v3133
      %v3192 = vadd.f32 %v3101, %v3133
      %v3193 = vadd.f32 %v3106, %v3133
      %v3194 = vadd.f32 %v3111, %v3133
      %v3195 = vadd.f32 %v3116, %v3133
      %v3196 = vadd.f32 %v3121, %v3133
      %v3197 = vadd.f32 %v3126, %v3133
      %v3198 = vsel %vm351, %v3134, 0.0
      %3199 = vadd.xlane.f32.xlu0 %v3198
      %v3200 = vpop.xlane.xlu0 %3199
      %v3201 = vsel %vm351, %v3135, 0.0
      %3202 = vadd.xlane.f32.xlu0 %v3201
      %v3203 = vpop.xlane.xlu0 %3202
      %v3204 = vsel %vm351, %v3136, 0.0
      %3205 = vadd.xlane.f32.xlu0 %v3204
      %v3206 = vpop.xlane.xlu0 %3205
      %v3207 = vsel %vm351, %v3137, 0.0
      %3208 = vadd.xlane.f32.xlu0 %v3207
      %v3209 = vpop.xlane.xlu0 %3208
      %v3210 = vsel %vm351, %v3138, 0.0
      %3211 = vadd.xlane.f32.xlu0 %v3210
      %v3212 = vpop.xlane.xlu0 %3211
      %v3213 = vsel %vm351, %v3139, 0.0
      %3214 = vadd.xlane.f32.xlu0 %v3213
      %v3215 = vpop.xlane.xlu0 %3214
      %v3216 = vsel %vm351, %v3140, 0.0
      %3217 = vadd.xlane.f32.xlu0 %v3216
      %v3218 = vpop.xlane.xlu0 %3217
      %v3219 = vsel %vm351, %v3141, 0.0
      %3220 = vadd.xlane.f32.xlu0 %v3219
      %v3221 = vpop.xlane.xlu0 %3220
      %v3222 = vsel %vm351, %v3142, 0.0
      %3223 = vadd.xlane.f32.xlu0 %v3222
      %v3224 = vpop.xlane.xlu0 %3223
      %v3225 = vsel %vm351, %v3143, 0.0
      %3226 = vadd.xlane.f32.xlu0 %v3225
      %v3227 = vpop.xlane.xlu0 %3226
      %v3228 = vsel %vm351, %v3144, 0.0
      %3229 = vadd.xlane.f32.xlu0 %v3228
      %v3230 = vpop.xlane.xlu0 %3229
      %v3231 = vsel %vm351, %v3145, 0.0
      %3232 = vadd.xlane.f32.xlu0 %v3231
      %v3233 = vpop.xlane.xlu0 %3232
      %v3234 = vsel %vm351, %v3146, 0.0
      %3235 = vadd.xlane.f32.xlu0 %v3234
      %v3236 = vpop.xlane.xlu0 %3235
      %v3237 = vsel %vm351, %v3147, 0.0
      %3238 = vadd.xlane.f32.xlu0 %v3237
      %v3239 = vpop.xlane.xlu0 %3238
      %v3240 = vsel %vm351, %v3148, 0.0
      %3241 = vadd.xlane.f32.xlu0 %v3240
      %v3242 = vpop.xlane.xlu0 %3241
      %v3243 = vsel %vm351, %v3149, 0.0
      %3244 = vadd.xlane.f32.xlu0 %v3243
      %v3245 = vpop.xlane.xlu0 %3244
      %v3246 = vsel %vm351, %v3150, 0.0
      %3247 = vadd.xlane.f32.xlu0 %v3246
      %v3248 = vpop.xlane.xlu0 %3247
      %v3249 = vsel %vm351, %v3151, 0.0
      %3250 = vadd.xlane.f32.xlu0 %v3249
      %v3251 = vpop.xlane.xlu0 %3250
      %v3252 = vsel %vm351, %v3152, 0.0
      %3253 = vadd.xlane.f32.xlu0 %v3252
      %v3254 = vpop.xlane.xlu0 %3253
      %v3255 = vsel %vm351, %v3153, 0.0
      %3256 = vadd.xlane.f32.xlu0 %v3255
      %v3257 = vpop.xlane.xlu0 %3256
      %v3258 = vsel %vm351, %v3154, 0.0
      %3259 = vadd.xlane.f32.xlu0 %v3258
      %v3260 = vpop.xlane.xlu0 %3259
      %v3261 = vsel %vm351, %v3155, 0.0
      %3262 = vadd.xlane.f32.xlu0 %v3261
      %v3263 = vpop.xlane.xlu0 %3262
      %v3264 = vsel %vm351, %v3156, 0.0
      %3265 = vadd.xlane.f32.xlu0 %v3264
      %v3266 = vpop.xlane.xlu0 %3265
      %v3267 = vsel %vm351, %v3157, 0.0
      %3268 = vadd.xlane.f32.xlu0 %v3267
      %v3269 = vpop.xlane.xlu0 %3268
      %v3270 = vsel %vm351, %v3158, 0.0
      %3271 = vadd.xlane.f32.xlu0 %v3270
      %v3272 = vpop.xlane.xlu0 %3271
      %v3273 = vsel %vm351, %v3159, 0.0
      %3274 = vadd.xlane.f32.xlu0 %v3273
      %v3275 = vpop.xlane.xlu0 %3274
      %v3276 = vsel %vm351, %v3160, 0.0
      %3277 = vadd.xlane.f32.xlu0 %v3276
      %v3278 = vpop.xlane.xlu0 %3277
      %v3279 = vsel %vm351, %v3161, 0.0
      %3280 = vadd.xlane.f32.xlu0 %v3279
      %v3281 = vpop.xlane.xlu0 %3280
      %v3282 = vsel %vm351, %v3162, 0.0
      %3283 = vadd.xlane.f32.xlu0 %v3282
      %v3284 = vpop.xlane.xlu0 %3283
      %v3285 = vsel %vm351, %v3163, 0.0
      %3286 = vadd.xlane.f32.xlu0 %v3285
      %v3287 = vpop.xlane.xlu0 %3286
      %v3288 = vsel %vm351, %v3164, 0.0
      %3289 = vadd.xlane.f32.xlu0 %v3288
      %v3290 = vpop.xlane.xlu0 %3289
      %v3291 = vsel %vm351, %v3165, 0.0
      %3292 = vadd.xlane.f32.xlu0 %v3291
      %v3293 = vpop.xlane.xlu0 %3292
      %v3294 = vsel %vm351, %v3166, 0.0
      %3295 = vadd.xlane.f32.xlu0 %v3294
      %v3296 = vpop.xlane.xlu0 %3295
      %v3297 = vsel %vm351, %v3167, 0.0
      %3298 = vadd.xlane.f32.xlu0 %v3297
      %v3299 = vpop.xlane.xlu0 %3298
      %v3300 = vsel %vm351, %v3168, 0.0
      %3301 = vadd.xlane.f32.xlu0 %v3300
      %v3302 = vpop.xlane.xlu0 %3301
      %v3303 = vsel %vm351, %v3169, 0.0
      %3304 = vadd.xlane.f32.xlu0 %v3303
      %v3305 = vpop.xlane.xlu0 %3304
      %v3306 = vsel %vm351, %v3170, 0.0
      %3307 = vadd.xlane.f32.xlu0 %v3306
      %v3308 = vpop.xlane.xlu0 %3307
      %v3309 = vsel %vm351, %v3171, 0.0
      %3310 = vadd.xlane.f32.xlu0 %v3309
      %v3311 = vpop.xlane.xlu0 %3310
      %v3312 = vsel %vm351, %v3172, 0.0
      %3313 = vadd.xlane.f32.xlu0 %v3312
      %v3314 = vpop.xlane.xlu0 %3313
      %v3315 = vsel %vm351, %v3173, 0.0
      %3316 = vadd.xlane.f32.xlu0 %v3315
      %v3317 = vpop.xlane.xlu0 %3316
      %v3318 = vsel %vm351, %v3174, 0.0
      %3319 = vadd.xlane.f32.xlu0 %v3318
      %v3320 = vpop.xlane.xlu0 %3319
      %v3321 = vsel %vm351, %v3175, 0.0
      %3322 = vadd.xlane.f32.xlu0 %v3321
      %v3323 = vpop.xlane.xlu0 %3322
      %v3324 = vsel %vm351, %v3176, 0.0
      %3325 = vadd.xlane.f32.xlu0 %v3324
      %v3326 = vpop.xlane.xlu0 %3325
      %v3327 = vsel %vm351, %v3177, 0.0
      %3328 = vadd.xlane.f32.xlu0 %v3327
      %v3329 = vpop.xlane.xlu0 %3328
      %v3330 = vsel %vm351, %v3178, 0.0
      %3331 = vadd.xlane.f32.xlu0 %v3330
      %v3332 = vpop.xlane.xlu0 %3331
      %v3333 = vsel %vm351, %v3179, 0.0
      %3334 = vadd.xlane.f32.xlu0 %v3333
      %v3335 = vpop.xlane.xlu0 %3334
      %v3336 = vsel %vm351, %v3180, 0.0
      %3337 = vadd.xlane.f32.xlu0 %v3336
      %v3338 = vpop.xlane.xlu0 %3337
      %v3339 = vsel %vm351, %v3181, 0.0
      %3340 = vadd.xlane.f32.xlu0 %v3339
      %v3341 = vpop.xlane.xlu0 %3340
      %v3342 = vsel %vm351, %v3182, 0.0
      %3343 = vadd.xlane.f32.xlu0 %v3342
      %v3344 = vpop.xlane.xlu0 %3343
      %v3345 = vsel %vm351, %v3183, 0.0
      %3346 = vadd.xlane.f32.xlu0 %v3345
      %v3347 = vpop.xlane.xlu0 %3346
      %v3348 = vsel %vm351, %v3184, 0.0
      %3349 = vadd.xlane.f32.xlu0 %v3348
      %v3350 = vpop.xlane.xlu0 %3349
      %v3351 = vsel %vm351, %v3185, 0.0
      %3352 = vadd.xlane.f32.xlu0 %v3351
      %v3353 = vpop.xlane.xlu0 %3352
      %v3354 = vsel %vm351, %v3186, 0.0
      %3355 = vadd.xlane.f32.xlu0 %v3354
      %v3356 = vpop.xlane.xlu0 %3355
      %v3357 = vsel %vm351, %v3187, 0.0
      %3358 = vadd.xlane.f32.xlu0 %v3357
      %v3359 = vpop.xlane.xlu0 %3358
      %v3360 = vsel %vm351, %v3188, 0.0
      %3361 = vadd.xlane.f32.xlu0 %v3360
      %v3362 = vpop.xlane.xlu0 %3361
      %v3363 = vsel %vm351, %v3189, 0.0
      %3364 = vadd.xlane.f32.xlu0 %v3363
      %v3365 = vpop.xlane.xlu0 %3364
      %v3366 = vsel %vm351, %v3190, 0.0
      %3367 = vadd.xlane.f32.xlu0 %v3366
      %v3368 = vpop.xlane.xlu0 %3367
      %v3369 = vsel %vm351, %v3191, 0.0
      %3370 = vadd.xlane.f32.xlu0 %v3369
      %v3371 = vpop.xlane.xlu0 %3370
      %v3372 = vsel %vm351, %v3192, 0.0
      %3373 = vadd.xlane.f32.xlu0 %v3372
      %v3374 = vpop.xlane.xlu0 %3373
      %v3375 = vsel %vm351, %v3193, 0.0
      %3376 = vadd.xlane.f32.xlu0 %v3375
      %v3377 = vpop.xlane.xlu0 %3376
      %v3378 = vsel %vm351, %v3194, 0.0
      %3379 = vadd.xlane.f32.xlu0 %v3378
      %v3380 = vpop.xlane.xlu0 %3379
      %v3381 = vsel %vm351, %v3195, 0.0
      %3382 = vadd.xlane.f32.xlu0 %v3381
      %v3383 = vpop.xlane.xlu0 %3382
      %v3384 = vsel %vm351, %v3196, 0.0
      %3385 = vadd.xlane.f32.xlu0 %v3384
      %v3386 = vpop.xlane.xlu0 %3385
      %v3387 = vsel %vm351, %v3197, 0.0
      %3388 = vadd.xlane.f32.xlu0 %v3387
      %v3389 = vpop.xlane.xlu0 %3388
      %v3390 = vmul.f32 %v3200, %v544
      %v3391 = vmul.f32 %v3203, %v544
      %v3392 = vmul.f32 %v3206, %v544
      %v3393 = vmul.f32 %v3209, %v544
      %v3394 = vmul.f32 %v3212, %v544
      %v3395 = vmul.f32 %v3215, %v544
      %v3396 = vmul.f32 %v3218, %v544
      %v3397 = vmul.f32 %v3221, %v544
      %v3398 = vmul.f32 %v3224, %v544
      %v3399 = vmul.f32 %v3227, %v544
      %v3400 = vmul.f32 %v3230, %v544
      %v3401 = vmul.f32 %v3233, %v544
      %v3402 = vmul.f32 %v3236, %v544
      %v3403 = vmul.f32 %v3239, %v544
      %v3404 = vmul.f32 %v3242, %v544
      %v3405 = vmul.f32 %v3245, %v544
      %v3406 = vmul.f32 %v3248, %v544
      %v3407 = vmul.f32 %v3251, %v544
      %v3408 = vmul.f32 %v3254, %v544
      %v3409 = vmul.f32 %v3257, %v544
      %v3410 = vmul.f32 %v3260, %v544
      %v3411 = vmul.f32 %v3263, %v544
      %v3412 = vmul.f32 %v3266, %v544
      %v3413 = vmul.f32 %v3269, %v544
      %v3414 = vmul.f32 %v3272, %v544
      %v3415 = vmul.f32 %v3275, %v544
      %v3416 = vmul.f32 %v3278, %v544
      %v3417 = vmul.f32 %v3281, %v544
      %v3418 = vmul.f32 %v3284, %v544
      %v3419 = vmul.f32 %v3287, %v544
      %v3420 = vmul.f32 %v3290, %v544
      %v3421 = vmul.f32 %v3293, %v544
      %v3422 = vmul.f32 %v3296, %v544
      %v3423 = vmul.f32 %v3299, %v544
      %v3424 = vmul.f32 %v3302, %v544
      %v3425 = vmul.f32 %v3305, %v544
      %v3426 = vmul.f32 %v3308, %v544
      %v3427 = vmul.f32 %v3311, %v544
      %v3428 = vmul.f32 %v3314, %v544
      %v3429 = vmul.f32 %v3317, %v544
      %v3430 = vmul.f32 %v3320, %v544
      %v3431 = vmul.f32 %v3323, %v544
      %v3432 = vmul.f32 %v3326, %v544
      %v3433 = vmul.f32 %v3329, %v544
      %v3434 = vmul.f32 %v3332, %v544
      %v3435 = vmul.f32 %v3335, %v544
      %v3436 = vmul.f32 %v3338, %v544
      %v3437 = vmul.f32 %v3341, %v544
      %v3438 = vmul.f32 %v3344, %v544
      %v3439 = vmul.f32 %v3347, %v544
      %v3440 = vmul.f32 %v3350, %v544
      %v3441 = vmul.f32 %v3353, %v544
      %v3442 = vmul.f32 %v3356, %v544
      %v3443 = vmul.f32 %v3359, %v544
      %v3444 = vmul.f32 %v3362, %v544
      %v3445 = vmul.f32 %v3365, %v544
      %v3446 = vmul.f32 %v3368, %v544
      %v3447 = vmul.f32 %v3371, %v544
      %v3448 = vmul.f32 %v3374, %v544
      %v3449 = vmul.f32 %v3377, %v544
      %v3450 = vmul.f32 %v3380, %v544
      %v3451 = vmul.f32 %v3383, %v544
      %v3452 = vmul.f32 %v3386, %v544
      %v3453 = vmul.f32 %v3389, %v544
      %v3454 = vsub.f32 %v3134, %v3390
      %v3455 = vsub.f32 %v3135, %v3391
      %v3456 = vsub.f32 %v3136, %v3392
      %v3457 = vsub.f32 %v3137, %v3393
      %v3458 = vsub.f32 %v3138, %v3394
      %v3459 = vsub.f32 %v3139, %v3395
      %v3460 = vsub.f32 %v3140, %v3396
      %v3461 = vsub.f32 %v3141, %v3397
      %v3462 = vsub.f32 %v3142, %v3398
      %v3463 = vsub.f32 %v3143, %v3399
      %v3464 = vsub.f32 %v3144, %v3400
      %v3465 = vsub.f32 %v3145, %v3401
      %v3466 = vsub.f32 %v3146, %v3402
      %v3467 = vsub.f32 %v3147, %v3403
      %v3468 = vsub.f32 %v3148, %v3404
      %v3469 = vsub.f32 %v3149, %v3405
      %v3470 = vsub.f32 %v3150, %v3406
      %v3471 = vsub.f32 %v3151, %v3407
      %v3472 = vsub.f32 %v3152, %v3408
      %v3473 = vsub.f32 %v3153, %v3409
      %v3474 = vsub.f32 %v3154, %v3410
      %v3475 = vsub.f32 %v3155, %v3411
      %v3476 = vsub.f32 %v3156, %v3412
      %v3477 = vsub.f32 %v3157, %v3413
      %v3478 = vsub.f32 %v3158, %v3414
      %v3479 = vsub.f32 %v3159, %v3415
      %v3480 = vsub.f32 %v3160, %v3416
      %v3481 = vsub.f32 %v3161, %v3417
      %v3482 = vsub.f32 %v3162, %v3418
      %v3483 = vsub.f32 %v3163, %v3419
      %v3484 = vsub.f32 %v3164, %v3420
      %v3485 = vsub.f32 %v3165, %v3421
      %v3486 = vsub.f32 %v3166, %v3422
      %v3487 = vsub.f32 %v3167, %v3423
      %v3488 = vsub.f32 %v3168, %v3424
      %v3489 = vsub.f32 %v3169, %v3425
      %v3490 = vsub.f32 %v3170, %v3426
      %v3491 = vsub.f32 %v3171, %v3427
      %v3492 = vsub.f32 %v3172, %v3428
      %v3493 = vsub.f32 %v3173, %v3429
      %v3494 = vsub.f32 %v3174, %v3430
      %v3495 = vsub.f32 %v3175, %v3431
      %v3496 = vsub.f32 %v3176, %v3432
      %v3497 = vsub.f32 %v3177, %v3433
      %v3498 = vsub.f32 %v3178, %v3434
      %v3499 = vsub.f32 %v3179, %v3435
      %v3500 = vsub.f32 %v3180, %v3436
      %v3501 = vsub.f32 %v3181, %v3437
      %v3502 = vsub.f32 %v3182, %v3438
      %v3503 = vsub.f32 %v3183, %v3439
      %v3504 = vsub.f32 %v3184, %v3440
      %v3505 = vsub.f32 %v3185, %v3441
      %v3506 = vsub.f32 %v3186, %v3442
      %v3507 = vsub.f32 %v3187, %v3443
      %v3508 = vsub.f32 %v3188, %v3444
      %v3509 = vsub.f32 %v3189, %v3445
      %v3510 = vsub.f32 %v3190, %v3446
      %v3511 = vsub.f32 %v3191, %v3447
      %v3512 = vsub.f32 %v3192, %v3448
      %v3513 = vsub.f32 %v3193, %v3449
      %v3514 = vsub.f32 %v3194, %v3450
      %v3515 = vsub.f32 %v3195, %v3451
      %v3516 = vsub.f32 %v3196, %v3452
      %v3517 = vsub.f32 %v3197, %v3453
      %v3518 = vmul.f32 %v3454, %v3454
      %v3519 = vmul.f32 %v3455, %v3455
      %v3520 = vmul.f32 %v3456, %v3456
      %v3521 = vmul.f32 %v3457, %v3457
      %v3522 = vmul.f32 %v3458, %v3458
      %v3523 = vmul.f32 %v3459, %v3459
      %v3524 = vmul.f32 %v3460, %v3460
      %v3525 = vmul.f32 %v3461, %v3461
      %v3526 = vmul.f32 %v3462, %v3462
      %v3527 = vmul.f32 %v3463, %v3463
      %v3528 = vmul.f32 %v3464, %v3464
      %v3529 = vmul.f32 %v3465, %v3465
      %v3530 = vmul.f32 %v3466, %v3466
      %v3531 = vmul.f32 %v3467, %v3467
      %v3532 = vmul.f32 %v3468, %v3468
      %v3533 = vmul.f32 %v3469, %v3469
      %v3534 = vmul.f32 %v3470, %v3470
      %v3535 = vmul.f32 %v3471, %v3471
      %v3536 = vmul.f32 %v3472, %v3472
      %v3537 = vmul.f32 %v3473, %v3473
      %v3538 = vmul.f32 %v3474, %v3474
      %v3539 = vmul.f32 %v3475, %v3475
      %v3540 = vmul.f32 %v3476, %v3476
      %v3541 = vmul.f32 %v3477, %v3477
      %v3542 = vmul.f32 %v3478, %v3478
      %v3543 = vmul.f32 %v3479, %v3479
      %v3544 = vmul.f32 %v3480, %v3480
      %v3545 = vmul.f32 %v3481, %v3481
      %v3546 = vmul.f32 %v3482, %v3482
      %v3547 = vmul.f32 %v3483, %v3483
      %v3548 = vmul.f32 %v3484, %v3484
      %v3549 = vmul.f32 %v3485, %v3485
      %v3550 = vmul.f32 %v3486, %v3486
      %v3551 = vmul.f32 %v3487, %v3487
      %v3552 = vmul.f32 %v3488, %v3488
      %v3553 = vmul.f32 %v3489, %v3489
      %v3554 = vmul.f32 %v3490, %v3490
      %v3555 = vmul.f32 %v3491, %v3491
      %v3556 = vmul.f32 %v3492, %v3492
      %v3557 = vmul.f32 %v3493, %v3493
      %v3558 = vmul.f32 %v3494, %v3494
      %v3559 = vmul.f32 %v3495, %v3495
      %v3560 = vmul.f32 %v3496, %v3496
      %v3561 = vmul.f32 %v3497, %v3497
      %v3562 = vmul.f32 %v3498, %v3498
      %v3563 = vmul.f32 %v3499, %v3499
      %v3564 = vmul.f32 %v3500, %v3500
      %v3565 = vmul.f32 %v3501, %v3501
      %v3566 = vmul.f32 %v3502, %v3502
      %v3567 = vmul.f32 %v3503, %v3503
      %v3568 = vmul.f32 %v3504, %v3504
      %v3569 = vmul.f32 %v3505, %v3505
      %v3570 = vmul.f32 %v3506, %v3506
      %v3571 = vmul.f32 %v3507, %v3507
      %v3572 = vmul.f32 %v3508, %v3508
      %v3573 = vmul.f32 %v3509, %v3509
      %v3574 = vmul.f32 %v3510, %v3510
      %v3575 = vmul.f32 %v3511, %v3511
      %v3576 = vmul.f32 %v3512, %v3512
      %v3577 = vmul.f32 %v3513, %v3513
      %v3578 = vmul.f32 %v3514, %v3514
      %v3579 = vmul.f32 %v3515, %v3515
      %v3580 = vmul.f32 %v3516, %v3516
      %v3581 = vmul.f32 %v3517, %v3517
      %v3582 = vsel %vm351, %v3518, 0.0
      %3583 = vadd.xlane.f32.xlu0 %v3582
      %v3584 = vpop.xlane.xlu0 %3583
      %v3585 = vsel %vm351, %v3519, 0.0
      %3586 = vadd.xlane.f32.xlu0 %v3585
      %v3587 = vpop.xlane.xlu0 %3586
      %v3588 = vsel %vm351, %v3520, 0.0
      %3589 = vadd.xlane.f32.xlu0 %v3588
      %v3590 = vpop.xlane.xlu0 %3589
      %v3591 = vsel %vm351, %v3521, 0.0
      %3592 = vadd.xlane.f32.xlu0 %v3591
      %v3593 = vpop.xlane.xlu0 %3592
      %v3594 = vsel %vm351, %v3522, 0.0
      %3595 = vadd.xlane.f32.xlu0 %v3594
      %v3596 = vpop.xlane.xlu0 %3595
      %v3597 = vsel %vm351, %v3523, 0.0
      %3598 = vadd.xlane.f32.xlu0 %v3597
      %v3599 = vpop.xlane.xlu0 %3598
      %v3600 = vsel %vm351, %v3524, 0.0
      %3601 = vadd.xlane.f32.xlu0 %v3600
      %v3602 = vpop.xlane.xlu0 %3601
      %v3603 = vsel %vm351, %v3525, 0.0
      %3604 = vadd.xlane.f32.xlu0 %v3603
      %v3605 = vpop.xlane.xlu0 %3604
      %v3606 = vsel %vm351, %v3526, 0.0
      %3607 = vadd.xlane.f32.xlu0 %v3606
      %v3608 = vpop.xlane.xlu0 %3607
      %v3609 = vsel %vm351, %v3527, 0.0
      %3610 = vadd.xlane.f32.xlu0 %v3609
      %v3611 = vpop.xlane.xlu0 %3610
      %v3612 = vsel %vm351, %v3528, 0.0
      %3613 = vadd.xlane.f32.xlu0 %v3612
      %v3614 = vpop.xlane.xlu0 %3613
      %v3615 = vsel %vm351, %v3529, 0.0
      %3616 = vadd.xlane.f32.xlu0 %v3615
      %v3617 = vpop.xlane.xlu0 %3616
      %v3618 = vsel %vm351, %v3530, 0.0
      %3619 = vadd.xlane.f32.xlu0 %v3618
      %v3620 = vpop.xlane.xlu0 %3619
      %v3621 = vsel %vm351, %v3531, 0.0
      %3622 = vadd.xlane.f32.xlu0 %v3621
      %v3623 = vpop.xlane.xlu0 %3622
      %v3624 = vsel %vm351, %v3532, 0.0
      %3625 = vadd.xlane.f32.xlu0 %v3624
      %v3626 = vpop.xlane.xlu0 %3625
      %v3627 = vsel %vm351, %v3533, 0.0
      %3628 = vadd.xlane.f32.xlu0 %v3627
      %v3629 = vpop.xlane.xlu0 %3628
      %v3630 = vsel %vm351, %v3534, 0.0
      %3631 = vadd.xlane.f32.xlu0 %v3630
      %v3632 = vpop.xlane.xlu0 %3631
      %v3633 = vsel %vm351, %v3535, 0.0
      %3634 = vadd.xlane.f32.xlu0 %v3633
      %v3635 = vpop.xlane.xlu0 %3634
      %v3636 = vsel %vm351, %v3536, 0.0
      %3637 = vadd.xlane.f32.xlu0 %v3636
      %v3638 = vpop.xlane.xlu0 %3637
      %v3639 = vsel %vm351, %v3537, 0.0
      %3640 = vadd.xlane.f32.xlu0 %v3639
      %v3641 = vpop.xlane.xlu0 %3640
      %v3642 = vsel %vm351, %v3538, 0.0
      %3643 = vadd.xlane.f32.xlu0 %v3642
      %v3644 = vpop.xlane.xlu0 %3643
      %v3645 = vsel %vm351, %v3539, 0.0
      %3646 = vadd.xlane.f32.xlu0 %v3645
      %v3647 = vpop.xlane.xlu0 %3646
      %v3648 = vsel %vm351, %v3540, 0.0
      %3649 = vadd.xlane.f32.xlu0 %v3648
      %v3650 = vpop.xlane.xlu0 %3649
      %v3651 = vsel %vm351, %v3541, 0.0
      %3652 = vadd.xlane.f32.xlu0 %v3651
      %v3653 = vpop.xlane.xlu0 %3652
      %v3654 = vsel %vm351, %v3542, 0.0
      %3655 = vadd.xlane.f32.xlu0 %v3654
      %v3656 = vpop.xlane.xlu0 %3655
      %v3657 = vsel %vm351, %v3543, 0.0
      %3658 = vadd.xlane.f32.xlu0 %v3657
      %v3659 = vpop.xlane.xlu0 %3658
      %v3660 = vsel %vm351, %v3544, 0.0
      %3661 = vadd.xlane.f32.xlu0 %v3660
      %v3662 = vpop.xlane.xlu0 %3661
      %v3663 = vsel %vm351, %v3545, 0.0
      %3664 = vadd.xlane.f32.xlu0 %v3663
      %v3665 = vpop.xlane.xlu0 %3664
      %v3666 = vsel %vm351, %v3546, 0.0
      %3667 = vadd.xlane.f32.xlu0 %v3666
      %v3668 = vpop.xlane.xlu0 %3667
      %v3669 = vsel %vm351, %v3547, 0.0
      %3670 = vadd.xlane.f32.xlu0 %v3669
      %v3671 = vpop.xlane.xlu0 %3670
      %v3672 = vsel %vm351, %v3548, 0.0
      %3673 = vadd.xlane.f32.xlu0 %v3672
      %v3674 = vpop.xlane.xlu0 %3673
      %v3675 = vsel %vm351, %v3549, 0.0
      %3676 = vadd.xlane.f32.xlu0 %v3675
      %v3677 = vpop.xlane.xlu0 %3676
      %v3678 = vsel %vm351, %v3550, 0.0
      %3679 = vadd.xlane.f32.xlu0 %v3678
      %v3680 = vpop.xlane.xlu0 %3679
      %v3681 = vsel %vm351, %v3551, 0.0
      %3682 = vadd.xlane.f32.xlu0 %v3681
      %v3683 = vpop.xlane.xlu0 %3682
      %v3684 = vsel %vm351, %v3552, 0.0
      %3685 = vadd.xlane.f32.xlu0 %v3684
      %v3686 = vpop.xlane.xlu0 %3685
      %v3687 = vsel %vm351, %v3553, 0.0
      %3688 = vadd.xlane.f32.xlu0 %v3687
      %v3689 = vpop.xlane.xlu0 %3688
      %v3690 = vsel %vm351, %v3554, 0.0
      %3691 = vadd.xlane.f32.xlu0 %v3690
      %v3692 = vpop.xlane.xlu0 %3691
      %v3693 = vsel %vm351, %v3555, 0.0
      %3694 = vadd.xlane.f32.xlu0 %v3693
      %v3695 = vpop.xlane.xlu0 %3694
      %v3696 = vsel %vm351, %v3556, 0.0
      %3697 = vadd.xlane.f32.xlu0 %v3696
      %v3698 = vpop.xlane.xlu0 %3697
      %v3699 = vsel %vm351, %v3557, 0.0
      %3700 = vadd.xlane.f32.xlu0 %v3699
      %v3701 = vpop.xlane.xlu0 %3700
      %v3702 = vsel %vm351, %v3558, 0.0
      %3703 = vadd.xlane.f32.xlu0 %v3702
      %v3704 = vpop.xlane.xlu0 %3703
      %v3705 = vsel %vm351, %v3559, 0.0
      %3706 = vadd.xlane.f32.xlu0 %v3705
      %v3707 = vpop.xlane.xlu0 %3706
      %v3708 = vsel %vm351, %v3560, 0.0
      %3709 = vadd.xlane.f32.xlu0 %v3708
      %v3710 = vpop.xlane.xlu0 %3709
      %v3711 = vsel %vm351, %v3561, 0.0
      %3712 = vadd.xlane.f32.xlu0 %v3711
      %v3713 = vpop.xlane.xlu0 %3712
      %v3714 = vsel %vm351, %v3562, 0.0
      %3715 = vadd.xlane.f32.xlu0 %v3714
      %v3716 = vpop.xlane.xlu0 %3715
      %v3717 = vsel %vm351, %v3563, 0.0
      %3718 = vadd.xlane.f32.xlu0 %v3717
      %v3719 = vpop.xlane.xlu0 %3718
      %v3720 = vsel %vm351, %v3564, 0.0
      %3721 = vadd.xlane.f32.xlu0 %v3720
      %v3722 = vpop.xlane.xlu0 %3721
      %v3723 = vsel %vm351, %v3565, 0.0
      %3724 = vadd.xlane.f32.xlu0 %v3723
      %v3725 = vpop.xlane.xlu0 %3724
      %v3726 = vsel %vm351, %v3566, 0.0
      %3727 = vadd.xlane.f32.xlu0 %v3726
      %v3728 = vpop.xlane.xlu0 %3727
      %v3729 = vsel %vm351, %v3567, 0.0
      %3730 = vadd.xlane.f32.xlu0 %v3729
      %v3731 = vpop.xlane.xlu0 %3730
      %v3732 = vsel %vm351, %v3568, 0.0
      %3733 = vadd.xlane.f32.xlu0 %v3732
      %v3734 = vpop.xlane.xlu0 %3733
      %v3735 = vsel %vm351, %v3569, 0.0
      %3736 = vadd.xlane.f32.xlu0 %v3735
      %v3737 = vpop.xlane.xlu0 %3736
      %v3738 = vsel %vm351, %v3570, 0.0
      %3739 = vadd.xlane.f32.xlu0 %v3738
      %v3740 = vpop.xlane.xlu0 %3739
      %v3741 = vsel %vm351, %v3571, 0.0
      %3742 = vadd.xlane.f32.xlu0 %v3741
      %v3743 = vpop.xlane.xlu0 %3742
      %v3744 = vsel %vm351, %v3572, 0.0
      %3745 = vadd.xlane.f32.xlu0 %v3744
      %v3746 = vpop.xlane.xlu0 %3745
      %v3747 = vsel %vm351, %v3573, 0.0
      %3748 = vadd.xlane.f32.xlu0 %v3747
      %v3749 = vpop.xlane.xlu0 %3748
      %v3750 = vsel %vm351, %v3574, 0.0
      %3751 = vadd.xlane.f32.xlu0 %v3750
      %v3752 = vpop.xlane.xlu0 %3751
      %v3753 = vsel %vm351, %v3575, 0.0
      %3754 = vadd.xlane.f32.xlu0 %v3753
      %v3755 = vpop.xlane.xlu0 %3754
      %v3756 = vsel %vm351, %v3576, 0.0
      %3757 = vadd.xlane.f32.xlu0 %v3756
      %v3758 = vpop.xlane.xlu0 %3757
      %v3759 = vsel %vm351, %v3577, 0.0
      %3760 = vadd.xlane.f32.xlu0 %v3759
      %v3761 = vpop.xlane.xlu0 %3760
      %v3762 = vsel %vm351, %v3578, 0.0
      %3763 = vadd.xlane.f32.xlu0 %v3762
      %v3764 = vpop.xlane.xlu0 %3763
      %v3765 = vsel %vm351, %v3579, 0.0
      %3766 = vadd.xlane.f32.xlu0 %v3765
      %v3767 = vpop.xlane.xlu0 %3766
      %v3768 = vsel %vm351, %v3580, 0.0
      %3769 = vadd.xlane.f32.xlu0 %v3768
      %v3770 = vpop.xlane.xlu0 %3769
      %v3771 = vsel %vm351, %v3581, 0.0
      %3772 = vadd.xlane.f32.xlu0 %v3771
      %v3773 = vpop.xlane.xlu0 %3772
      %v3774 = vmul.f32 %v3584, %v544
      %v3775 = vmul.f32 %v3587, %v544
      %v3776 = vmul.f32 %v3590, %v544
      %v3777 = vmul.f32 %v3593, %v544
      %v3778 = vmul.f32 %v3596, %v544
      %v3779 = vmul.f32 %v3599, %v544
      %v3780 = vmul.f32 %v3602, %v544
      %v3781 = vmul.f32 %v3605, %v544
      %v3782 = vmul.f32 %v3608, %v544
      %v3783 = vmul.f32 %v3611, %v544
      %v3784 = vmul.f32 %v3614, %v544
      %v3785 = vmul.f32 %v3617, %v544
      %v3786 = vmul.f32 %v3620, %v544
      %v3787 = vmul.f32 %v3623, %v544
      %v3788 = vmul.f32 %v3626, %v544
      %v3789 = vmul.f32 %v3629, %v544
      %v3790 = vmul.f32 %v3632, %v544
      %v3791 = vmul.f32 %v3635, %v544
      %v3792 = vmul.f32 %v3638, %v544
      %v3793 = vmul.f32 %v3641, %v544
      %v3794 = vmul.f32 %v3644, %v544
      %v3795 = vmul.f32 %v3647, %v544
      %v3796 = vmul.f32 %v3650, %v544
      %v3797 = vmul.f32 %v3653, %v544
      %v3798 = vmul.f32 %v3656, %v544
      %v3799 = vmul.f32 %v3659, %v544
      %v3800 = vmul.f32 %v3662, %v544
      %v3801 = vmul.f32 %v3665, %v544
      %v3802 = vmul.f32 %v3668, %v544
      %v3803 = vmul.f32 %v3671, %v544
      %v3804 = vmul.f32 %v3674, %v544
      %v3805 = vmul.f32 %v3677, %v544
      %v3806 = vmul.f32 %v3680, %v544
      %v3807 = vmul.f32 %v3683, %v544
      %v3808 = vmul.f32 %v3686, %v544
      %v3809 = vmul.f32 %v3689, %v544
      %v3810 = vmul.f32 %v3692, %v544
      %v3811 = vmul.f32 %v3695, %v544
      %v3812 = vmul.f32 %v3698, %v544
      %v3813 = vmul.f32 %v3701, %v544
      %v3814 = vmul.f32 %v3704, %v544
      %v3815 = vmul.f32 %v3707, %v544
      %v3816 = vmul.f32 %v3710, %v544
      %v3817 = vmul.f32 %v3713, %v544
      %v3818 = vmul.f32 %v3716, %v544
      %v3819 = vmul.f32 %v3719, %v544
      %v3820 = vmul.f32 %v3722, %v544
      %v3821 = vmul.f32 %v3725, %v544
      %v3822 = vmul.f32 %v3728, %v544
      %v3823 = vmul.f32 %v3731, %v544
      %v3824 = vmul.f32 %v3734, %v544
      %v3825 = vmul.f32 %v3737, %v544
      %v3826 = vmul.f32 %v3740, %v544
      %v3827 = vmul.f32 %v3743, %v544
      %v3828 = vmul.f32 %v3746, %v544
      %v3829 = vmul.f32 %v3749, %v544
      %v3830 = vmul.f32 %v3752, %v544
      %v3831 = vmul.f32 %v3755, %v544
      %v3832 = vmul.f32 %v3758, %v544
      %v3833 = vmul.f32 %v3761, %v544
      %v3834 = vmul.f32 %v3764, %v544
      %v3835 = vmul.f32 %v3767, %v544
      %v3836 = vmul.f32 %v3770, %v544
      %v3837 = vmul.f32 %v3773, %v544
      %v3838 = vadd.f32 %v3774, 1e-05
      %v3839 = vadd.f32 %v3775, 1e-05
      %v3840 = vadd.f32 %v3776, 1e-05
      %v3841 = vadd.f32 %v3777, 1e-05
      %v3842 = vadd.f32 %v3778, 1e-05
      %v3843 = vadd.f32 %v3779, 1e-05
      %v3844 = vadd.f32 %v3780, 1e-05
      %v3845 = vadd.f32 %v3781, 1e-05
      %v3846 = vadd.f32 %v3782, 1e-05
      %v3847 = vadd.f32 %v3783, 1e-05
      %v3848 = vadd.f32 %v3784, 1e-05
      %v3849 = vadd.f32 %v3785, 1e-05
      %v3850 = vadd.f32 %v3786, 1e-05
      %v3851 = vadd.f32 %v3787, 1e-05
      %v3852 = vadd.f32 %v3788, 1e-05
      %v3853 = vadd.f32 %v3789, 1e-05
      %v3854 = vadd.f32 %v3790, 1e-05
      %v3855 = vadd.f32 %v3791, 1e-05
      %v3856 = vadd.f32 %v3792, 1e-05
      %v3857 = vadd.f32 %v3793, 1e-05
      %v3858 = vadd.f32 %v3794, 1e-05
      %v3859 = vadd.f32 %v3795, 1e-05
      %v3860 = vadd.f32 %v3796, 1e-05
      %v3861 = vadd.f32 %v3797, 1e-05
      %v3862 = vadd.f32 %v3798, 1e-05
      %v3863 = vadd.f32 %v3799, 1e-05
      %v3864 = vadd.f32 %v3800, 1e-05
      %v3865 = vadd.f32 %v3801, 1e-05
      %v3866 = vadd.f32 %v3802, 1e-05
      %v3867 = vadd.f32 %v3803, 1e-05
      %v3868 = vadd.f32 %v3804, 1e-05
      %v3869 = vadd.f32 %v3805, 1e-05
      %v3870 = vadd.f32 %v3806, 1e-05
      %v3871 = vadd.f32 %v3807, 1e-05
      %v3872 = vadd.f32 %v3808, 1e-05
      %v3873 = vadd.f32 %v3809, 1e-05
      %v3874 = vadd.f32 %v3810, 1e-05
      %v3875 = vadd.f32 %v3811, 1e-05
      %v3876 = vadd.f32 %v3812, 1e-05
      %v3877 = vadd.f32 %v3813, 1e-05
      %v3878 = vadd.f32 %v3814, 1e-05
      %v3879 = vadd.f32 %v3815, 1e-05
      %v3880 = vadd.f32 %v3816, 1e-05
      %v3881 = vadd.f32 %v3817, 1e-05
      %v3882 = vadd.f32 %v3818, 1e-05
      %v3883 = vadd.f32 %v3819, 1e-05
      %v3884 = vadd.f32 %v3820, 1e-05
      %v3885 = vadd.f32 %v3821, 1e-05
      %v3886 = vadd.f32 %v3822, 1e-05
      %v3887 = vadd.f32 %v3823, 1e-05
      %v3888 = vadd.f32 %v3824, 1e-05
      %v3889 = vadd.f32 %v3825, 1e-05
      %v3890 = vadd.f32 %v3826, 1e-05
      %v3891 = vadd.f32 %v3827, 1e-05
      %v3892 = vadd.f32 %v3828, 1e-05
      %v3893 = vadd.f32 %v3829, 1e-05
      %v3894 = vadd.f32 %v3830, 1e-05
      %v3895 = vadd.f32 %v3831, 1e-05
      %v3896 = vadd.f32 %v3832, 1e-05
      %v3897 = vadd.f32 %v3833, 1e-05
      %v3898 = vadd.f32 %v3834, 1e-05
      %v3899 = vadd.f32 %v3835, 1e-05
      %v3900 = vadd.f32 %v3836, 1e-05
      %v3901 = vadd.f32 %v3837, 1e-05
      %v3902 = vrsqrt.pop %v3838
      %v3903 = vrsqrt.pop %v3839
      %v3904 = vrsqrt.pop %v3840
      %v3905 = vrsqrt.pop %v3841
      %v3906 = vrsqrt.pop %v3842
      %v3907 = vrsqrt.pop %v3843
      %v3908 = vrsqrt.pop %v3844
      %v3909 = vrsqrt.pop %v3845
      %v3910 = vrsqrt.pop %v3846
      %v3911 = vrsqrt.pop %v3847
      %v3912 = vrsqrt.pop %v3848
      %v3913 = vrsqrt.pop %v3849
      %v3914 = vrsqrt.pop %v3850
      %v3915 = vrsqrt.pop %v3851
      %v3916 = vrsqrt.pop %v3852
      %v3917 = vrsqrt.pop %v3853
      %v3918 = vrsqrt.pop %v3854
      %v3919 = vrsqrt.pop %v3855
      %v3920 = vrsqrt.pop %v3856
      %v3921 = vrsqrt.pop %v3857
      %v3922 = vrsqrt.pop %v3858
      %v3923 = vrsqrt.pop %v3859
      %v3924 = vrsqrt.pop %v3860
      %v3925 = vrsqrt.pop %v3861
      %v3926 = vrsqrt.pop %v3862
      %v3927 = vrsqrt.pop %v3863
      %v3928 = vrsqrt.pop %v3864
      %v3929 = vrsqrt.pop %v3865
      %v3930 = vrsqrt.pop %v3866
      %v3931 = vrsqrt.pop %v3867
      %v3932 = vrsqrt.pop %v3868
      %v3933 = vrsqrt.pop %v3869
      %v3934 = vrsqrt.pop %v3870
      %v3935 = vrsqrt.pop %v3871
      %v3936 = vrsqrt.pop %v3872
      %v3937 = vrsqrt.pop %v3873
      %v3938 = vrsqrt.pop %v3874
      %v3939 = vrsqrt.pop %v3875
      %v3940 = vrsqrt.pop %v3876
      %v3941 = vrsqrt.pop %v3877
      %v3942 = vrsqrt.pop %v3878
      %v3943 = vrsqrt.pop %v3879
      %v3944 = vrsqrt.pop %v3880
      %v3945 = vrsqrt.pop %v3881
      %v3946 = vrsqrt.pop %v3882
      %v3947 = vrsqrt.pop %v3883
      %v3948 = vrsqrt.pop %v3884
      %v3949 = vrsqrt.pop %v3885
      %v3950 = vrsqrt.pop %v3886
      %v3951 = vrsqrt.pop %v3887
      %v3952 = vrsqrt.pop %v3888
      %v3953 = vrsqrt.pop %v3889
      %v3954 = vrsqrt.pop %v3890
      %v3955 = vrsqrt.pop %v3891
      %v3956 = vrsqrt.pop %v3892
      %v3957 = vrsqrt.pop %v3893
      %v3958 = vrsqrt.pop %v3894
      %v3959 = vrsqrt.pop %v3895
      %v3960 = vrsqrt.pop %v3896
      %v3961 = vrsqrt.pop %v3897
      %v3962 = vrsqrt.pop %v3898
      %v3963 = vrsqrt.pop %v3899
      %v3964 = vrsqrt.pop %v3900
      %v3965 = vrsqrt.pop %v3901
      %v3966 = vmul.f32 %v3454, %v3902
      %v3967 = vmul.f32 %v3455, %v3903
      %v3968 = vmul.f32 %v3456, %v3904
      %v3969 = vmul.f32 %v3457, %v3905
      %v3970 = vmul.f32 %v3458, %v3906
      %v3971 = vmul.f32 %v3459, %v3907
      %v3972 = vmul.f32 %v3460, %v3908
      %v3973 = vmul.f32 %v3461, %v3909
      %v3974 = vmul.f32 %v3462, %v3910
      %v3975 = vmul.f32 %v3463, %v3911
      %v3976 = vmul.f32 %v3464, %v3912
      %v3977 = vmul.f32 %v3465, %v3913
      %v3978 = vmul.f32 %v3466, %v3914
      %v3979 = vmul.f32 %v3467, %v3915
      %v3980 = vmul.f32 %v3468, %v3916
      %v3981 = vmul.f32 %v3469, %v3917
      %v3982 = vmul.f32 %v3470, %v3918
      %v3983 = vmul.f32 %v3471, %v3919
      %v3984 = vmul.f32 %v3472, %v3920
      %v3985 = vmul.f32 %v3473, %v3921
      %v3986 = vmul.f32 %v3474, %v3922
      %v3987 = vmul.f32 %v3475, %v3923
      %v3988 = vmul.f32 %v3476, %v3924
      %v3989 = vmul.f32 %v3477, %v3925
      %v3990 = vmul.f32 %v3478, %v3926
      %v3991 = vmul.f32 %v3479, %v3927
      %v3992 = vmul.f32 %v3480, %v3928
      %v3993 = vmul.f32 %v3481, %v3929
      %v3994 = vmul.f32 %v3482, %v3930
      %v3995 = vmul.f32 %v3483, %v3931
      %v3996 = vmul.f32 %v3484, %v3932
      %v3997 = vmul.f32 %v3485, %v3933
      %v3998 = vmul.f32 %v3486, %v3934
      %v3999 = vmul.f32 %v3487, %v3935
      %v4000 = vmul.f32 %v3488, %v3936
      %v4001 = vmul.f32 %v3489, %v3937
      %v4002 = vmul.f32 %v3490, %v3938
      %v4003 = vmul.f32 %v3491, %v3939
      %v4004 = vmul.f32 %v3492, %v3940
      %v4005 = vmul.f32 %v3493, %v3941
      %v4006 = vmul.f32 %v3494, %v3942
      %v4007 = vmul.f32 %v3495, %v3943
      %v4008 = vmul.f32 %v3496, %v3944
      %v4009 = vmul.f32 %v3497, %v3945
      %v4010 = vmul.f32 %v3498, %v3946
      %v4011 = vmul.f32 %v3499, %v3947
      %v4012 = vmul.f32 %v3500, %v3948
      %v4013 = vmul.f32 %v3501, %v3949
      %v4014 = vmul.f32 %v3502, %v3950
      %v4015 = vmul.f32 %v3503, %v3951
      %v4016 = vmul.f32 %v3504, %v3952
      %v4017 = vmul.f32 %v3505, %v3953
      %v4018 = vmul.f32 %v3506, %v3954
      %v4019 = vmul.f32 %v3507, %v3955
      %v4020 = vmul.f32 %v3508, %v3956
      %v4021 = vmul.f32 %v3509, %v3957
      %v4022 = vmul.f32 %v3510, %v3958
      %v4023 = vmul.f32 %v3511, %v3959
      %v4024 = vmul.f32 %v3512, %v3960
      %v4025 = vmul.f32 %v3513, %v3961
      %v4026 = vmul.f32 %v3514, %v3962
      %v4027 = vmul.f32 %v3515, %v3963
      %v4028 = vmul.f32 %v3516, %v3964
      %v4029 = vmul.f32 %v3517, %v3965
      %v4030 = vld [vmem:[%s4] sm:$0xff]
      %v4031 = vld [vmem:[%s4 + $0x8] sm:$0xff]
      %v4032 = vld [vmem:[%s4 + $0x10] sm:$0xff]
      %v4033 = vld [vmem:[%s4 + $0x18] sm:$0xff]
      %v4034 = vld [vmem:[%s4 + $0x20] sm:$0xff]
      %v4035 = vld [vmem:[%s4 + $0x28] sm:$0xff]
      %v4036 = vld [vmem:[%s4 + $0x30] sm:$0xff]
      %v4037 = vld [vmem:[%s4 + $0x38] sm:$0xff]
      %v4038 = vld [vmem:[%s4 + $0x40] sm:$0xff]
      %v4039 = vld [vmem:[%s4 + $0x48] sm:$0xff]
      %v4040 = vld [vmem:[%s4 + $0x50] sm:$0xff]
      %v4041 = vld [vmem:[%s4 + $0x58] sm:$0xff]
      %s4042 = scalar_lea.vmem %s6, 1
      %v4043 = vld [vmem:[%s4042] ss:$4 sm:$0x3]
      %v4045 = vlaneseq
      %v4046 = vshrl.u32 %v4045, 7
      %v4047 = vsub.s32 0, %v4046
      %v4048 = vrot.slane %v4043, %v4047
      %v4049 = vlaneseq
      %v4050 = vshrl.u32 %v4049, 7
      %v4051 = vsub.s32 1, %v4050
      %v4052 = vrot.slane %v4043, %v4051
      %v4056 = vsel %vm351, %v3966, 0
      %v4059 = vsel %vm351, %v3967, 0
      %v4062 = vsel %vm351, %v3968, 0
      %v4065 = vsel %vm351, %v3969, 0
      %v4068 = vsel %vm351, %v3970, 0
      %v4071 = vsel %vm351, %v3971, 0
      %v4074 = vsel %vm351, %v3972, 0
      %v4077 = vsel %vm351, %v3973, 0
      %v4080 = vsel %vm351, %v3974, 0
      %v4083 = vsel %vm351, %v3975, 0
      %v4086 = vsel %vm351, %v3976, 0
      %v4089 = vsel %vm351, %v3977, 0
      %v4092 = vsel %vm351, %v3978, 0
      %v4095 = vsel %vm351, %v3979, 0
      %v4098 = vsel %vm351, %v3980, 0
      %v4101 = vsel %vm351, %v3981, 0
      %v4104 = vsel %vm351, %v3982, 0
      %v4107 = vsel %vm351, %v3983, 0
      %v4110 = vsel %vm351, %v3984, 0
      %v4113 = vsel %vm351, %v3985, 0
      %v4116 = vsel %vm351, %v3986, 0
      %v4119 = vsel %vm351, %v3987, 0
      %v4122 = vsel %vm351, %v3988, 0
      %v4125 = vsel %vm351, %v3989, 0
      %v4128 = vsel %vm351, %v3990, 0
      %v4131 = vsel %vm351, %v3991, 0
      %v4134 = vsel %vm351, %v3992, 0
      %v4137 = vsel %vm351, %v3993, 0
      %v4140 = vsel %vm351, %v3994, 0
      %v4143 = vsel %vm351, %v3995, 0
      %v4146 = vsel %vm351, %v3996, 0
      %v4149 = vsel %vm351, %v3997, 0
      %v4152 = vsel %vm351, %v3998, 0
      %v4155 = vsel %vm351, %v3999, 0
      %v4158 = vsel %vm351, %v4000, 0
      %v4161 = vsel %vm351, %v4001, 0
      %v4164 = vsel %vm351, %v4002, 0
      %v4167 = vsel %vm351, %v4003, 0
      %v4170 = vsel %vm351, %v4004, 0
      %v4173 = vsel %vm351, %v4005, 0
      %v4176 = vsel %vm351, %v4006, 0
      %v4179 = vsel %vm351, %v4007, 0
      %v4182 = vsel %vm351, %v4008, 0
      %v4185 = vsel %vm351, %v4009, 0
      %v4188 = vsel %vm351, %v4010, 0
      %v4191 = vsel %vm351, %v4011, 0
      %v4194 = vsel %vm351, %v4012, 0
      %v4197 = vsel %vm351, %v4013, 0
      %v4200 = vsel %vm351, %v4014, 0
      %v4203 = vsel %vm351, %v4015, 0
      %v4206 = vsel %vm351, %v4016, 0
      %v4209 = vsel %vm351, %v4017, 0
      %v4212 = vsel %vm351, %v4018, 0
      %v4215 = vsel %vm351, %v4019, 0
      %v4218 = vsel %vm351, %v4020, 0
      %v4221 = vsel %vm351, %v4021, 0
      %v4224 = vsel %vm351, %v4022, 0
      %v4227 = vsel %vm351, %v4023, 0
      %v4230 = vsel %vm351, %v4024, 0
      %v4233 = vsel %vm351, %v4025, 0
      %v4236 = vsel %vm351, %v4026, 0
      %v4239 = vsel %vm351, %v4027, 0
      %v4242 = vsel %vm351, %v4028, 0
      %v4245 = vsel %vm351, %v4029, 0
      %4247 = vmatprep.subr.mxu0 %v4031
      %4248 = vmatpush1.msra.mxu0 %v4030
      %4249 = vmatprep.subr.mxu0 %v4033
      %4250 = vmatpush1.msra.mxu0 %v4032
      %4251 = vmatprep.subr.mxu0 %v4035
      %4252 = vmatpush1.msra.mxu0 %v4034
      %4253 = vmatprep.subr.mxu0 %v4037
      %4254 = vmatpush1.msra.mxu0 %v4036
      %4255 = vmatprep.subr.mxu0 %v4039
      %4256 = vmatpush1.msra.mxu0 %v4038
      %4257 = vmatprep.subr.mxu0 %v4041
      %4258 = vmatpush1.msra.mxu0 %v4040
      %4259 = vmatprep.subr.mxu0 0.0
      %4260 = vmatpush1.msra.mxu0 0.0
      %4261 = vmatprep.subr.mxu0 0.0
      %4262 = vmatpush1.msra.mxu0 0.0
      %4263 = vmatprep.subr.mxu0 0.0
      %4264 = vmatpush1.msra.mxu0 0.0
      %4265 = vmatprep.subr.mxu0 0.0
      %4266 = vmatpush1.msra.mxu0 0.0
      %4267 = vmatprep.subr.mxu0 0.0
      %4268 = vmatpush1.msra.mxu0 0.0
      %4269 = vmatprep.subr.mxu0 0.0
      %4270 = vmatpush1.msra.mxu0 0.0
      %4271 = vmatprep.subr.mxu0 0.0
      %4272 = vmatpush1.msra.mxu0 0.0
      %4273 = vmatprep.subr.mxu0 0.0
      %4274 = vmatpush1.msra.mxu0 0.0
      %4275 = vmatprep.subr.mxu0 0.0
      %4276 = vmatpush1.msra.mxu0 0.0
      %4277 = vmatprep.subr.mxu0 0.0
      %4278 = vmatpush1.msra.mxu0 0.0
      %4279 = vmatprep.subr.mxu0 0.0
      %4280 = vmatpush1.msra.mxu0 0.0
      %4281 = vmatprep.subr.mxu0 0.0
      %4282 = vmatpush1.msra.mxu0 0.0
      %4283 = vmatprep.subr.mxu0 0.0
      %4284 = vmatpush1.msra.mxu0 0.0
      %4285 = vmatprep.subr.mxu0 0.0
      %4286 = vmatpush1.msra.mxu0 0.0
      %4287 = vmatprep.subr.mxu0 0.0
      %4288 = vmatpush1.msra.mxu0 0.0
      %4289 = vmatprep.subr.mxu0 0.0
      %4290 = vmatpush1.msra.mxu0 0.0
      %4291 = vmatprep.subr.mxu0 0.0
      %4292 = vmatpush1.msra.mxu0 0.0
      %4293 = vmatprep.subr.mxu0 0.0
      %4294 = vmatpush1.msra.mxu0 0.0
      %4295 = vmatprep.subr.mxu0 0.0
      %4296 = vmatpush1.msra.mxu0 0.0
      %4297 = vmatprep.subr.mxu0 0.0
      %4298 = vmatpush1.msra.mxu0 0.0
      %4299 = vmatprep.subr.mxu0 0.0
      %4300 = vmatpush1.msra.mxu0 0.0
      %4301 = vmatprep.subr.mxu0 0.0
      %4302 = vmatpush1.msra.mxu0 0.0
      %4303 = vmatprep.subr.mxu0 0.0
      %4304 = vmatpush1.msra.mxu0 0.0
      %4305 = vmatprep.subr.mxu0 0.0
      %4306 = vmatpush1.msra.mxu0 0.0
      %4307 = vmatprep.subr.mxu0 0.0
      %4308 = vmatpush1.msra.mxu0 0.0
      %4309 = vmatprep.subr.mxu0 0.0
      %4310 = vmatpush1.msra.mxu0 0.0
      %4311 = vmatprep.mubr.f32.mxu0 0.0
      %4312 = vmatmul.mubr.f32.gmra.mrb[0].mxu0 %v4056
      %v4313 = vpop.f32.mrb[0].mxu0
      %v4314 = vadd.f32 %v4048, %v4313
      %v4315 = vpop.f32.mrb[0].mxu0
      %v4316 = vadd.f32 %v4052, %v4315
      %4317 = vmatprep.mubr.f32.mxu0 0.0
      %4318 = vmatmul.mubr.f32.gmra.mrb[0].mxu0 %v4059
      %v4319 = vpop.f32.mrb[0].mxu0
      %v4320 = vadd.f32 %v4048, %v4319
      %v4321 = vpop.f32.mrb[0].mxu0
      %v4322 = vadd.f32 %v4052, %v4321
      %4323 = vmatprep.mubr.f32.mxu0 0.0
      %4324 = vmatmul.mubr.f32.gmra.mrb[0].mxu0 %v4062
      %v4325 = vpop.f32.mrb[0].mxu0
      %v4326 = vadd.f32 %v4048, %v4325
      %v4327 = vpop.f32.mrb[0].mxu0
      %v4328 = vadd.f32 %v4052, %v4327
      %4329 = vmatprep.mubr.f32.mxu0 0.0
      %4330 = vmatmul.mubr.f32.gmra.mrb[0].mxu0 %v4065
      %v4331 = vpop.f32.mrb[0].mxu0
      %v4332 = vadd.f32 %v4048, %v4331
      %v4333 = vpop.f32.mrb[0].mxu0
      %v4334 = vadd.f32 %v4052, %v4333
      %4335 = vmatprep.mubr.f32.mxu0 0.0
      %4336 = vmatmul.mubr.f32.gmra.mrb[0].mxu0 %v4068
      %v4337 = vpop.f32.mrb[0].mxu0
      %v4338 = vadd.f32 %v4048, %v4337
      %v4339 = vpop.f32.mrb[0].mxu0
      %v4340 = vadd.f32 %v4052, %v4339
      %4341 = vmatprep.mubr.f32.mxu0 0.0
      %4342 = vmatmul.mubr.f32.gmra.mrb[0].mxu0 %v4071
      %v4343 = vpop.f32.mrb[0].mxu0
      %v4344 = vadd.f32 %v4048, %v4343
      %v4345 = vpop.f32.mrb[0].mxu0
      %v4346 = vadd.f32 %v4052, %v4345
      %4347 = vmatprep.mubr.f32.mxu0 0.0
      %4348 = vmatmul.mubr.f32.gmra.mrb[0].mxu0 %v4074
      %v4349 = vpop.f32.mrb[0].mxu0
      %v4350 = vadd.f32 %v4048, %v4349
      %v4351 = vpop.f32.mrb[0].mxu0
      %v4352 = vadd.f32 %v4052, %v4351
      %4353 = vmatprep.mubr.f32.mxu0 0.0
      %4354 = vmatmul.mubr.f32.gmra.mrb[0].mxu0 %v4077
      %v4355 = vpop.f32.mrb[0].mxu0
      %v4356 = vadd.f32 %v4048, %v4355
      %v4357 = vpop.f32.mrb[0].mxu0
      %v4358 = vadd.f32 %v4052, %v4357
      %4359 = vmatprep.mubr.f32.mxu0 0.0
      %4360 = vmatmul.mubr.f32.gmra.mrb[0].mxu0 %v4080
      %v4361 = vpop.f32.mrb[0].mxu0
      %v4362 = vadd.f32 %v4048, %v4361
      %v4363 = vpop.f32.mrb[0].mxu0
      %v4364 = vadd.f32 %v4052, %v4363
      %4365 = vmatprep.mubr.f32.mxu0 0.0
      %4366 = vmatmul.mubr.f32.gmra.mrb[0].mxu0 %v4083
      %v4367 = vpop.f32.mrb[0].mxu0
      %v4368 = vadd.f32 %v4048, %v4367
      %v4369 = vpop.f32.mrb[0].mxu0
      %v4370 = vadd.f32 %v4052, %v4369
      %4371 = vmatprep.mubr.f32.mxu0 0.0
      %4372 = vmatmul.mubr.f32.gmra.mrb[0].mxu0 %v4086
      %v4373 = vpop.f32.mrb[0].mxu0
      %v4374 = vadd.f32 %v4048, %v4373
      %v4375 = vpop.f32.mrb[0].mxu0
      %v4376 = vadd.f32 %v4052, %v4375
      %4377 = vmatprep.mubr.f32.mxu0 0.0
      %4378 = vmatmul.mubr.f32.gmra.mrb[0].mxu0 %v4089
      %v4379 = vpop.f32.mrb[0].mxu0
      %v4380 = vadd.f32 %v4048, %v4379
      %v4381 = vpop.f32.mrb[0].mxu0
      %v4382 = vadd.f32 %v4052, %v4381
      %4383 = vmatprep.mubr.f32.mxu0 0.0
      %4384 = vmatmul.mubr.f32.gmra.mrb[0].mxu0 %v4092
      %v4385 = vpop.f32.mrb[0].mxu0
      %v4386 = vadd.f32 %v4048, %v4385
      %v4387 = vpop.f32.mrb[0].mxu0
      %v4388 = vadd.f32 %v4052, %v4387
      %4389 = vmatprep.mubr.f32.mxu0 0.0
      %4390 = vmatmul.mubr.f32.gmra.mrb[0].mxu0 %v4095
      %v4391 = vpop.f32.mrb[0].mxu0
      %v4392 = vadd.f32 %v4048, %v4391
      %v4393 = vpop.f32.mrb[0].mxu0
      %v4394 = vadd.f32 %v4052, %v4393
      %4395 = vmatprep.mubr.f32.mxu0 0.0
      %4396 = vmatmul.mubr.f32.gmra.mrb[0].mxu0 %v4098
      %v4397 = vpop.f32.mrb[0].mxu0
      %v4398 = vadd.f32 %v4048, %v4397
      %v4399 = vpop.f32.mrb[0].mxu0
      %v4400 = vadd.f32 %v4052, %v4399
      %4401 = vmatprep.mubr.f32.mxu0 0.0
      %4402 = vmatmul.mubr.f32.gmra.mrb[0].mxu0 %v4101
      %v4403 = vpop.f32.mrb[0].mxu0
      %v4404 = vadd.f32 %v4048, %v4403
      %v4405 = vpop.f32.mrb[0].mxu0
      %v4406 = vadd.f32 %v4052, %v4405
      %4407 = vmatprep.mubr.f32.mxu0 0.0
      %4408 = vmatmul.mubr.f32.gmra.mrb[0].mxu0 %v4104
      %v4409 = vpop.f32.mrb[0].mxu0
      %v4410 = vadd.f32 %v4048, %v4409
      %v4411 = vpop.f32.mrb[0].mxu0
      %v4412 = vadd.f32 %v4052, %v4411
      %4413 = vmatprep.mubr.f32.mxu0 0.0
      %4414 = vmatmul.mubr.f32.gmra.mrb[0].mxu0 %v4107
      %v4415 = vpop.f32.mrb[0].mxu0
      %v4416 = vadd.f32 %v4048, %v4415
      %v4417 = vpop.f32.mrb[0].mxu0
      %v4418 = vadd.f32 %v4052, %v4417
      %4419 = vmatprep.mubr.f32.mxu0 0.0
      %4420 = vmatmul.mubr.f32.gmra.mrb[0].mxu0 %v4110
      %v4421 = vpop.f32.mrb[0].mxu0
      %v4422 = vadd.f32 %v4048, %v4421
      %v4423 = vpop.f32.mrb[0].mxu0
      %v4424 = vadd.f32 %v4052, %v4423
      %4425 = vmatprep.mubr.f32.mxu0 0.0
      %4426 = vmatmul.mubr.f32.gmra.mrb[0].mxu0 %v4113
      %v4427 = vpop.f32.mrb[0].mxu0
      %v4428 = vadd.f32 %v4048, %v4427
      %v4429 = vpop.f32.mrb[0].mxu0
      %v4430 = vadd.f32 %v4052, %v4429
      %4431 = vmatprep.mubr.f32.mxu0 0.0
      %4432 = vmatmul.mubr.f32.gmra.mrb[0].mxu0 %v4116
      %v4433 = vpop.f32.mrb[0].mxu0
      %v4434 = vadd.f32 %v4048, %v4433
      %v4435 = vpop.f32.mrb[0].mxu0
      %v4436 = vadd.f32 %v4052, %v4435
      %4437 = vmatprep.mubr.f32.mxu0 0.0
      %4438 = vmatmul.mubr.f32.gmra.mrb[0].mxu0 %v4119
      %v4439 = vpop.f32.mrb[0].mxu0
      %v4440 = vadd.f32 %v4048, %v4439
      %v4441 = vpop.f32.mrb[0].mxu0
      %v4442 = vadd.f32 %v4052, %v4441
      %4443 = vmatprep.mubr.f32.mxu0 0.0
      %4444 = vmatmul.mubr.f32.gmra.mrb[0].mxu0 %v4122
      %v4445 = vpop.f32.mrb[0].mxu0
      %v4446 = vadd.f32 %v4048, %v4445
      %v4447 = vpop.f32.mrb[0].mxu0
      %v4448 = vadd.f32 %v4052, %v4447
      %4449 = vmatprep.mubr.f32.mxu0 0.0
      %4450 = vmatmul.mubr.f32.gmra.mrb[0].mxu0 %v4125
      %v4451 = vpop.f32.mrb[0].mxu0
      %v4452 = vadd.f32 %v4048, %v4451
      %v4453 = vpop.f32.mrb[0].mxu0
      %v4454 = vadd.f32 %v4052, %v4453
      %4455 = vmatprep.mubr.f32.mxu0 0.0
      %4456 = vmatmul.mubr.f32.gmra.mrb[0].mxu0 %v4128
      %v4457 = vpop.f32.mrb[0].mxu0
      %v4458 = vadd.f32 %v4048, %v4457
      %v4459 = vpop.f32.mrb[0].mxu0
      %v4460 = vadd.f32 %v4052, %v4459
      %4461 = vmatprep.mubr.f32.mxu0 0.0
      %4462 = vmatmul.mubr.f32.gmra.mrb[0].mxu0 %v4131
      %v4463 = vpop.f32.mrb[0].mxu0
      %v4464 = vadd.f32 %v4048, %v4463
      %v4465 = vpop.f32.mrb[0].mxu0
      %v4466 = vadd.f32 %v4052, %v4465
      %4467 = vmatprep.mubr.f32.mxu0 0.0
      %4468 = vmatmul.mubr.f32.gmra.mrb[0].mxu0 %v4134
      %v4469 = vpop.f32.mrb[0].mxu0
      %v4470 = vadd.f32 %v4048, %v4469
      %v4471 = vpop.f32.mrb[0].mxu0
      %v4472 = vadd.f32 %v4052, %v4471
      %4473 = vmatprep.mubr.f32.mxu0 0.0
      %4474 = vmatmul.mubr.f32.gmra.mrb[0].mxu0 %v4137
      %v4475 = vpop.f32.mrb[0].mxu0
      %v4476 = vadd.f32 %v4048, %v4475
      %v4477 = vpop.f32.mrb[0].mxu0
      %v4478 = vadd.f32 %v4052, %v4477
      %4479 = vmatprep.mubr.f32.mxu0 0.0
      %4480 = vmatmul.mubr.f32.gmra.mrb[0].mxu0 %v4140
      %v4481 = vpop.f32.mrb[0].mxu0
      %v4482 = vadd.f32 %v4048, %v4481
      %v4483 = vpop.f32.mrb[0].mxu0
      %v4484 = vadd.f32 %v4052, %v4483
      %4485 = vmatprep.mubr.f32.mxu0 0.0
      %4486 = vmatmul.mubr.f32.gmra.mrb[0].mxu0 %v4143
      %v4487 = vpop.f32.mrb[0].mxu0
      %v4488 = vadd.f32 %v4048, %v4487
      %v4489 = vpop.f32.mrb[0].mxu0
      %v4490 = vadd.f32 %v4052, %v4489
      %4491 = vmatprep.mubr.f32.mxu0 0.0
      %4492 = vmatmul.mubr.f32.gmra.mrb[0].mxu0 %v4146
      %v4493 = vpop.f32.mrb[0].mxu0
      %v4494 = vadd.f32 %v4048, %v4493
      %v4495 = vpop.f32.mrb[0].mxu0
      %v4496 = vadd.f32 %v4052, %v4495
      %4497 = vmatprep.mubr.f32.mxu0 0.0
      %4498 = vmatmul.mubr.f32.gmra.mrb[0].mxu0 %v4149
      %v4499 = vpop.f32.mrb[0].mxu0
      %v4500 = vadd.f32 %v4048, %v4499
      %v4501 = vpop.f32.mrb[0].mxu0
      %v4502 = vadd.f32 %v4052, %v4501
      %4503 = vmatprep.mubr.f32.mxu0 0.0
      %4504 = vmatmul.mubr.f32.gmra.mrb[0].mxu0 %v4152
      %v4505 = vpop.f32.mrb[0].mxu0
      %v4506 = vadd.f32 %v4048, %v4505
      %v4507 = vpop.f32.mrb[0].mxu0
      %v4508 = vadd.f32 %v4052, %v4507
      %4509 = vmatprep.mubr.f32.mxu0 0.0
      %4510 = vmatmul.mubr.f32.gmra.mrb[0].mxu0 %v4155
      %v4511 = vpop.f32.mrb[0].mxu0
      %v4512 = vadd.f32 %v4048, %v4511
      %v4513 = vpop.f32.mrb[0].mxu0
      %v4514 = vadd.f32 %v4052, %v4513
      %4515 = vmatprep.mubr.f32.mxu0 0.0
      %4516 = vmatmul.mubr.f32.gmra.mrb[0].mxu0 %v4158
      %v4517 = vpop.f32.mrb[0].mxu0
      %v4518 = vadd.f32 %v4048, %v4517
      %v4519 = vpop.f32.mrb[0].mxu0
      %v4520 = vadd.f32 %v4052, %v4519
      %4521 = vmatprep.mubr.f32.mxu0 0.0
      %4522 = vmatmul.mubr.f32.gmra.mrb[0].mxu0 %v4161
      %v4523 = vpop.f32.mrb[0].mxu0
      %v4524 = vadd.f32 %v4048, %v4523
      %v4525 = vpop.f32.mrb[0].mxu0
      %v4526 = vadd.f32 %v4052, %v4525
      %4527 = vmatprep.mubr.f32.mxu0 0.0
      %4528 = vmatmul.mubr.f32.gmra.mrb[0].mxu0 %v4164
      %v4529 = vpop.f32.mrb[0].mxu0
      %v4530 = vadd.f32 %v4048, %v4529
      %v4531 = vpop.f32.mrb[0].mxu0
      %v4532 = vadd.f32 %v4052, %v4531
      %4533 = vmatprep.mubr.f32.mxu0 0.0
      %4534 = vmatmul.mubr.f32.gmra.mrb[0].mxu0 %v4167
      %v4535 = vpop.f32.mrb[0].mxu0
      %v4536 = vadd.f32 %v4048, %v4535
      %v4537 = vpop.f32.mrb[0].mxu0
      %v4538 = vadd.f32 %v4052, %v4537
      %4539 = vmatprep.mubr.f32.mxu0 0.0
      %4540 = vmatmul.mubr.f32.gmra.mrb[0].mxu0 %v4170
      %v4541 = vpop.f32.mrb[0].mxu0
      %v4542 = vadd.f32 %v4048, %v4541
      %v4543 = vpop.f32.mrb[0].mxu0
      %v4544 = vadd.f32 %v4052, %v4543
      %4545 = vmatprep.mubr.f32.mxu0 0.0
      %4546 = vmatmul.mubr.f32.gmra.mrb[0].mxu0 %v4173
      %v4547 = vpop.f32.mrb[0].mxu0
      %v4548 = vadd.f32 %v4048, %v4547
      %v4549 = vpop.f32.mrb[0].mxu0
      %v4550 = vadd.f32 %v4052, %v4549
      %4551 = vmatprep.mubr.f32.mxu0 0.0
      %4552 = vmatmul.mubr.f32.gmra.mrb[0].mxu0 %v4176
      %v4553 = vpop.f32.mrb[0].mxu0
      %v4554 = vadd.f32 %v4048, %v4553
      %v4555 = vpop.f32.mrb[0].mxu0
      %v4556 = vadd.f32 %v4052, %v4555
      %4557 = vmatprep.mubr.f32.mxu0 0.0
      %4558 = vmatmul.mubr.f32.gmra.mrb[0].mxu0 %v4179
      %v4559 = vpop.f32.mrb[0].mxu0
      %v4560 = vadd.f32 %v4048, %v4559
      %v4561 = vpop.f32.mrb[0].mxu0
      %v4562 = vadd.f32 %v4052, %v4561
      %4563 = vmatprep.mubr.f32.mxu0 0.0
      %4564 = vmatmul.mubr.f32.gmra.mrb[0].mxu0 %v4182
      %v4565 = vpop.f32.mrb[0].mxu0
      %v4566 = vadd.f32 %v4048, %v4565
      %v4567 = vpop.f32.mrb[0].mxu0
      %v4568 = vadd.f32 %v4052, %v4567
      %4569 = vmatprep.mubr.f32.mxu0 0.0
      %4570 = vmatmul.mubr.f32.gmra.mrb[0].mxu0 %v4185
      %v4571 = vpop.f32.mrb[0].mxu0
      %v4572 = vadd.f32 %v4048, %v4571
      %v4573 = vpop.f32.mrb[0].mxu0
      %v4574 = vadd.f32 %v4052, %v4573
      %4575 = vmatprep.mubr.f32.mxu0 0.0
      %4576 = vmatmul.mubr.f32.gmra.mrb[0].mxu0 %v4188
      %v4577 = vpop.f32.mrb[0].mxu0
      %v4578 = vadd.f32 %v4048, %v4577
      %v4579 = vpop.f32.mrb[0].mxu0
      %v4580 = vadd.f32 %v4052, %v4579
      %4581 = vmatprep.mubr.f32.mxu0 0.0
      %4582 = vmatmul.mubr.f32.gmra.mrb[0].mxu0 %v4191
      %v4583 = vpop.f32.mrb[0].mxu0
      %v4584 = vadd.f32 %v4048, %v4583
      %v4585 = vpop.f32.mrb[0].mxu0
      %v4586 = vadd.f32 %v4052, %v4585
      %4587 = vmatprep.mubr.f32.mxu0 0.0
      %4588 = vmatmul.mubr.f32.gmra.mrb[0].mxu0 %v4194
      %v4589 = vpop.f32.mrb[0].mxu0
      %v4590 = vadd.f32 %v4048, %v4589
      %v4591 = vpop.f32.mrb[0].mxu0
      %v4592 = vadd.f32 %v4052, %v4591
      %4593 = vmatprep.mubr.f32.mxu0 0.0
      %4594 = vmatmul.mubr.f32.gmra.mrb[0].mxu0 %v4197
      %v4595 = vpop.f32.mrb[0].mxu0
      %v4596 = vadd.f32 %v4048, %v4595
      %v4597 = vpop.f32.mrb[0].mxu0
      %v4598 = vadd.f32 %v4052, %v4597
      %4599 = vmatprep.mubr.f32.mxu0 0.0
      %4600 = vmatmul.mubr.f32.gmra.mrb[0].mxu0 %v4200
      %v4601 = vpop.f32.mrb[0].mxu0
      %v4602 = vadd.f32 %v4048, %v4601
      %v4603 = vpop.f32.mrb[0].mxu0
      %v4604 = vadd.f32 %v4052, %v4603
      %4605 = vmatprep.mubr.f32.mxu0 0.0
      %4606 = vmatmul.mubr.f32.gmra.mrb[0].mxu0 %v4203
      %v4607 = vpop.f32.mrb[0].mxu0
      %v4608 = vadd.f32 %v4048, %v4607
      %v4609 = vpop.f32.mrb[0].mxu0
      %v4610 = vadd.f32 %v4052, %v4609
      %4611 = vmatprep.mubr.f32.mxu0 0.0
      %4612 = vmatmul.mubr.f32.gmra.mrb[0].mxu0 %v4206
      %v4613 = vpop.f32.mrb[0].mxu0
      %v4614 = vadd.f32 %v4048, %v4613
      %v4615 = vpop.f32.mrb[0].mxu0
      %v4616 = vadd.f32 %v4052, %v4615
      %4617 = vmatprep.mubr.f32.mxu0 0.0
      %4618 = vmatmul.mubr.f32.gmra.mrb[0].mxu0 %v4209
      %v4619 = vpop.f32.mrb[0].mxu0
      %v4620 = vadd.f32 %v4048, %v4619
      %v4621 = vpop.f32.mrb[0].mxu0
      %v4622 = vadd.f32 %v4052, %v4621
      %4623 = vmatprep.mubr.f32.mxu0 0.0
      %4624 = vmatmul.mubr.f32.gmra.mrb[0].mxu0 %v4212
      %v4625 = vpop.f32.mrb[0].mxu0
      %v4626 = vadd.f32 %v4048, %v4625
      %v4627 = vpop.f32.mrb[0].mxu0
      %v4628 = vadd.f32 %v4052, %v4627
      %4629 = vmatprep.mubr.f32.mxu0 0.0
      %4630 = vmatmul.mubr.f32.gmra.mrb[0].mxu0 %v4215
      %v4631 = vpop.f32.mrb[0].mxu0
      %v4632 = vadd.f32 %v4048, %v4631
      %v4633 = vpop.f32.mrb[0].mxu0
      %v4634 = vadd.f32 %v4052, %v4633
      %4635 = vmatprep.mubr.f32.mxu0 0.0
      %4636 = vmatmul.mubr.f32.gmra.mrb[0].mxu0 %v4218
      %v4637 = vpop.f32.mrb[0].mxu0
      %v4638 = vadd.f32 %v4048, %v4637
      %v4639 = vpop.f32.mrb[0].mxu0
      %v4640 = vadd.f32 %v4052, %v4639
      %4641 = vmatprep.mubr.f32.mxu0 0.0
      %4642 = vmatmul.mubr.f32.gmra.mrb[0].mxu0 %v4221
      %v4643 = vpop.f32.mrb[0].mxu0
      %v4644 = vadd.f32 %v4048, %v4643
      %v4645 = vpop.f32.mrb[0].mxu0
      %v4646 = vadd.f32 %v4052, %v4645
      %4647 = vmatprep.mubr.f32.mxu0 0.0
      %4648 = vmatmul.mubr.f32.gmra.mrb[0].mxu0 %v4224
      %v4649 = vpop.f32.mrb[0].mxu0
      %v4650 = vadd.f32 %v4048, %v4649
      %v4651 = vpop.f32.mrb[0].mxu0
      %v4652 = vadd.f32 %v4052, %v4651
      %4653 = vmatprep.mubr.f32.mxu0 0.0
      %4654 = vmatmul.mubr.f32.gmra.mrb[0].mxu0 %v4227
      %v4655 = vpop.f32.mrb[0].mxu0
      %v4656 = vadd.f32 %v4048, %v4655
      %v4657 = vpop.f32.mrb[0].mxu0
      %v4658 = vadd.f32 %v4052, %v4657
      %4659 = vmatprep.mubr.f32.mxu0 0.0
      %4660 = vmatmul.mubr.f32.gmra.mrb[0].mxu0 %v4230
      %v4661 = vpop.f32.mrb[0].mxu0
      %v4662 = vadd.f32 %v4048, %v4661
      %v4663 = vpop.f32.mrb[0].mxu0
      %v4664 = vadd.f32 %v4052, %v4663
      %4665 = vmatprep.mubr.f32.mxu0 0.0
      %4666 = vmatmul.mubr.f32.gmra.mrb[0].mxu0 %v4233
      %v4667 = vpop.f32.mrb[0].mxu0
      %v4668 = vadd.f32 %v4048, %v4667
      %v4669 = vpop.f32.mrb[0].mxu0
      %v4670 = vadd.f32 %v4052, %v4669
      %4671 = vmatprep.mubr.f32.mxu0 0.0
      %4672 = vmatmul.mubr.f32.gmra.mrb[0].mxu0 %v4236
      %v4673 = vpop.f32.mrb[0].mxu0
      %v4674 = vadd.f32 %v4048, %v4673
      %v4675 = vpop.f32.mrb[0].mxu0
      %v4676 = vadd.f32 %v4052, %v4675
      %4677 = vmatprep.mubr.f32.mxu0 0.0
      %4678 = vmatmul.mubr.f32.gmra.mrb[0].mxu0 %v4239
      %v4679 = vpop.f32.mrb[0].mxu0
      %v4680 = vadd.f32 %v4048, %v4679
      %v4681 = vpop.f32.mrb[0].mxu0
      %v4682 = vadd.f32 %v4052, %v4681
      %4683 = vmatprep.mubr.f32.mxu0 0.0
      %4684 = vmatmul.mubr.f32.gmra.mrb[0].mxu0 %v4242
      %v4685 = vpop.f32.mrb[0].mxu0
      %v4686 = vadd.f32 %v4048, %v4685
      %v4687 = vpop.f32.mrb[0].mxu0
      %v4688 = vadd.f32 %v4052, %v4687
      %4689 = vmatprep.mubr.f32.mxu0 0.0
      %4690 = vmatmul.mubr.f32.gmra.mrb[0].mxu0 %v4245
      %v4691 = vpop.f32.mrb[0].mxu0
      %v4692 = vadd.f32 %v4048, %v4691
      %v4693 = vpop.f32.mrb[0].mxu0
      %v4694 = vadd.f32 %v4052, %v4693
      %4695 = vdwg.mxu0
      %v4696 = vmul.f32 %v4314, 0.5
      %v4697 = vmul.f32 %v4316, 0.5
      %v4698 = vmul.f32 %v4320, 0.5
      %v4699 = vmul.f32 %v4322, 0.5
      %v4700 = vmul.f32 %v4326, 0.5
      %v4701 = vmul.f32 %v4328, 0.5
      %v4702 = vmul.f32 %v4332, 0.5
      %v4703 = vmul.f32 %v4334, 0.5
      %v4704 = vmul.f32 %v4338, 0.5
      %v4705 = vmul.f32 %v4340, 0.5
      %v4706 = vmul.f32 %v4344, 0.5
      %v4707 = vmul.f32 %v4346, 0.5
      %v4708 = vmul.f32 %v4350, 0.5
      %v4709 = vmul.f32 %v4352, 0.5
      %v4710 = vmul.f32 %v4356, 0.5
      %v4711 = vmul.f32 %v4358, 0.5
      %v4712 = vmul.f32 %v4362, 0.5
      %v4713 = vmul.f32 %v4364, 0.5
      %v4714 = vmul.f32 %v4368, 0.5
      %v4715 = vmul.f32 %v4370, 0.5
      %v4716 = vmul.f32 %v4374, 0.5
      %v4717 = vmul.f32 %v4376, 0.5
      %v4718 = vmul.f32 %v4380, 0.5
      %v4719 = vmul.f32 %v4382, 0.5
      %v4720 = vmul.f32 %v4386, 0.5
      %v4721 = vmul.f32 %v4388, 0.5
      %v4722 = vmul.f32 %v4392, 0.5
      %v4723 = vmul.f32 %v4394, 0.5
      %v4724 = vmul.f32 %v4398, 0.5
      %v4725 = vmul.f32 %v4400, 0.5
      %v4726 = vmul.f32 %v4404, 0.5
      %v4727 = vmul.f32 %v4406, 0.5
      %v4728 = vmul.f32 %v4410, 0.5
      %v4729 = vmul.f32 %v4412, 0.5
      %v4730 = vmul.f32 %v4416, 0.5
      %v4731 = vmul.f32 %v4418, 0.5
      %v4732 = vmul.f32 %v4422, 0.5
      %v4733 = vmul.f32 %v4424, 0.5
      %v4734 = vmul.f32 %v4428, 0.5
      %v4735 = vmul.f32 %v4430, 0.5
      %v4736 = vmul.f32 %v4434, 0.5
      %v4737 = vmul.f32 %v4436, 0.5
      %v4738 = vmul.f32 %v4440, 0.5
      %v4739 = vmul.f32 %v4442, 0.5
      %v4740 = vmul.f32 %v4446, 0.5
      %v4741 = vmul.f32 %v4448, 0.5
      %v4742 = vmul.f32 %v4452, 0.5
      %v4743 = vmul.f32 %v4454, 0.5
      %v4744 = vmul.f32 %v4458, 0.5
      %v4745 = vmul.f32 %v4460, 0.5
      %v4746 = vmul.f32 %v4464, 0.5
      %v4747 = vmul.f32 %v4466, 0.5
      %v4748 = vmul.f32 %v4470, 0.5
      %v4749 = vmul.f32 %v4472, 0.5
      %v4750 = vmul.f32 %v4476, 0.5
      %v4751 = vmul.f32 %v4478, 0.5
      %v4752 = vmul.f32 %v4482, 0.5
      %v4753 = vmul.f32 %v4484, 0.5
      %v4754 = vmul.f32 %v4488, 0.5
      %v4755 = vmul.f32 %v4490, 0.5
      %v4756 = vmul.f32 %v4494, 0.5
      %v4757 = vmul.f32 %v4496, 0.5
      %v4758 = vmul.f32 %v4500, 0.5
      %v4759 = vmul.f32 %v4502, 0.5
      %v4760 = vmul.f32 %v4506, 0.5
      %v4761 = vmul.f32 %v4508, 0.5
      %v4762 = vmul.f32 %v4512, 0.5
      %v4763 = vmul.f32 %v4514, 0.5
      %v4764 = vmul.f32 %v4518, 0.5
      %v4765 = vmul.f32 %v4520, 0.5
      %v4766 = vmul.f32 %v4524, 0.5
      %v4767 = vmul.f32 %v4526, 0.5
      %v4768 = vmul.f32 %v4530, 0.5
      %v4769 = vmul.f32 %v4532, 0.5
      %v4770 = vmul.f32 %v4536, 0.5
      %v4771 = vmul.f32 %v4538, 0.5
      %v4772 = vmul.f32 %v4542, 0.5
      %v4773 = vmul.f32 %v4544, 0.5
      %v4774 = vmul.f32 %v4548, 0.5
      %v4775 = vmul.f32 %v4550, 0.5
      %v4776 = vmul.f32 %v4554, 0.5
      %v4777 = vmul.f32 %v4556, 0.5
      %v4778 = vmul.f32 %v4560, 0.5
      %v4779 = vmul.f32 %v4562, 0.5
      %v4780 = vmul.f32 %v4566, 0.5
      %v4781 = vmul.f32 %v4568, 0.5
      %v4782 = vmul.f32 %v4572, 0.5
      %v4783 = vmul.f32 %v4574, 0.5
      %v4784 = vmul.f32 %v4578, 0.5
      %v4785 = vmul.f32 %v4580, 0.5
      %v4786 = vmul.f32 %v4584, 0.5
      %v4787 = vmul.f32 %v4586, 0.5
      %v4788 = vmul.f32 %v4590, 0.5
      %v4789 = vmul.f32 %v4592, 0.5
      %v4790 = vmul.f32 %v4596, 0.5
      %v4791 = vmul.f32 %v4598, 0.5
      %v4792 = vmul.f32 %v4602, 0.5
      %v4793 = vmul.f32 %v4604, 0.5
      %v4794 = vmul.f32 %v4608, 0.5
      %v4795 = vmul.f32 %v4610, 0.5
      %v4796 = vmul.f32 %v4614, 0.5
      %v4797 = vmul.f32 %v4616, 0.5
      %v4798 = vmul.f32 %v4620, 0.5
      %v4799 = vmul.f32 %v4622, 0.5
      %v4800 = vmul.f32 %v4626, 0.5
      %v4801 = vmul.f32 %v4628, 0.5
      %v4802 = vmul.f32 %v4632, 0.5
      %v4803 = vmul.f32 %v4634, 0.5
      %v4804 = vmul.f32 %v4638, 0.5
      %v4805 = vmul.f32 %v4640, 0.5
      %v4806 = vmul.f32 %v4644, 0.5
      %v4807 = vmul.f32 %v4646, 0.5
      %v4808 = vmul.f32 %v4650, 0.5
      %v4809 = vmul.f32 %v4652, 0.5
      %v4810 = vmul.f32 %v4656, 0.5
      %v4811 = vmul.f32 %v4658, 0.5
      %v4812 = vmul.f32 %v4662, 0.5
      %v4813 = vmul.f32 %v4664, 0.5
      %v4814 = vmul.f32 %v4668, 0.5
      %v4815 = vmul.f32 %v4670, 0.5
      %v4816 = vmul.f32 %v4674, 0.5
      %v4817 = vmul.f32 %v4676, 0.5
      %v4818 = vmul.f32 %v4680, 0.5
      %v4819 = vmul.f32 %v4682, 0.5
      %v4820 = vmul.f32 %v4686, 0.5
      %v4821 = vmul.f32 %v4688, 0.5
      %v4822 = vmul.f32 %v4692, 0.5
      %v4823 = vmul.f32 %v4694, 0.5
      %v4824 = vmul.f32 %v4314, 0.70710677
      %v4825 = vmul.f32 %v4316, 0.70710677
      %v4826 = vmul.f32 %v4320, 0.70710677
      %v4827 = vmul.f32 %v4322, 0.70710677
      %v4828 = vmul.f32 %v4326, 0.70710677
      %v4829 = vmul.f32 %v4328, 0.70710677
      %v4830 = vmul.f32 %v4332, 0.70710677
      %v4831 = vmul.f32 %v4334, 0.70710677
      %v4832 = vmul.f32 %v4338, 0.70710677
      %v4833 = vmul.f32 %v4340, 0.70710677
      %v4834 = vmul.f32 %v4344, 0.70710677
      %v4835 = vmul.f32 %v4346, 0.70710677
      %v4836 = vmul.f32 %v4350, 0.70710677
      %v4837 = vmul.f32 %v4352, 0.70710677
      %v4838 = vmul.f32 %v4356, 0.70710677
      %v4839 = vmul.f32 %v4358, 0.70710677
      %v4840 = vmul.f32 %v4362, 0.70710677
      %v4841 = vmul.f32 %v4364, 0.70710677
      %v4842 = vmul.f32 %v4368, 0.70710677
      %v4843 = vmul.f32 %v4370, 0.70710677
      %v4844 = vmul.f32 %v4374, 0.70710677
      %v4845 = vmul.f32 %v4376, 0.70710677
      %v4846 = vmul.f32 %v4380, 0.70710677
      %v4847 = vmul.f32 %v4382, 0.70710677
      %v4848 = vmul.f32 %v4386, 0.70710677
      %v4849 = vmul.f32 %v4388, 0.70710677
      %v4850 = vmul.f32 %v4392, 0.70710677
      %v4851 = vmul.f32 %v4394, 0.70710677
      %v4852 = vmul.f32 %v4398, 0.70710677
      %v4853 = vmul.f32 %v4400, 0.70710677
      %v4854 = vmul.f32 %v4404, 0.70710677
      %v4855 = vmul.f32 %v4406, 0.70710677
      %v4856 = vmul.f32 %v4410, 0.70710677
      %v4857 = vmul.f32 %v4412, 0.70710677
      %v4858 = vmul.f32 %v4416, 0.70710677
      %v4859 = vmul.f32 %v4418, 0.70710677
      %v4860 = vmul.f32 %v4422, 0.70710677
      %v4861 = vmul.f32 %v4424, 0.70710677
      %v4862 = vmul.f32 %v4428, 0.70710677
      %v4863 = vmul.f32 %v4430, 0.70710677
      %v4864 = vmul.f32 %v4434, 0.70710677
      %v4865 = vmul.f32 %v4436, 0.70710677
      %v4866 = vmul.f32 %v4440, 0.70710677
      %v4867 = vmul.f32 %v4442, 0.70710677
      %v4868 = vmul.f32 %v4446, 0.70710677
      %v4869 = vmul.f32 %v4448, 0.70710677
      %v4870 = vmul.f32 %v4452, 0.70710677
      %v4871 = vmul.f32 %v4454, 0.70710677
      %v4872 = vmul.f32 %v4458, 0.70710677
      %v4873 = vmul.f32 %v4460, 0.70710677
      %v4874 = vmul.f32 %v4464, 0.70710677
      %v4875 = vmul.f32 %v4466, 0.70710677
      %v4876 = vmul.f32 %v4470, 0.70710677
      %v4877 = vmul.f32 %v4472, 0.70710677
      %v4878 = vmul.f32 %v4476, 0.70710677
      %v4879 = vmul.f32 %v4478, 0.70710677
      %v4880 = vmul.f32 %v4482, 0.70710677
      %v4881 = vmul.f32 %v4484, 0.70710677
      %v4882 = vmul.f32 %v4488, 0.70710677
      %v4883 = vmul.f32 %v4490, 0.70710677
      %v4884 = vmul.f32 %v4494, 0.70710677
      %v4885 = vmul.f32 %v4496, 0.70710677
      %v4886 = vmul.f32 %v4500, 0.70710677
      %v4887 = vmul.f32 %v4502, 0.70710677
      %v4888 = vmul.f32 %v4506, 0.70710677
      %v4889 = vmul.f32 %v4508, 0.70710677
      %v4890 = vmul.f32 %v4512, 0.70710677
      %v4891 = vmul.f32 %v4514, 0.70710677
      %v4892 = vmul.f32 %v4518, 0.70710677
      %v4893 = vmul.f32 %v4520, 0.70710677
      %v4894 = vmul.f32 %v4524, 0.70710677
      %v4895 = vmul.f32 %v4526, 0.70710677
      %v4896 = vmul.f32 %v4530, 0.70710677
      %v4897 = vmul.f32 %v4532, 0.70710677
      %v4898 = vmul.f32 %v4536, 0.70710677
      %v4899 = vmul.f32 %v4538, 0.70710677
      %v4900 = vmul.f32 %v4542, 0.70710677
      %v4901 = vmul.f32 %v4544, 0.70710677
      %v4902 = vmul.f32 %v4548, 0.70710677
      %v4903 = vmul.f32 %v4550, 0.70710677
      %v4904 = vmul.f32 %v4554, 0.70710677
      %v4905 = vmul.f32 %v4556, 0.70710677
      %v4906 = vmul.f32 %v4560, 0.70710677
      %v4907 = vmul.f32 %v4562, 0.70710677
      %v4908 = vmul.f32 %v4566, 0.70710677
      %v4909 = vmul.f32 %v4568, 0.70710677
      %v4910 = vmul.f32 %v4572, 0.70710677
      %v4911 = vmul.f32 %v4574, 0.70710677
      %v4912 = vmul.f32 %v4578, 0.70710677
      %v4913 = vmul.f32 %v4580, 0.70710677
      %v4914 = vmul.f32 %v4584, 0.70710677
      %v4915 = vmul.f32 %v4586, 0.70710677
      %v4916 = vmul.f32 %v4590, 0.70710677
      %v4917 = vmul.f32 %v4592, 0.70710677
      %v4918 = vmul.f32 %v4596, 0.70710677
      %v4919 = vmul.f32 %v4598, 0.70710677
      %v4920 = vmul.f32 %v4602, 0.70710677
      %v4921 = vmul.f32 %v4604, 0.70710677
      %v4922 = vmul.f32 %v4608, 0.70710677
      %v4923 = vmul.f32 %v4610, 0.70710677
      %v4924 = vmul.f32 %v4614, 0.70710677
      %v4925 = vmul.f32 %v4616, 0.70710677
      %v4926 = vmul.f32 %v4620, 0.70710677
      %v4927 = vmul.f32 %v4622, 0.70710677
      %v4928 = vmul.f32 %v4626, 0.70710677
      %v4929 = vmul.f32 %v4628, 0.70710677
      %v4930 = vmul.f32 %v4632, 0.70710677
      %v4931 = vmul.f32 %v4634, 0.70710677
      %v4932 = vmul.f32 %v4638, 0.70710677
      %v4933 = vmul.f32 %v4640, 0.70710677
      %v4934 = vmul.f32 %v4644, 0.70710677
      %v4935 = vmul.f32 %v4646, 0.70710677
      %v4936 = vmul.f32 %v4650, 0.70710677
      %v4937 = vmul.f32 %v4652, 0.70710677
      %v4938 = vmul.f32 %v4656, 0.70710677
      %v4939 = vmul.f32 %v4658, 0.70710677
      %v4940 = vmul.f32 %v4662, 0.70710677
      %v4941 = vmul.f32 %v4664, 0.70710677
      %v4942 = vmul.f32 %v4668, 0.70710677
      %v4943 = vmul.f32 %v4670, 0.70710677
      %v4944 = vmul.f32 %v4674, 0.70710677
      %v4945 = vmul.f32 %v4676, 0.70710677
      %v4946 = vmul.f32 %v4680, 0.70710677
      %v4947 = vmul.f32 %v4682, 0.70710677
      %v4948 = vmul.f32 %v4686, 0.70710677
      %v4949 = vmul.f32 %v4688, 0.70710677
      %v4950 = vmul.f32 %v4692, 0.70710677
      %v4951 = vmul.f32 %v4694, 0.70710677
      %v4952 = verf.f32.pop %v4824
      %v4953 = verf.f32.pop %v4825
      %v4954 = verf.f32.pop %v4826
      %v4955 = verf.f32.pop %v4827
      %v4956 = verf.f32.pop %v4828
      %v4957 = verf.f32.pop %v4829
      %v4958 = verf.f32.pop %v4830
      %v4959 = verf.f32.pop %v4831
      %v4960 = verf.f32.pop %v4832
      %v4961 = verf.f32.pop %v4833
      %v4962 = verf.f32.pop %v4834
      %v4963 = verf.f32.pop %v4835
      %v4964 = verf.f32.pop %v4836
      %v4965 = verf.f32.pop %v4837
      %v4966 = verf.f32.pop %v4838
      %v4967 = verf.f32.pop %v4839
      %v4968 = verf.f32.pop %v4840
      %v4969 = verf.f32.pop %v4841
      %v4970 = verf.f32.pop %v4842
      %v4971 = verf.f32.pop %v4843
      %v4972 = verf.f32.pop %v4844
      %v4973 = verf.f32.pop %v4845
      %v4974 = verf.f32.pop %v4846
      %v4975 = verf.f32.pop %v4847
      %v4976 = verf.f32.pop %v4848
      %v4977 = verf.f32.pop %v4849
      %v4978 = verf.f32.pop %v4850
      %v4979 = verf.f32.pop %v4851
      %v4980 = verf.f32.pop %v4852
      %v4981 = verf.f32.pop %v4853
      %v4982 = verf.f32.pop %v4854
      %v4983 = verf.f32.pop %v4855
      %v4984 = verf.f32.pop %v4856
      %v4985 = verf.f32.pop %v4857
      %v4986 = verf.f32.pop %v4858
      %v4987 = verf.f32.pop %v4859
      %v4988 = verf.f32.pop %v4860
      %v4989 = verf.f32.pop %v4861
      %v4990 = verf.f32.pop %v4862
      %v4991 = verf.f32.pop %v4863
      %v4992 = verf.f32.pop %v4864
      %v4993 = verf.f32.pop %v4865
      %v4994 = verf.f32.pop %v4866
      %v4995 = verf.f32.pop %v4867
      %v4996 = verf.f32.pop %v4868
      %v4997 = verf.f32.pop %v4869
      %v4998 = verf.f32.pop %v4870
      %v4999 = verf.f32.pop %v4871
      %v5000 = verf.f32.pop %v4872
      %v5001 = verf.f32.pop %v4873
      %v5002 = verf.f32.pop %v4874
      %v5003 = verf.f32.pop %v4875
      %v5004 = verf.f32.pop %v4876
      %v5005 = verf.f32.pop %v4877
      %v5006 = verf.f32.pop %v4878
      %v5007 = verf.f32.pop %v4879
      %v5008 = verf.f32.pop %v4880
      %v5009 = verf.f32.pop %v4881
      %v5010 = verf.f32.pop %v4882
      %v5011 = verf.f32.pop %v4883
      %v5012 = verf.f32.pop %v4884
      %v5013 = verf.f32.pop %v4885
      %v5014 = verf.f32.pop %v4886
      %v5015 = verf.f32.pop %v4887
      %v5016 = verf.f32.pop %v4888
      %v5017 = verf.f32.pop %v4889
      %v5018 = verf.f32.pop %v4890
      %v5019 = verf.f32.pop %v4891
      %v5020 = verf.f32.pop %v4892
      %v5021 = verf.f32.pop %v4893
      %v5022 = verf.f32.pop %v4894
      %v5023 = verf.f32.pop %v4895
      %v5024 = verf.f32.pop %v4896
      %v5025 = verf.f32.pop %v4897
      %v5026 = verf.f32.pop %v4898
      %v5027 = verf.f32.pop %v4899
      %v5028 = verf.f32.pop %v4900
      %v5029 = verf.f32.pop %v4901
      %v5030 = verf.f32.pop %v4902
      %v5031 = verf.f32.pop %v4903
      %v5032 = verf.f32.pop %v4904
      %v5033 = verf.f32.pop %v4905
      %v5034 = verf.f32.pop %v4906
      %v5035 = verf.f32.pop %v4907
      %v5036 = verf.f32.pop %v4908
      %v5037 = verf.f32.pop %v4909
      %v5038 = verf.f32.pop %v4910
      %v5039 = verf.f32.pop %v4911
      %v5040 = verf.f32.pop %v4912
      %v5041 = verf.f32.pop %v4913
      %v5042 = verf.f32.pop %v4914
      %v5043 = verf.f32.pop %v4915
      %v5044 = verf.f32.pop %v4916
      %v5045 = verf.f32.pop %v4917
      %v5046 = verf.f32.pop %v4918
      %v5047 = verf.f32.pop %v4919
      %v5048 = verf.f32.pop %v4920
      %v5049 = verf.f32.pop %v4921
      %v5050 = verf.f32.pop %v4922
      %v5051 = verf.f32.pop %v4923
      %v5052 = verf.f32.pop %v4924
      %v5053 = verf.f32.pop %v4925
      %v5054 = verf.f32.pop %v4926
      %v5055 = verf.f32.pop %v4927
      %v5056 = verf.f32.pop %v4928
      %v5057 = verf.f32.pop %v4929
      %v5058 = verf.f32.pop %v4930
      %v5059 = verf.f32.pop %v4931
      %v5060 = verf.f32.pop %v4932
      %v5061 = verf.f32.pop %v4933
      %v5062 = verf.f32.pop %v4934
      %v5063 = verf.f32.pop %v4935
      %v5064 = verf.f32.pop %v4936
      %v5065 = verf.f32.pop %v4937
      %v5066 = verf.f32.pop %v4938
      %v5067 = verf.f32.pop %v4939
      %v5068 = verf.f32.pop %v4940
      %v5069 = verf.f32.pop %v4941
      %v5070 = verf.f32.pop %v4942
      %v5071 = verf.f32.pop %v4943
      %v5072 = verf.f32.pop %v4944
      %v5073 = verf.f32.pop %v4945
      %v5074 = verf.f32.pop %v4946
      %v5075 = verf.f32.pop %v4947
      %v5076 = verf.f32.pop %v4948
      %v5077 = verf.f32.pop %v4949
      %v5078 = verf.f32.pop %v4950
      %v5079 = verf.f32.pop %v4951
      %v5080 = vadd.f32 %v4952, 1.0
      %v5081 = vadd.f32 %v4953, 1.0
      %v5082 = vadd.f32 %v4954, 1.0
      %v5083 = vadd.f32 %v4955, 1.0
      %v5084 = vadd.f32 %v4956, 1.0
      %v5085 = vadd.f32 %v4957, 1.0
      %v5086 = vadd.f32 %v4958, 1.0
      %v5087 = vadd.f32 %v4959, 1.0
      %v5088 = vadd.f32 %v4960, 1.0
      %v5089 = vadd.f32 %v4961, 1.0
      %v5090 = vadd.f32 %v4962, 1.0
      %v5091 = vadd.f32 %v4963, 1.0
      %v5092 = vadd.f32 %v4964, 1.0
      %v5093 = vadd.f32 %v4965, 1.0
      %v5094 = vadd.f32 %v4966, 1.0
      %v5095 = vadd.f32 %v4967, 1.0
      %v5096 = vadd.f32 %v4968, 1.0
      %v5097 = vadd.f32 %v4969, 1.0
      %v5098 = vadd.f32 %v4970, 1.0
      %v5099 = vadd.f32 %v4971, 1.0
      %v5100 = vadd.f32 %v4972, 1.0
      %v5101 = vadd.f32 %v4973, 1.0
      %v5102 = vadd.f32 %v4974, 1.0
      %v5103 = vadd.f32 %v4975, 1.0
      %v5104 = vadd.f32 %v4976, 1.0
      %v5105 = vadd.f32 %v4977, 1.0
      %v5106 = vadd.f32 %v4978, 1.0
      %v5107 = vadd.f32 %v4979, 1.0
      %v5108 = vadd.f32 %v4980, 1.0
      %v5109 = vadd.f32 %v4981, 1.0
      %v5110 = vadd.f32 %v4982, 1.0
      %v5111 = vadd.f32 %v4983, 1.0
      %v5112 = vadd.f32 %v4984, 1.0
      %v5113 = vadd.f32 %v4985, 1.0
      %v5114 = vadd.f32 %v4986, 1.0
      %v5115 = vadd.f32 %v4987, 1.0
      %v5116 = vadd.f32 %v4988, 1.0
      %v5117 = vadd.f32 %v4989, 1.0
      %v5118 = vadd.f32 %v4990, 1.0
      %v5119 = vadd.f32 %v4991, 1.0
      %v5120 = vadd.f32 %v4992, 1.0
      %v5121 = vadd.f32 %v4993, 1.0
      %v5122 = vadd.f32 %v4994, 1.0
      %v5123 = vadd.f32 %v4995, 1.0
      %v5124 = vadd.f32 %v4996, 1.0
      %v5125 = vadd.f32 %v4997, 1.0
      %v5126 = vadd.f32 %v4998, 1.0
      %v5127 = vadd.f32 %v4999, 1.0
      %v5128 = vadd.f32 %v5000, 1.0
      %v5129 = vadd.f32 %v5001, 1.0
      %v5130 = vadd.f32 %v5002, 1.0
      %v5131 = vadd.f32 %v5003, 1.0
      %v5132 = vadd.f32 %v5004, 1.0
      %v5133 = vadd.f32 %v5005, 1.0
      %v5134 = vadd.f32 %v5006, 1.0
      %v5135 = vadd.f32 %v5007, 1.0
      %v5136 = vadd.f32 %v5008, 1.0
      %v5137 = vadd.f32 %v5009, 1.0
      %v5138 = vadd.f32 %v5010, 1.0
      %v5139 = vadd.f32 %v5011, 1.0
      %v5140 = vadd.f32 %v5012, 1.0
      %v5141 = vadd.f32 %v5013, 1.0
      %v5142 = vadd.f32 %v5014, 1.0
      %v5143 = vadd.f32 %v5015, 1.0
      %v5144 = vadd.f32 %v5016, 1.0
      %v5145 = vadd.f32 %v5017, 1.0
      %v5146 = vadd.f32 %v5018, 1.0
      %v5147 = vadd.f32 %v5019, 1.0
      %v5148 = vadd.f32 %v5020, 1.0
      %v5149 = vadd.f32 %v5021, 1.0
      %v5150 = vadd.f32 %v5022, 1.0
      %v5151 = vadd.f32 %v5023, 1.0
      %v5152 = vadd.f32 %v5024, 1.0
      %v5153 = vadd.f32 %v5025, 1.0
      %v5154 = vadd.f32 %v5026, 1.0
      %v5155 = vadd.f32 %v5027, 1.0
      %v5156 = vadd.f32 %v5028, 1.0
      %v5157 = vadd.f32 %v5029, 1.0
      %v5158 = vadd.f32 %v5030, 1.0
      %v5159 = vadd.f32 %v5031, 1.0
      %v5160 = vadd.f32 %v5032, 1.0
      %v5161 = vadd.f32 %v5033, 1.0
      %v5162 = vadd.f32 %v5034, 1.0
      %v5163 = vadd.f32 %v5035, 1.0
      %v5164 = vadd.f32 %v5036, 1.0
      %v5165 = vadd.f32 %v5037, 1.0
      %v5166 = vadd.f32 %v5038, 1.0
      %v5167 = vadd.f32 %v5039, 1.0
      %v5168 = vadd.f32 %v5040, 1.0
      %v5169 = vadd.f32 %v5041, 1.0
      %v5170 = vadd.f32 %v5042, 1.0
      %v5171 = vadd.f32 %v5043, 1.0
      %v5172 = vadd.f32 %v5044, 1.0
      %v5173 = vadd.f32 %v5045, 1.0
      %v5174 = vadd.f32 %v5046, 1.0
      %v5175 = vadd.f32 %v5047, 1.0
      %v5176 = vadd.f32 %v5048, 1.0
      %v5177 = vadd.f32 %v5049, 1.0
      %v5178 = vadd.f32 %v5050, 1.0
      %v5179 = vadd.f32 %v5051, 1.0
      %v5180 = vadd.f32 %v5052, 1.0
      %v5181 = vadd.f32 %v5053, 1.0
      %v5182 = vadd.f32 %v5054, 1.0
      %v5183 = vadd.f32 %v5055, 1.0
      %v5184 = vadd.f32 %v5056, 1.0
      %v5185 = vadd.f32 %v5057, 1.0
      %v5186 = vadd.f32 %v5058, 1.0
      %v5187 = vadd.f32 %v5059, 1.0
      %v5188 = vadd.f32 %v5060, 1.0
      %v5189 = vadd.f32 %v5061, 1.0
      %v5190 = vadd.f32 %v5062, 1.0
      %v5191 = vadd.f32 %v5063, 1.0
      %v5192 = vadd.f32 %v5064, 1.0
      %v5193 = vadd.f32 %v5065, 1.0
      %v5194 = vadd.f32 %v5066, 1.0
      %v5195 = vadd.f32 %v5067, 1.0
      %v5196 = vadd.f32 %v5068, 1.0
      %v5197 = vadd.f32 %v5069, 1.0
      %v5198 = vadd.f32 %v5070, 1.0
      %v5199 = vadd.f32 %v5071, 1.0
      %v5200 = vadd.f32 %v5072, 1.0
      %v5201 = vadd.f32 %v5073, 1.0
      %v5202 = vadd.f32 %v5074, 1.0
      %v5203 = vadd.f32 %v5075, 1.0
      %v5204 = vadd.f32 %v5076, 1.0
      %v5205 = vadd.f32 %v5077, 1.0
      %v5206 = vadd.f32 %v5078, 1.0
      %v5207 = vadd.f32 %v5079, 1.0
      %v5208 = vmul.f32 %v4696, %v5080
      %v5209 = vmul.f32 %v4697, %v5081
      %v5210 = vmul.f32 %v4698, %v5082
      %v5211 = vmul.f32 %v4699, %v5083
      %v5212 = vmul.f32 %v4700, %v5084
      %v5213 = vmul.f32 %v4701, %v5085
      %v5214 = vmul.f32 %v4702, %v5086
      %v5215 = vmul.f32 %v4703, %v5087
      %v5216 = vmul.f32 %v4704, %v5088
      %v5217 = vmul.f32 %v4705, %v5089
      %v5218 = vmul.f32 %v4706, %v5090
      %v5219 = vmul.f32 %v4707, %v5091
      %v5220 = vmul.f32 %v4708, %v5092
      %v5221 = vmul.f32 %v4709, %v5093
      %v5222 = vmul.f32 %v4710, %v5094
      %v5223 = vmul.f32 %v4711, %v5095
      %v5224 = vmul.f32 %v4712, %v5096
      %v5225 = vmul.f32 %v4713, %v5097
      %v5226 = vmul.f32 %v4714, %v5098
      %v5227 = vmul.f32 %v4715, %v5099
      %v5228 = vmul.f32 %v4716, %v5100
      %v5229 = vmul.f32 %v4717, %v5101
      %v5230 = vmul.f32 %v4718, %v5102
      %v5231 = vmul.f32 %v4719, %v5103
      %v5232 = vmul.f32 %v4720, %v5104
      %v5233 = vmul.f32 %v4721, %v5105
      %v5234 = vmul.f32 %v4722, %v5106
      %v5235 = vmul.f32 %v4723, %v5107
      %v5236 = vmul.f32 %v4724, %v5108
      %v5237 = vmul.f32 %v4725, %v5109
      %v5238 = vmul.f32 %v4726, %v5110
      %v5239 = vmul.f32 %v4727, %v5111
      %v5240 = vmul.f32 %v4728, %v5112
      %v5241 = vmul.f32 %v4729, %v5113
      %v5242 = vmul.f32 %v4730, %v5114
      %v5243 = vmul.f32 %v4731, %v5115
      %v5244 = vmul.f32 %v4732, %v5116
      %v5245 = vmul.f32 %v4733, %v5117
      %v5246 = vmul.f32 %v4734, %v5118
      %v5247 = vmul.f32 %v4735, %v5119
      %v5248 = vmul.f32 %v4736, %v5120
      %v5249 = vmul.f32 %v4737, %v5121
      %v5250 = vmul.f32 %v4738, %v5122
      %v5251 = vmul.f32 %v4739, %v5123
      %v5252 = vmul.f32 %v4740, %v5124
      %v5253 = vmul.f32 %v4741, %v5125
      %v5254 = vmul.f32 %v4742, %v5126
      %v5255 = vmul.f32 %v4743, %v5127
      %v5256 = vmul.f32 %v4744, %v5128
      %v5257 = vmul.f32 %v4745, %v5129
      %v5258 = vmul.f32 %v4746, %v5130
      %v5259 = vmul.f32 %v4747, %v5131
      %v5260 = vmul.f32 %v4748, %v5132
      %v5261 = vmul.f32 %v4749, %v5133
      %v5262 = vmul.f32 %v4750, %v5134
      %v5263 = vmul.f32 %v4751, %v5135
      %v5264 = vmul.f32 %v4752, %v5136
      %v5265 = vmul.f32 %v4753, %v5137
      %v5266 = vmul.f32 %v4754, %v5138
      %v5267 = vmul.f32 %v4755, %v5139
      %v5268 = vmul.f32 %v4756, %v5140
      %v5269 = vmul.f32 %v4757, %v5141
      %v5270 = vmul.f32 %v4758, %v5142
      %v5271 = vmul.f32 %v4759, %v5143
      %v5272 = vmul.f32 %v4760, %v5144
      %v5273 = vmul.f32 %v4761, %v5145
      %v5274 = vmul.f32 %v4762, %v5146
      %v5275 = vmul.f32 %v4763, %v5147
      %v5276 = vmul.f32 %v4764, %v5148
      %v5277 = vmul.f32 %v4765, %v5149
      %v5278 = vmul.f32 %v4766, %v5150
      %v5279 = vmul.f32 %v4767, %v5151
      %v5280 = vmul.f32 %v4768, %v5152
      %v5281 = vmul.f32 %v4769, %v5153
      %v5282 = vmul.f32 %v4770, %v5154
      %v5283 = vmul.f32 %v4771, %v5155
      %v5284 = vmul.f32 %v4772, %v5156
      %v5285 = vmul.f32 %v4773, %v5157
      %v5286 = vmul.f32 %v4774, %v5158
      %v5287 = vmul.f32 %v4775, %v5159
      %v5288 = vmul.f32 %v4776, %v5160
      %v5289 = vmul.f32 %v4777, %v5161
      %v5290 = vmul.f32 %v4778, %v5162
      %v5291 = vmul.f32 %v4779, %v5163
      %v5292 = vmul.f32 %v4780, %v5164
      %v5293 = vmul.f32 %v4781, %v5165
      %v5294 = vmul.f32 %v4782, %v5166
      %v5295 = vmul.f32 %v4783, %v5167
      %v5296 = vmul.f32 %v4784, %v5168
      %v5297 = vmul.f32 %v4785, %v5169
      %v5298 = vmul.f32 %v4786, %v5170
      %v5299 = vmul.f32 %v4787, %v5171
      %v5300 = vmul.f32 %v4788, %v5172
      %v5301 = vmul.f32 %v4789, %v5173
      %v5302 = vmul.f32 %v4790, %v5174
      %v5303 = vmul.f32 %v4791, %v5175
      %v5304 = vmul.f32 %v4792, %v5176
      %v5305 = vmul.f32 %v4793, %v5177
      %v5306 = vmul.f32 %v4794, %v5178
      %v5307 = vmul.f32 %v4795, %v5179
      %v5308 = vmul.f32 %v4796, %v5180
      %v5309 = vmul.f32 %v4797, %v5181
      %v5310 = vmul.f32 %v4798, %v5182
      %v5311 = vmul.f32 %v4799, %v5183
      %v5312 = vmul.f32 %v4800, %v5184
      %v5313 = vmul.f32 %v4801, %v5185
      %v5314 = vmul.f32 %v4802, %v5186
      %v5315 = vmul.f32 %v4803, %v5187
      %v5316 = vmul.f32 %v4804, %v5188
      %v5317 = vmul.f32 %v4805, %v5189
      %v5318 = vmul.f32 %v4806, %v5190
      %v5319 = vmul.f32 %v4807, %v5191
      %v5320 = vmul.f32 %v4808, %v5192
      %v5321 = vmul.f32 %v4809, %v5193
      %v5322 = vmul.f32 %v4810, %v5194
      %v5323 = vmul.f32 %v4811, %v5195
      %v5324 = vmul.f32 %v4812, %v5196
      %v5325 = vmul.f32 %v4813, %v5197
      %v5326 = vmul.f32 %v4814, %v5198
      %v5327 = vmul.f32 %v4815, %v5199
      %v5328 = vmul.f32 %v4816, %v5200
      %v5329 = vmul.f32 %v4817, %v5201
      %v5330 = vmul.f32 %v4818, %v5202
      %v5331 = vmul.f32 %v4819, %v5203
      %v5332 = vmul.f32 %v4820, %v5204
      %v5333 = vmul.f32 %v4821, %v5205
      %v5334 = vmul.f32 %v4822, %v5206
      %v5335 = vmul.f32 %v4823, %v5207
      %v5336 = vld [vmem:[%s5] sm:$0xff]
      %v5337 = vld [vmem:[%s5 + $0x8] sm:$0xff]
      %v5338 = vld [vmem:[%s5 + $0x10] sm:$0xff]
      %v5339 = vld [vmem:[%s5 + $0x18] sm:$0xff]
      %v5340 = vld [vmem:[%s5 + $0x20] sm:$0xff]
      %v5341 = vld [vmem:[%s5 + $0x28] sm:$0xff]
      %v5342 = vld [vmem:[%s5 + $0x30] sm:$0xff]
      %v5343 = vld [vmem:[%s5 + $0x38] sm:$0xff]
      %v5344 = vld [vmem:[%s5 + $0x40] sm:$0xff]
      %v5345 = vld [vmem:[%s5 + $0x48] sm:$0xff]
      %v5346 = vld [vmem:[%s5 + $0x50] sm:$0xff]
      %v5347 = vld [vmem:[%s5 + $0x58] sm:$0xff]
      %v5348 = vld [vmem:[%s5 + $0x60] sm:$0xff]
      %v5349 = vld [vmem:[%s5 + $0x68] sm:$0xff]
      %v5350 = vld [vmem:[%s5 + $0x70] sm:$0xff]
      %v5351 = vld [vmem:[%s5 + $0x78] sm:$0xff]
      %v5352 = vld [vmem:[%s5 + $0x80] sm:$0xff]
      %v5353 = vld [vmem:[%s5 + $0x88] sm:$0xff]
      %v5354 = vld [vmem:[%s5 + $0x90] sm:$0xff]
      %v5355 = vld [vmem:[%s5 + $0x98] sm:$0xff]
      %v5356 = vld [vmem:[%s5 + $0xa0] sm:$0xff]
      %v5357 = vld [vmem:[%s5 + $0xa8] sm:$0xff]
      %v5358 = vld [vmem:[%s5 + $0xb0] sm:$0xff]
      %v5359 = vld [vmem:[%s5 + $0xb8] sm:$0xff]
      %v5360 = vld [vmem:[%s6 + $0x2] sm:$0x1]
      %v5361 = vlaneseq
      %v5362 = vshrl.u32 %v5361, 7
      %v5363 = vsub.s32 0, %v5362
      %v5364 = vrot.slane %v5360, %v5363
      %vm5365 = vcmask 523264
      %v5367 = vsel %vm5365, %v5209, 0
      %v5370 = vsel %vm5365, %v5211, 0
      %v5373 = vsel %vm5365, %v5213, 0
      %v5376 = vsel %vm5365, %v5215, 0
      %v5379 = vsel %vm5365, %v5217, 0
      %v5382 = vsel %vm5365, %v5219, 0
      %v5385 = vsel %vm5365, %v5221, 0
      %v5388 = vsel %vm5365, %v5223, 0
      %v5391 = vsel %vm5365, %v5225, 0
      %v5394 = vsel %vm5365, %v5227, 0
      %v5397 = vsel %vm5365, %v5229, 0
      %v5400 = vsel %vm5365, %v5231, 0
      %v5403 = vsel %vm5365, %v5233, 0
      %v5406 = vsel %vm5365, %v5235, 0
      %v5409 = vsel %vm5365, %v5237, 0
      %v5412 = vsel %vm5365, %v5239, 0
      %v5415 = vsel %vm5365, %v5241, 0
      %v5418 = vsel %vm5365, %v5243, 0
      %v5421 = vsel %vm5365, %v5245, 0
      %v5424 = vsel %vm5365, %v5247, 0
      %v5427 = vsel %vm5365, %v5249, 0
      %v5430 = vsel %vm5365, %v5251, 0
      %v5433 = vsel %vm5365, %v5253, 0
      %v5436 = vsel %vm5365, %v5255, 0
      %v5439 = vsel %vm5365, %v5257, 0
      %v5442 = vsel %vm5365, %v5259, 0
      %v5445 = vsel %vm5365, %v5261, 0
      %v5448 = vsel %vm5365, %v5263, 0
      %v5451 = vsel %vm5365, %v5265, 0
      %v5454 = vsel %vm5365, %v5267, 0
      %v5457 = vsel %vm5365, %v5269, 0
      %v5460 = vsel %vm5365, %v5271, 0
      %v5463 = vsel %vm5365, %v5273, 0
      %v5466 = vsel %vm5365, %v5275, 0
      %v5469 = vsel %vm5365, %v5277, 0
      %v5472 = vsel %vm5365, %v5279, 0
      %v5475 = vsel %vm5365, %v5281, 0
      %v5478 = vsel %vm5365, %v5283, 0
      %v5481 = vsel %vm5365, %v5285, 0
      %v5484 = vsel %vm5365, %v5287, 0
      %v5487 = vsel %vm5365, %v5289, 0
      %v5490 = vsel %vm5365, %v5291, 0
      %v5493 = vsel %vm5365, %v5293, 0
      %v5496 = vsel %vm5365, %v5295, 0
      %v5499 = vsel %vm5365, %v5297, 0
      %v5502 = vsel %vm5365, %v5299, 0
      %v5505 = vsel %vm5365, %v5301, 0
      %v5508 = vsel %vm5365, %v5303, 0
      %v5511 = vsel %vm5365, %v5305, 0
      %v5514 = vsel %vm5365, %v5307, 0
      %v5517 = vsel %vm5365, %v5309, 0
      %v5520 = vsel %vm5365, %v5311, 0
      %v5523 = vsel %vm5365, %v5313, 0
      %v5526 = vsel %vm5365, %v5315, 0
      %v5529 = vsel %vm5365, %v5317, 0
      %v5532 = vsel %vm5365, %v5319, 0
      %v5535 = vsel %vm5365, %v5321, 0
      %v5538 = vsel %vm5365, %v5323, 0
      %v5541 = vsel %vm5365, %v5325, 0
      %v5544 = vsel %vm5365, %v5327, 0
      %v5547 = vsel %vm5365, %v5329, 0
      %v5550 = vsel %vm5365, %v5331, 0
      %v5553 = vsel %vm5365, %v5333, 0
      %v5556 = vsel %vm5365, %v5335, 0
      %5558 = vmatprep.subr.mxu0 0.0
      %5559 = vmatpush1.msra.mxu0 %v5336
      %5560 = vmatprep.subr.mxu0 0.0
      %5561 = vmatpush1.msra.mxu0 %v5337
      %5562 = vmatprep.subr.mxu0 0.0
      %5563 = vmatpush1.msra.mxu0 %v5338
      %5564 = vmatprep.subr.mxu0 0.0
      %5565 = vmatpush1.msra.mxu0 %v5339
      %5566 = vmatprep.subr.mxu0 0.0
      %5567 = vmatpush1.msra.mxu0 %v5340
      %5568 = vmatprep.subr.mxu0 0.0
      %5569 = vmatpush1.msra.mxu0 %v5341
      %5570 = vmatprep.subr.mxu0 0.0
      %5571 = vmatpush1.msra.mxu0 %v5342
      %5572 = vmatprep.subr.mxu0 0.0
      %5573 = vmatpush1.msra.mxu0 %v5343
      %5574 = vmatprep.subr.mxu0 0.0
      %5575 = vmatpush1.msra.mxu0 %v5344
      %5576 = vmatprep.subr.mxu0 0.0
      %5577 = vmatpush1.msra.mxu0 %v5345
      %5578 = vmatprep.subr.mxu0 0.0
      %5579 = vmatpush1.msra.mxu0 %v5346
      %5580 = vmatprep.subr.mxu0 0.0
      %5581 = vmatpush1.msra.mxu0 %v5347
      %5582 = vmatprep.subr.mxu0 0.0
      %5583 = vmatpush1.msra.mxu0 %v5348
      %5584 = vmatprep.subr.mxu0 0.0
      %5585 = vmatpush1.msra.mxu0 %v5349
      %5586 = vmatprep.subr.mxu0 0.0
      %5587 = vmatpush1.msra.mxu0 %v5350
      %5588 = vmatprep.subr.mxu0 0.0
      %5589 = vmatpush1.msra.mxu0 %v5351
      %5590 = vmatprep.subr.mxu0 0.0
      %5591 = vmatpush1.msra.mxu0 %v5352
      %5592 = vmatprep.subr.mxu0 0.0
      %5593 = vmatpush1.msra.mxu0 %v5353
      %5594 = vmatprep.subr.mxu0 0.0
      %5595 = vmatpush1.msra.mxu0 %v5354
      %5596 = vmatprep.subr.mxu0 0.0
      %5597 = vmatpush1.msra.mxu0 %v5355
      %5598 = vmatprep.subr.mxu0 0.0
      %5599 = vmatpush1.msra.mxu0 %v5356
      %5600 = vmatprep.subr.mxu0 0.0
      %5601 = vmatpush1.msra.mxu0 %v5357
      %5602 = vmatprep.subr.mxu0 0.0
      %5603 = vmatpush1.msra.mxu0 %v5358
      %5604 = vmatprep.subr.mxu0 0.0
      %5605 = vmatpush1.msra.mxu0 %v5359
      %5606 = vmatprep.subr.mxu0 0.0
      %5607 = vmatpush1.msra.mxu0 0.0
      %5608 = vmatprep.subr.mxu0 0.0
      %5609 = vmatpush1.msra.mxu0 0.0
      %5610 = vmatprep.subr.mxu0 0.0
      %5611 = vmatpush1.msra.mxu0 0.0
      %5612 = vmatprep.subr.mxu0 0.0
      %5613 = vmatpush1.msra.mxu0 0.0
      %5614 = vmatprep.subr.mxu0 0.0
      %5615 = vmatpush1.msra.mxu0 0.0
      %5616 = vmatprep.subr.mxu0 0.0
      %5617 = vmatpush1.msra.mxu0 0.0
      %5618 = vmatprep.subr.mxu0 0.0
      %5619 = vmatpush1.msra.mxu0 0.0
      %5620 = vmatprep.subr.mxu0 0.0
      %5621 = vmatpush1.msra.mxu0 0.0
      %5622 = vmatprep.mubr.f32.mxu0 %v5367
      %5623 = vmatmul.mubr.f32.gmra.mrb[0].mxu0 %v5208
      %v5624 = vpop.f32.mrb[0].mxu0
      %v5625 = vadd.f32 %v5364, %v5624
      %v5626 = vpop.f32.mrb[0].mxu0
      %5627 = vmatprep.mubr.f32.mxu0 %v5370
      %5628 = vmatmul.mubr.f32.gmra.mrb[0].mxu0 %v5210
      %v5629 = vpop.f32.mrb[0].mxu0
      %v5630 = vadd.f32 %v5364, %v5629
      %v5631 = vpop.f32.mrb[0].mxu0
      %5632 = vmatprep.mubr.f32.mxu0 %v5373
      %5633 = vmatmul.mubr.f32.gmra.mrb[0].mxu0 %v5212
      %v5634 = vpop.f32.mrb[0].mxu0
      %v5635 = vadd.f32 %v5364, %v5634
      %v5636 = vpop.f32.mrb[0].mxu0
      %5637 = vmatprep.mubr.f32.mxu0 %v5376
      %5638 = vmatmul.mubr.f32.gmra.mrb[0].mxu0 %v5214
      %v5639 = vpop.f32.mrb[0].mxu0
      %v5640 = vadd.f32 %v5364, %v5639
      %v5641 = vpop.f32.mrb[0].mxu0
      %5642 = vmatprep.mubr.f32.mxu0 %v5379
      %5643 = vmatmul.mubr.f32.gmra.mrb[0].mxu0 %v5216
      %v5644 = vpop.f32.mrb[0].mxu0
      %v5645 = vadd.f32 %v5364, %v5644
      %v5646 = vpop.f32.mrb[0].mxu0
      %5647 = vmatprep.mubr.f32.mxu0 %v5382
      %5648 = vmatmul.mubr.f32.gmra.mrb[0].mxu0 %v5218
      %v5649 = vpop.f32.mrb[0].mxu0
      %v5650 = vadd.f32 %v5364, %v5649
      %v5651 = vpop.f32.mrb[0].mxu0
      %5652 = vmatprep.mubr.f32.mxu0 %v5385
      %5653 = vmatmul.mubr.f32.gmra.mrb[0].mxu0 %v5220
      %v5654 = vpop.f32.mrb[0].mxu0
      %v5655 = vadd.f32 %v5364, %v5654
      %v5656 = vpop.f32.mrb[0].mxu0
      %5657 = vmatprep.mubr.f32.mxu0 %v5388
      %5658 = vmatmul.mubr.f32.gmra.mrb[0].mxu0 %v5222
      %v5659 = vpop.f32.mrb[0].mxu0
      %v5660 = vadd.f32 %v5364, %v5659
      %v5661 = vpop.f32.mrb[0].mxu0
      %5662 = vmatprep.mubr.f32.mxu0 %v5391
      %5663 = vmatmul.mubr.f32.gmra.mrb[0].mxu0 %v5224
      %v5664 = vpop.f32.mrb[0].mxu0
      %v5665 = vadd.f32 %v5364, %v5664
      %v5666 = vpop.f32.mrb[0].mxu0
      %5667 = vmatprep.mubr.f32.mxu0 %v5394
      %5668 = vmatmul.mubr.f32.gmra.mrb[0].mxu0 %v5226
      %v5669 = vpop.f32.mrb[0].mxu0
      %v5670 = vadd.f32 %v5364, %v5669
      %v5671 = vpop.f32.mrb[0].mxu0
      %5672 = vmatprep.mubr.f32.mxu0 %v5397
      %5673 = vmatmul.mubr.f32.gmra.mrb[0].mxu0 %v5228
      %v5674 = vpop.f32.mrb[0].mxu0
      %v5675 = vadd.f32 %v5364, %v5674
      %v5676 = vpop.f32.mrb[0].mxu0
      %5677 = vmatprep.mubr.f32.mxu0 %v5400
      %5678 = vmatmul.mubr.f32.gmra.mrb[0].mxu0 %v5230
      %v5679 = vpop.f32.mrb[0].mxu0
      %v5680 = vadd.f32 %v5364, %v5679
      %v5681 = vpop.f32.mrb[0].mxu0
      %5682 = vmatprep.mubr.f32.mxu0 %v5403
      %5683 = vmatmul.mubr.f32.gmra.mrb[0].mxu0 %v5232
      %v5684 = vpop.f32.mrb[0].mxu0
      %v5685 = vadd.f32 %v5364, %v5684
      %v5686 = vpop.f32.mrb[0].mxu0
      %5687 = vmatprep.mubr.f32.mxu0 %v5406
      %5688 = vmatmul.mubr.f32.gmra.mrb[0].mxu0 %v5234
      %v5689 = vpop.f32.mrb[0].mxu0
      %v5690 = vadd.f32 %v5364, %v5689
      %v5691 = vpop.f32.mrb[0].mxu0
      %5692 = vmatprep.mubr.f32.mxu0 %v5409
      %5693 = vmatmul.mubr.f32.gmra.mrb[0].mxu0 %v5236
      %v5694 = vpop.f32.mrb[0].mxu0
      %v5695 = vadd.f32 %v5364, %v5694
      %v5696 = vpop.f32.mrb[0].mxu0
      %5697 = vmatprep.mubr.f32.mxu0 %v5412
      %5698 = vmatmul.mubr.f32.gmra.mrb[0].mxu0 %v5238
      %v5699 = vpop.f32.mrb[0].mxu0
      %v5700 = vadd.f32 %v5364, %v5699
      %v5701 = vpop.f32.mrb[0].mxu0
      %5702 = vmatprep.mubr.f32.mxu0 %v5415
      %5703 = vmatmul.mubr.f32.gmra.mrb[0].mxu0 %v5240
      %v5704 = vpop.f32.mrb[0].mxu0
      %v5705 = vadd.f32 %v5364, %v5704
      %v5706 = vpop.f32.mrb[0].mxu0
      %5707 = vmatprep.mubr.f32.mxu0 %v5418
      %5708 = vmatmul.mubr.f32.gmra.mrb[0].mxu0 %v5242
      %v5709 = vpop.f32.mrb[0].mxu0
      %v5710 = vadd.f32 %v5364, %v5709
      %v5711 = vpop.f32.mrb[0].mxu0
      %5712 = vmatprep.mubr.f32.mxu0 %v5421
      %5713 = vmatmul.mubr.f32.gmra.mrb[0].mxu0 %v5244
      %v5714 = vpop.f32.mrb[0].mxu0
      %v5715 = vadd.f32 %v5364, %v5714
      %v5716 = vpop.f32.mrb[0].mxu0
      %5717 = vmatprep.mubr.f32.mxu0 %v5424
      %5718 = vmatmul.mubr.f32.gmra.mrb[0].mxu0 %v5246
      %v5719 = vpop.f32.mrb[0].mxu0
      %v5720 = vadd.f32 %v5364, %v5719
      %v5721 = vpop.f32.mrb[0].mxu0
      %5722 = vmatprep.mubr.f32.mxu0 %v5427
      %5723 = vmatmul.mubr.f32.gmra.mrb[0].mxu0 %v5248
      %v5724 = vpop.f32.mrb[0].mxu0
      %v5725 = vadd.f32 %v5364, %v5724
      %v5726 = vpop.f32.mrb[0].mxu0
      %5727 = vmatprep.mubr.f32.mxu0 %v5430
      %5728 = vmatmul.mubr.f32.gmra.mrb[0].mxu0 %v5250
      %v5729 = vpop.f32.mrb[0].mxu0
      %v5730 = vadd.f32 %v5364, %v5729
      %v5731 = vpop.f32.mrb[0].mxu0
      %5732 = vmatprep.mubr.f32.mxu0 %v5433
      %5733 = vmatmul.mubr.f32.gmra.mrb[0].mxu0 %v5252
      %v5734 = vpop.f32.mrb[0].mxu0
      %v5735 = vadd.f32 %v5364, %v5734
      %v5736 = vpop.f32.mrb[0].mxu0
      %5737 = vmatprep.mubr.f32.mxu0 %v5436
      %5738 = vmatmul.mubr.f32.gmra.mrb[0].mxu0 %v5254
      %v5739 = vpop.f32.mrb[0].mxu0
      %v5740 = vadd.f32 %v5364, %v5739
      %v5741 = vpop.f32.mrb[0].mxu0
      %5742 = vmatprep.mubr.f32.mxu0 %v5439
      %5743 = vmatmul.mubr.f32.gmra.mrb[0].mxu0 %v5256
      %v5744 = vpop.f32.mrb[0].mxu0
      %v5745 = vadd.f32 %v5364, %v5744
      %v5746 = vpop.f32.mrb[0].mxu0
      %5747 = vmatprep.mubr.f32.mxu0 %v5442
      %5748 = vmatmul.mubr.f32.gmra.mrb[0].mxu0 %v5258
      %v5749 = vpop.f32.mrb[0].mxu0
      %v5750 = vadd.f32 %v5364, %v5749
      %v5751 = vpop.f32.mrb[0].mxu0
      %5752 = vmatprep.mubr.f32.mxu0 %v5445
      %5753 = vmatmul.mubr.f32.gmra.mrb[0].mxu0 %v5260
      %v5754 = vpop.f32.mrb[0].mxu0
      %v5755 = vadd.f32 %v5364, %v5754
      %v5756 = vpop.f32.mrb[0].mxu0
      %5757 = vmatprep.mubr.f32.mxu0 %v5448
      %5758 = vmatmul.mubr.f32.gmra.mrb[0].mxu0 %v5262
      %v5759 = vpop.f32.mrb[0].mxu0
      %v5760 = vadd.f32 %v5364, %v5759
      %v5761 = vpop.f32.mrb[0].mxu0
      %5762 = vmatprep.mubr.f32.mxu0 %v5451
      %5763 = vmatmul.mubr.f32.gmra.mrb[0].mxu0 %v5264
      %v5764 = vpop.f32.mrb[0].mxu0
      %v5765 = vadd.f32 %v5364, %v5764
      %v5766 = vpop.f32.mrb[0].mxu0
      %5767 = vmatprep.mubr.f32.mxu0 %v5454
      %5768 = vmatmul.mubr.f32.gmra.mrb[0].mxu0 %v5266
      %v5769 = vpop.f32.mrb[0].mxu0
      %v5770 = vadd.f32 %v5364, %v5769
      %v5771 = vpop.f32.mrb[0].mxu0
      %5772 = vmatprep.mubr.f32.mxu0 %v5457
      %5773 = vmatmul.mubr.f32.gmra.mrb[0].mxu0 %v5268
      %v5774 = vpop.f32.mrb[0].mxu0
      %v5775 = vadd.f32 %v5364, %v5774
      %v5776 = vpop.f32.mrb[0].mxu0
      %5777 = vmatprep.mubr.f32.mxu0 %v5460
      %5778 = vmatmul.mubr.f32.gmra.mrb[0].mxu0 %v5270
      %v5779 = vpop.f32.mrb[0].mxu0
      %v5780 = vadd.f32 %v5364, %v5779
      %v5781 = vpop.f32.mrb[0].mxu0
      %5782 = vmatprep.mubr.f32.mxu0 %v5463
      %5783 = vmatmul.mubr.f32.gmra.mrb[0].mxu0 %v5272
      %v5784 = vpop.f32.mrb[0].mxu0
      %v5785 = vadd.f32 %v5364, %v5784
      %v5786 = vpop.f32.mrb[0].mxu0
      %5787 = vmatprep.mubr.f32.mxu0 %v5466
      %5788 = vmatmul.mubr.f32.gmra.mrb[0].mxu0 %v5274
      %v5789 = vpop.f32.mrb[0].mxu0
      %v5790 = vadd.f32 %v5364, %v5789
      %v5791 = vpop.f32.mrb[0].mxu0
      %5792 = vmatprep.mubr.f32.mxu0 %v5469
      %5793 = vmatmul.mubr.f32.gmra.mrb[0].mxu0 %v5276
      %v5794 = vpop.f32.mrb[0].mxu0
      %v5795 = vadd.f32 %v5364, %v5794
      %v5796 = vpop.f32.mrb[0].mxu0
      %5797 = vmatprep.mubr.f32.mxu0 %v5472
      %5798 = vmatmul.mubr.f32.gmra.mrb[0].mxu0 %v5278
      %v5799 = vpop.f32.mrb[0].mxu0
      %v5800 = vadd.f32 %v5364, %v5799
      %v5801 = vpop.f32.mrb[0].mxu0
      %5802 = vmatprep.mubr.f32.mxu0 %v5475
      %5803 = vmatmul.mubr.f32.gmra.mrb[0].mxu0 %v5280
      %v5804 = vpop.f32.mrb[0].mxu0
      %v5805 = vadd.f32 %v5364, %v5804
      %v5806 = vpop.f32.mrb[0].mxu0
      %5807 = vmatprep.mubr.f32.mxu0 %v5478
      %5808 = vmatmul.mubr.f32.gmra.mrb[0].mxu0 %v5282
      %v5809 = vpop.f32.mrb[0].mxu0
      %v5810 = vadd.f32 %v5364, %v5809
      %v5811 = vpop.f32.mrb[0].mxu0
      %5812 = vmatprep.mubr.f32.mxu0 %v5481
      %5813 = vmatmul.mubr.f32.gmra.mrb[0].mxu0 %v5284
      %v5814 = vpop.f32.mrb[0].mxu0
      %v5815 = vadd.f32 %v5364, %v5814
      %v5816 = vpop.f32.mrb[0].mxu0
      %5817 = vmatprep.mubr.f32.mxu0 %v5484
      %5818 = vmatmul.mubr.f32.gmra.mrb[0].mxu0 %v5286
      %v5819 = vpop.f32.mrb[0].mxu0
      %v5820 = vadd.f32 %v5364, %v5819
      %v5821 = vpop.f32.mrb[0].mxu0
      %5822 = vmatprep.mubr.f32.mxu0 %v5487
      %5823 = vmatmul.mubr.f32.gmra.mrb[0].mxu0 %v5288
      %v5824 = vpop.f32.mrb[0].mxu0
      %v5825 = vadd.f32 %v5364, %v5824
      %v5826 = vpop.f32.mrb[0].mxu0
      %5827 = vmatprep.mubr.f32.mxu0 %v5490
      %5828 = vmatmul.mubr.f32.gmra.mrb[0].mxu0 %v5290
      %v5829 = vpop.f32.mrb[0].mxu0
      %v5830 = vadd.f32 %v5364, %v5829
      %v5831 = vpop.f32.mrb[0].mxu0
      %5832 = vmatprep.mubr.f32.mxu0 %v5493
      %5833 = vmatmul.mubr.f32.gmra.mrb[0].mxu0 %v5292
      %v5834 = vpop.f32.mrb[0].mxu0
      %v5835 = vadd.f32 %v5364, %v5834
      %v5836 = vpop.f32.mrb[0].mxu0
      %5837 = vmatprep.mubr.f32.mxu0 %v5496
      %5838 = vmatmul.mubr.f32.gmra.mrb[0].mxu0 %v5294
      %v5839 = vpop.f32.mrb[0].mxu0
      %v5840 = vadd.f32 %v5364, %v5839
      %v5841 = vpop.f32.mrb[0].mxu0
      %5842 = vmatprep.mubr.f32.mxu0 %v5499
      %5843 = vmatmul.mubr.f32.gmra.mrb[0].mxu0 %v5296
      %v5844 = vpop.f32.mrb[0].mxu0
      %v5845 = vadd.f32 %v5364, %v5844
      %v5846 = vpop.f32.mrb[0].mxu0
      %5847 = vmatprep.mubr.f32.mxu0 %v5502
      %5848 = vmatmul.mubr.f32.gmra.mrb[0].mxu0 %v5298
      %v5849 = vpop.f32.mrb[0].mxu0
      %v5850 = vadd.f32 %v5364, %v5849
      %v5851 = vpop.f32.mrb[0].mxu0
      %5852 = vmatprep.mubr.f32.mxu0 %v5505
      %5853 = vmatmul.mubr.f32.gmra.mrb[0].mxu0 %v5300
      %v5854 = vpop.f32.mrb[0].mxu0
      %v5855 = vadd.f32 %v5364, %v5854
      %v5856 = vpop.f32.mrb[0].mxu0
      %5857 = vmatprep.mubr.f32.mxu0 %v5508
      %5858 = vmatmul.mubr.f32.gmra.mrb[0].mxu0 %v5302
      %v5859 = vpop.f32.mrb[0].mxu0
      %v5860 = vadd.f32 %v5364, %v5859
      %v5861 = vpop.f32.mrb[0].mxu0
      %5862 = vmatprep.mubr.f32.mxu0 %v5511
      %5863 = vmatmul.mubr.f32.gmra.mrb[0].mxu0 %v5304
      %v5864 = vpop.f32.mrb[0].mxu0
      %v5865 = vadd.f32 %v5364, %v5864
      %v5866 = vpop.f32.mrb[0].mxu0
      %5867 = vmatprep.mubr.f32.mxu0 %v5514
      %5868 = vmatmul.mubr.f32.gmra.mrb[0].mxu0 %v5306
      %v5869 = vpop.f32.mrb[0].mxu0
      %v5870 = vadd.f32 %v5364, %v5869
      %v5871 = vpop.f32.mrb[0].mxu0
      %5872 = vmatprep.mubr.f32.mxu0 %v5517
      %5873 = vmatmul.mubr.f32.gmra.mrb[0].mxu0 %v5308
      %v5874 = vpop.f32.mrb[0].mxu0
      %v5875 = vadd.f32 %v5364, %v5874
      %v5876 = vpop.f32.mrb[0].mxu0
      %5877 = vmatprep.mubr.f32.mxu0 %v5520
      %5878 = vmatmul.mubr.f32.gmra.mrb[0].mxu0 %v5310
      %v5879 = vpop.f32.mrb[0].mxu0
      %v5880 = vadd.f32 %v5364, %v5879
      %v5881 = vpop.f32.mrb[0].mxu0
      %5882 = vmatprep.mubr.f32.mxu0 %v5523
      %5883 = vmatmul.mubr.f32.gmra.mrb[0].mxu0 %v5312
      %v5884 = vpop.f32.mrb[0].mxu0
      %v5885 = vadd.f32 %v5364, %v5884
      %v5886 = vpop.f32.mrb[0].mxu0
      %5887 = vmatprep.mubr.f32.mxu0 %v5526
      %5888 = vmatmul.mubr.f32.gmra.mrb[0].mxu0 %v5314
      %v5889 = vpop.f32.mrb[0].mxu0
      %v5890 = vadd.f32 %v5364, %v5889
      %v5891 = vpop.f32.mrb[0].mxu0
      %5892 = vmatprep.mubr.f32.mxu0 %v5529
      %5893 = vmatmul.mubr.f32.gmra.mrb[0].mxu0 %v5316
      %v5894 = vpop.f32.mrb[0].mxu0
      %v5895 = vadd.f32 %v5364, %v5894
      %v5896 = vpop.f32.mrb[0].mxu0
      %5897 = vmatprep.mubr.f32.mxu0 %v5532
      %5898 = vmatmul.mubr.f32.gmra.mrb[0].mxu0 %v5318
      %v5899 = vpop.f32.mrb[0].mxu0
      %v5900 = vadd.f32 %v5364, %v5899
      %v5901 = vpop.f32.mrb[0].mxu0
      %5902 = vmatprep.mubr.f32.mxu0 %v5535
      %5903 = vmatmul.mubr.f32.gmra.mrb[0].mxu0 %v5320
      %v5904 = vpop.f32.mrb[0].mxu0
      %v5905 = vadd.f32 %v5364, %v5904
      %v5906 = vpop.f32.mrb[0].mxu0
      %5907 = vmatprep.mubr.f32.mxu0 %v5538
      %5908 = vmatmul.mubr.f32.gmra.mrb[0].mxu0 %v5322
      %v5909 = vpop.f32.mrb[0].mxu0
      %v5910 = vadd.f32 %v5364, %v5909
      %v5911 = vpop.f32.mrb[0].mxu0
      %5912 = vmatprep.mubr.f32.mxu0 %v5541
      %5913 = vmatmul.mubr.f32.gmra.mrb[0].mxu0 %v5324
      %v5914 = vpop.f32.mrb[0].mxu0
      %v5915 = vadd.f32 %v5364, %v5914
      %v5916 = vpop.f32.mrb[0].mxu0
      %5917 = vmatprep.mubr.f32.mxu0 %v5544
      %5918 = vmatmul.mubr.f32.gmra.mrb[0].mxu0 %v5326
      %v5919 = vpop.f32.mrb[0].mxu0
      %v5920 = vadd.f32 %v5364, %v5919
      %v5921 = vpop.f32.mrb[0].mxu0
      %5922 = vmatprep.mubr.f32.mxu0 %v5547
      %5923 = vmatmul.mubr.f32.gmra.mrb[0].mxu0 %v5328
      %v5924 = vpop.f32.mrb[0].mxu0
      %v5925 = vadd.f32 %v5364, %v5924
      %v5926 = vpop.f32.mrb[0].mxu0
      %5927 = vmatprep.mubr.f32.mxu0 %v5550
      %5928 = vmatmul.mubr.f32.gmra.mrb[0].mxu0 %v5330
      %v5929 = vpop.f32.mrb[0].mxu0
      %v5930 = vadd.f32 %v5364, %v5929
      %v5931 = vpop.f32.mrb[0].mxu0
      %5932 = vmatprep.mubr.f32.mxu0 %v5553
      %5933 = vmatmul.mubr.f32.gmra.mrb[0].mxu0 %v5332
      %v5934 = vpop.f32.mrb[0].mxu0
      %v5935 = vadd.f32 %v5364, %v5934
      %v5936 = vpop.f32.mrb[0].mxu0
      %5937 = vmatprep.mubr.f32.mxu0 %v5556
      %5938 = vmatmul.mubr.f32.gmra.mrb[0].mxu0 %v5334
      %v5939 = vpop.f32.mrb[0].mxu0
      %v5940 = vadd.f32 %v5364, %v5939
      %v5941 = vpop.f32.mrb[0].mxu0
      %5942 = vdwg.mxu0
      %v5943 = vadd.f32 %v287, %v5625
      %v5944 = vadd.f32 %v288, %v5630
      %v5945 = vadd.f32 %v289, %v5635
      %v5946 = vadd.f32 %v290, %v5640
      %v5947 = vadd.f32 %v291, %v5645
      %v5948 = vadd.f32 %v292, %v5650
      %v5949 = vadd.f32 %v293, %v5655
      %v5950 = vadd.f32 %v294, %v5660
      %v5951 = vadd.f32 %v295, %v5665
      %v5952 = vadd.f32 %v296, %v5670
      %v5953 = vadd.f32 %v297, %v5675
      %v5954 = vadd.f32 %v298, %v5680
      %v5955 = vadd.f32 %v299, %v5685
      %v5956 = vadd.f32 %v300, %v5690
      %v5957 = vadd.f32 %v301, %v5695
      %v5958 = vadd.f32 %v302, %v5700
      %v5959 = vadd.f32 %v303, %v5705
      %v5960 = vadd.f32 %v304, %v5710
      %v5961 = vadd.f32 %v305, %v5715
      %v5962 = vadd.f32 %v306, %v5720
      %v5963 = vadd.f32 %v307, %v5725
      %v5964 = vadd.f32 %v308, %v5730
      %v5965 = vadd.f32 %v309, %v5735
      %v5966 = vadd.f32 %v310, %v5740
      %v5967 = vadd.f32 %v311, %v5745
      %v5968 = vadd.f32 %v312, %v5750
      %v5969 = vadd.f32 %v313, %v5755
      %v5970 = vadd.f32 %v314, %v5760
      %v5971 = vadd.f32 %v315, %v5765
      %v5972 = vadd.f32 %v316, %v5770
      %v5973 = vadd.f32 %v317, %v5775
      %v5974 = vadd.f32 %v318, %v5780
      %v5975 = vadd.f32 %v319, %v5785
      %v5976 = vadd.f32 %v320, %v5790
      %v5977 = vadd.f32 %v321, %v5795
      %v5978 = vadd.f32 %v322, %v5800
      %v5979 = vadd.f32 %v323, %v5805
      %v5980 = vadd.f32 %v324, %v5810
      %v5981 = vadd.f32 %v325, %v5815
      %v5982 = vadd.f32 %v326, %v5820
      %v5983 = vadd.f32 %v327, %v5825
      %v5984 = vadd.f32 %v328, %v5830
      %v5985 = vadd.f32 %v329, %v5835
      %v5986 = vadd.f32 %v330, %v5840
      %v5987 = vadd.f32 %v331, %v5845
      %v5988 = vadd.f32 %v332, %v5850
      %v5989 = vadd.f32 %v333, %v5855
      %v5990 = vadd.f32 %v334, %v5860
      %v5991 = vadd.f32 %v335, %v5865
      %v5992 = vadd.f32 %v336, %v5870
      %v5993 = vadd.f32 %v337, %v5875
      %v5994 = vadd.f32 %v338, %v5880
      %v5995 = vadd.f32 %v339, %v5885
      %v5996 = vadd.f32 %v340, %v5890
      %v5997 = vadd.f32 %v341, %v5895
      %v5998 = vadd.f32 %v342, %v5900
      %v5999 = vadd.f32 %v343, %v5905
      %v6000 = vadd.f32 %v344, %v5910
      %v6001 = vadd.f32 %v345, %v5915
      %v6002 = vadd.f32 %v346, %v5920
      %v6003 = vadd.f32 %v347, %v5925
      %v6004 = vadd.f32 %v348, %v5930
      %v6005 = vadd.f32 %v349, %v5935
      %v6006 = vadd.f32 %v350, %v5940
      %6007 = vst.msk [vmem:[%s285] sm:$0xff] %vm351, %v5943
      %6008 = vst.msk [vmem:[%s285 + $0x8] sm:$0xff] %vm351, %v5944
      %6009 = vst.msk [vmem:[%s285 + $0x10] sm:$0xff] %vm351, %v5945
      %6010 = vst.msk [vmem:[%s285 + $0x18] sm:$0xff] %vm351, %v5946
      %6011 = vst.msk [vmem:[%s285 + $0x20] sm:$0xff] %vm351, %v5947
      %6012 = vst.msk [vmem:[%s285 + $0x28] sm:$0xff] %vm351, %v5948
      %6013 = vst.msk [vmem:[%s285 + $0x30] sm:$0xff] %vm351, %v5949
      %6014 = vst.msk [vmem:[%s285 + $0x38] sm:$0xff] %vm351, %v5950
      %6015 = vst.msk [vmem:[%s285 + $0x40] sm:$0xff] %vm351, %v5951
      %6016 = vst.msk [vmem:[%s285 + $0x48] sm:$0xff] %vm351, %v5952
      %6017 = vst.msk [vmem:[%s285 + $0x50] sm:$0xff] %vm351, %v5953
      %6018 = vst.msk [vmem:[%s285 + $0x58] sm:$0xff] %vm351, %v5954
      %6019 = vst.msk [vmem:[%s285 + $0x60] sm:$0xff] %vm351, %v5955
      %6020 = vst.msk [vmem:[%s285 + $0x68] sm:$0xff] %vm351, %v5956
      %6021 = vst.msk [vmem:[%s285 + $0x70] sm:$0xff] %vm351, %v5957
      %6022 = vst.msk [vmem:[%s285 + $0x78] sm:$0xff] %vm351, %v5958
      %6023 = vst.msk [vmem:[%s285 + $0x80] sm:$0xff] %vm351, %v5959
      %6024 = vst.msk [vmem:[%s285 + $0x88] sm:$0xff] %vm351, %v5960
      %6025 = vst.msk [vmem:[%s285 + $0x90] sm:$0xff] %vm351, %v5961
      %6026 = vst.msk [vmem:[%s285 + $0x98] sm:$0xff] %vm351, %v5962
      %6027 = vst.msk [vmem:[%s285 + $0xa0] sm:$0xff] %vm351, %v5963
      %6028 = vst.msk [vmem:[%s285 + $0xa8] sm:$0xff] %vm351, %v5964
      %6029 = vst.msk [vmem:[%s285 + $0xb0] sm:$0xff] %vm351, %v5965
      %6030 = vst.msk [vmem:[%s285 + $0xb8] sm:$0xff] %vm351, %v5966
      %6031 = vst.msk [vmem:[%s285 + $0xc0] sm:$0xff] %vm351, %v5967
      %6032 = vst.msk [vmem:[%s285 + $0xc8] sm:$0xff] %vm351, %v5968
      %6033 = vst.msk [vmem:[%s285 + $0xd0] sm:$0xff] %vm351, %v5969
      %6034 = vst.msk [vmem:[%s285 + $0xd8] sm:$0xff] %vm351, %v5970
      %6035 = vst.msk [vmem:[%s285 + $0xe0] sm:$0xff] %vm351, %v5971
      %6036 = vst.msk [vmem:[%s285 + $0xe8] sm:$0xff] %vm351, %v5972
      %6037 = vst.msk [vmem:[%s285 + $0xf0] sm:$0xff] %vm351, %v5973
      %6038 = vst.msk [vmem:[%s285 + $0xf8] sm:$0xff] %vm351, %v5974
      %6039 = vst.msk [vmem:[%s285 + $0x100] sm:$0xff] %vm351, %v5975
      %6040 = vst.msk [vmem:[%s285 + $0x108] sm:$0xff] %vm351, %v5976
      %6041 = vst.msk [vmem:[%s285 + $0x110] sm:$0xff] %vm351, %v5977
      %6042 = vst.msk [vmem:[%s285 + $0x118] sm:$0xff] %vm351, %v5978
      %6043 = vst.msk [vmem:[%s285 + $0x120] sm:$0xff] %vm351, %v5979
      %6044 = vst.msk [vmem:[%s285 + $0x128] sm:$0xff] %vm351, %v5980
      %6045 = vst.msk [vmem:[%s285 + $0x130] sm:$0xff] %vm351, %v5981
      %6046 = vst.msk [vmem:[%s285 + $0x138] sm:$0xff] %vm351, %v5982
      %6047 = vst.msk [vmem:[%s285 + $0x140] sm:$0xff] %vm351, %v5983
      %6048 = vst.msk [vmem:[%s285 + $0x148] sm:$0xff] %vm351, %v5984
      %6049 = vst.msk [vmem:[%s285 + $0x150] sm:$0xff] %vm351, %v5985
      %6050 = vst.msk [vmem:[%s285 + $0x158] sm:$0xff] %vm351, %v5986
      %6051 = vst.msk [vmem:[%s285 + $0x160] sm:$0xff] %vm351, %v5987
      %6052 = vst.msk [vmem:[%s285 + $0x168] sm:$0xff] %vm351, %v5988
      %6053 = vst.msk [vmem:[%s285 + $0x170] sm:$0xff] %vm351, %v5989
      %6054 = vst.msk [vmem:[%s285 + $0x178] sm:$0xff] %vm351, %v5990
      %6055 = vst.msk [vmem:[%s285 + $0x180] sm:$0xff] %vm351, %v5991
      %6056 = vst.msk [vmem:[%s285 + $0x188] sm:$0xff] %vm351, %v5992
      %6057 = vst.msk [vmem:[%s285 + $0x190] sm:$0xff] %vm351, %v5993
      %6058 = vst.msk [vmem:[%s285 + $0x198] sm:$0xff] %vm351, %v5994
      %6059 = vst.msk [vmem:[%s285 + $0x1a0] sm:$0xff] %vm351, %v5995
      %6060 = vst.msk [vmem:[%s285 + $0x1a8] sm:$0xff] %vm351, %v5996
      %6061 = vst.msk [vmem:[%s285 + $0x1b0] sm:$0xff] %vm351, %v5997
      %6062 = vst.msk [vmem:[%s285 + $0x1b8] sm:$0xff] %vm351, %v5998
      %6063 = vst.msk [vmem:[%s285 + $0x1c0] sm:$0xff] %vm351, %v5999
      %6064 = vst.msk [vmem:[%s285 + $0x1c8] sm:$0xff] %vm351, %v6000
      %6065 = vst.msk [vmem:[%s285 + $0x1d0] sm:$0xff] %vm351, %v6001
      %6066 = vst.msk [vmem:[%s285 + $0x1d8] sm:$0xff] %vm351, %v6002
      %6067 = vst.msk [vmem:[%s285 + $0x1e0] sm:$0xff] %vm351, %v6003
      %6068 = vst.msk [vmem:[%s285 + $0x1e8] sm:$0xff] %vm351, %v6004
      %6069 = vst.msk [vmem:[%s285 + $0x1f0] sm:$0xff] %vm351, %v6005
      %6070 = vst.msk [vmem:[%s285 + $0x1f8] sm:$0xff] %vm351, %v6006
      %s6071 = smul.u32 2, %s18
      %p6072 = scmp.lt.s32.totalorder %s6071, 3
      %s6073 = scalar_select %p6072, %s6071, 3
      %s6074 = smul.addr %s6073, 32
      %s6075 = smul.addr %s6074, 8
      %s6076 = scalar_lea.vmem %s7, %s6075
      // Predicated region
      $region49: #{tpu_custom_call.1} parent=47 // pred_check
        %p6077 = pneg %p188
      $region50: #{tpu_custom_call.1} parent=47 // pred_check_branch
        %6079 = sbr.rel (%p6077) target = $region52
      $region51: #{tpu_custom_call.1} parent=47 // pred_region
        %s6080 = smul.u32 2, %s18
      $region52: #{tpu_custom_call.1} parent=47 // pred_fallthru
        _
    $region48: #{tpu_custom_call.1} parent=5 // pred_fallthru
      _
    %p6081 = scmp.le.s32.totalorder 2, %s13
    // Predicated region
    $region53: #{tpu_custom_call.1} parent=5 // pred_check
      %p6082 = pneg %p6081
    $region54: #{tpu_custom_call.1} parent=5 // pred_check_branch
      %6084 = sbr.rel (%p6082) target = $region56
    $region55: #{tpu_custom_call.1} parent=5 // pred_region
      %s6085 = ssub.s32 %s13, 2
      // Predicated region
      $region57: #{tpu_custom_call.1} parent=55 // pred_check
        %p6086 = pneg %p194
      $region58: #{tpu_custom_call.1} parent=55 // pred_check_branch
        %6088 = sbr.rel (%p6086) target = $region60
      $region59: #{tpu_custom_call.1} parent=55 // pred_region
        %s6089 = smul.u32 2, %s19
        %p6090 = scmp.lt.s32.totalorder %s6089, 3
        %s6091 = scalar_select %p6090, %s6089, 3
        %s6092 = smul.addr %s6091, 32
        %s6093 = smul.addr %s6092, 8
        %s6094 = scalar_lea.vmem %s7, %s6093
      $region60: #{tpu_custom_call.1} parent=55 // pred_fallthru
        _
    $region56: #{tpu_custom_call.1} parent=5 // pred_fallthru
      _
  $region6: #{tpu_custom_call.1} parent=0 // loop_footer
    %s17 = sadd.s32 1, %s13
  $region7: #{tpu_custom_call.1} parent=0 // loop_footer_branch
    %12 = sbr.rel target = $region3
  $region8: #{tpu_custom_call.1} parent=0 // loop_exit
    _

</llo_original>
